<compile_context>
chip_gen: v5e
topology: v5e:2x2
jax: 0.10.0
libtpu: 0.0.40
codegen_flags: <defaults>
</compile_context>

<pallas_src>
import functools

import jax
import jax.numpy as jnp
from jax.experimental import pallas as pl
from jax.experimental.pallas import tpu as pltpu

EPS = 1e-5
_LEAD = 8   # zero (sublane-aligned) pad rows before the mid slab: top/left halo
_TAIL = 8   # zero pad rows after the mid slab: bottom/right halo


def _round_up(x, m):
    return (x + m - 1) // m * m


def _cdiv(a, b):
    return -(-a // b)


# ---------------------------------------------------------------------------
# Fused kernel.  One grid step = one (batch, output-row-strip).
#   x_ref : (Hp*W, Cin_p)   row-flattened image, 1 leading + trailing zero rows
#   w1/b1 : (Cin_p, Mid_p)/(1, Mid_p)   expansion (BN1 folded)  [only if expand!=1]
#   wdw/b2: (3, 3, Mid_p)/(1, Mid_p)    depthwise (BN2 folded)
#   w3/b3 : (Mid_p, Cout_p)/(1, Cout_p) projection (BN3 folded)
#   o_ref : (rs_out*w_out, Cout_p)      output strip (lane+sublane dense)
#   mid_ref: (LEAD + rs_in*W + TAIL, Mid_p) flat expanded strip (VMEM scratch)
#   h_ref : (rs_out*w_out, Mid_p)       depthwise output buffer (VMEM scratch)
# ---------------------------------------------------------------------------
def _bottleneck_kernel(*refs, H, W, stride, rs_out, w_out, has_expand,
                       res_connect):
    if has_expand:
        (x_ref, w1_ref, b1_ref, wdw_ref, b2_ref, w3_ref, b3_ref,
         o_ref, mid_ref, h_ref) = refs
    else:
        (x_ref, wdw_ref, b2_ref, w3_ref, b3_ref, o_ref, mid_ref, h_ref) = refs
        w1_ref = b1_ref = None

    rs_in = (rs_out - 1) * stride + 3
    mid_p = mid_ref.shape[-1]

    s = pl.program_id(1)
    out_row0 = s * rs_out               # first output row of this strip
    in_row0 = out_row0 * stride - 1     # first (logical) input row, may be -1

    # Zero only the lead/tail halo pad rows; the body is fully overwritten.
    mid_ref[pl.ds(0, _LEAD), :] = jnp.zeros((_LEAD, mid_p), jnp.float32)
    mid_ref[pl.ds(_LEAD + rs_in * W, _TAIL), :] = jnp.zeros(
        (_TAIL, mid_p), jnp.float32)

    # ---- stage 1: 1x1 expansion + BN1 + ReLU6 as ONE batched matmul --------
    row_block = rs_out * stride * W
    slab_start = s * row_block          # == (in_row0 + 1) * W  (x has lead row)
    if row_block % 8 == 0:
        slab_start = pl.multiple_of(slab_start, 8)
    slab = x_ref[pl.ds(slab_start, rs_in * W), :]          # (rs_in*W, Cin_p)
    if has_expand:
        mid = jnp.dot(slab, w1_ref[...], preferred_element_type=jnp.float32)
        mid = jnp.clip(mid + b1_ref[...], 0.0, 6.0)
    else:
        mid = slab                                          # expand == 1
    # Zero rows whose input row is outside the image (top/bottom halo and the
    # ragged-tail overrun): slab position p maps to input row in_row0 + p//W,
    # valid  <=>  (0-in_row0)*W <= p < (H-in_row0)*W   (no integer division).
    pidx = jax.lax.broadcasted_iota(jnp.int32, (rs_in * W, 1), 0)
    valid = jnp.logical_and(pidx >= (0 - in_row0) * W, pidx < (H - in_row0) * W)
    mid_ref[pl.ds(_LEAD, rs_in * W), :] = jnp.where(valid, mid, 0.0)

    # ---- stage 2: 3x3 depthwise + BN2 + ReLU6 (strided taps, edge masks) ---
    taps = [[wdw_ref[dy, dx:dx + 1, :] for dx in range(3)] for dy in range(3)]
    b2 = b2_ref[...]
    col = jax.lax.broadcasted_iota(jnp.int32, (w_out, 1), 0)
    left_mask = col > 0                                     # kill wrap at c==0
    need_right = (w_out - 1) * stride + 1 >= W              # static
    right_mask = col < (w_out - 1)

    for oy in range(rs_out):                                # static, unrolled
        acc = None
        for dy in range(3):
            row_base = _LEAD + (oy * stride + dy) * W
            for dx in range(3):
                start = row_base + dx - 1                   # static offset
                if stride == 1:
                    win = mid_ref[pl.ds(start, w_out), :]
                else:
                    win = mid_ref[pl.ds(start, w_out, stride=stride), :]
                if dx == 0:
                    win = jnp.where(left_mask, win, 0.0)
                elif dx == 2 and need_right:
                    win = jnp.where(right_mask, win, 0.0)
                term = win * taps[dy][dx]
                acc = term if acc is None else acc + term
        h_ref[pl.ds(oy * w_out, w_out), :] = jnp.clip(acc + b2, 0.0, 6.0)

    # ---- stage 3: 1x1 projection + BN3 (+ residual), ONE matmul + store ----
    y = jnp.dot(h_ref[...], w3_ref[...], preferred_element_type=jnp.float32)
    y = y + b3_ref[...]
    if res_connect:
        # stride == 1, Cin == Cout (padded lanes are zero on both sides)
        y = y + x_ref[pl.ds((out_row0 + 1) * W, rs_out * W), :]
    o_ref[...] = y.astype(o_ref.dtype)


# ---------------------------------------------------------------------------
# Wrapper: layout plumbing (NCHW<->NHWC), BN folding, padding, strip sizing.
# ---------------------------------------------------------------------------
def bottleneck_forward(x_nchw, params, *, expand, stride):
    N, in_c, H, W = x_nchw.shape
    has_expand = expand != 1
    mid_c = params["w_dw"].shape[-1]
    out_c = params["w3"].shape[1]
    res_connect = (stride == 1) and (in_c == out_c)

    h_out = (H - 1) // stride + 1
    w_out = (W - 1) // stride + 1

    cin_p = _round_up(in_c, 128)
    mid_p = _round_up(mid_c, 128)
    cout_p = _round_up(out_c, 128)

    # Strip sizing: target >=256 rows per matmul, cap the unrolled depthwise
    # loop, keep per-strip VMEM scratch within a v7x-safe budget; the last
    # strip may be ragged (rows are masked / trimmed).
    TARGET_M = 256
    MAX_ROWS = 32
    SCRATCH_CAP = 6 * 1024 * 1024

    rs_out = max(1, min(h_out, MAX_ROWS, _cdiv(TARGET_M, w_out)))

    def _scratch_bytes(r):
        rin = (r - 1) * stride + 3
        return ((_LEAD + rin * W + _TAIL) + r * w_out) * mid_p * 4

    while rs_out > 1 and _scratch_bytes(rs_out) > SCRATCH_CAP:
        rs_out -= 1
    n_strips = _cdiv(h_out, rs_out)
    rs_in = (rs_out - 1) * stride + 3

    # Input: NHWC, channel-padded, row-flattened with 1 leading zero row (top
    # halo) and enough trailing zero rows that every strip's rs_in-row slab
    # read and the residual read stay in bounds.
    x = jnp.transpose(x_nchw, (0, 2, 3, 1)).astype(jnp.float32)
    x = jnp.pad(x, ((0, 0), (0, 0), (0, 0), (0, cin_p - in_c)))
    x = x.reshape(N, H * W, cin_p)
    hp = max(H + 1, (n_strips * rs_out - 1) * stride + 3)
    x = jnp.pad(x, ((0, 0), (W, (hp - H - 1) * W), (0, 0)))

    # Fold BN scales into the conv weights; pad channels to lane multiples.
    wdw = jnp.pad(params["w_dw"] * params["bn2_scale"][None, None, :],
                  ((0, 0), (0, 0), (0, mid_p - mid_c)))
    b2 = jnp.pad(params["bn2_bias"], (0, mid_p - mid_c)).reshape(1, mid_p)
    w3 = jnp.pad(params["w3"] * params["bn3_scale"][None, :],
                 ((0, mid_p - mid_c), (0, cout_p - out_c)))
    b3 = jnp.pad(params["bn3_bias"], (0, cout_p - out_c)).reshape(1, cout_p)

    args = [x]
    in_specs = [pl.BlockSpec((None, x.shape[1], cin_p), lambda n, s: (n, 0, 0))]
    if has_expand:
        w1 = jnp.pad(params["w1"] * params["bn1_scale"][None, :],
                     ((0, cin_p - in_c), (0, mid_p - mid_c)))
        b1 = jnp.pad(params["bn1_bias"], (0, mid_p - mid_c)).reshape(1, mid_p)
        args += [w1, b1]
        in_specs += [pl.BlockSpec((cin_p, mid_p), lambda n, s: (0, 0)),
                     pl.BlockSpec((1, mid_p), lambda n, s: (0, 0))]
    args += [wdw, b2, w3, b3]
    in_specs += [pl.BlockSpec((3, 3, mid_p), lambda n, s: (0, 0, 0)),
                 pl.BlockSpec((1, mid_p), lambda n, s: (0, 0)),
                 pl.BlockSpec((mid_p, cout_p), lambda n, s: (0, 0)),
                 pl.BlockSpec((1, cout_p), lambda n, s: (0, 0))]

    kernel = functools.partial(
        _bottleneck_kernel, H=H, W=W, stride=stride, rs_out=rs_out,
        w_out=w_out, has_expand=has_expand, res_connect=res_connect)

    out = pl.pallas_call(
        kernel,
        out_shape=jax.ShapeDtypeStruct((N, n_strips, rs_out * w_out, cout_p),
                                       jnp.float32),
        grid_spec=pltpu.PrefetchScalarGridSpec(
            num_scalar_prefetch=0,
            grid=(N, n_strips),
            in_specs=in_specs,
            out_specs=pl.BlockSpec((None, None, rs_out * w_out, cout_p),
                                   lambda n, s: (n, s, 0, 0)),
            scratch_shapes=[
                pltpu.VMEM((_LEAD + rs_in * W + _TAIL, mid_p), jnp.float32),
                pltpu.VMEM((rs_out * w_out, mid_p), jnp.float32),
            ]),
        compiler_params=pltpu.CompilerParams(
            dimension_semantics=("parallel", "parallel"),
            vmem_limit_bytes=32 * 1024 * 1024),
    )(*args)

    out = out.reshape(N, n_strips * rs_out, w_out, cout_p)[:, :h_out, :, :out_c]
    return jnp.transpose(out, (0, 3, 1, 2))      # back to NCHW


# ---------------------------------------------------------------------------
# Deterministic parameter construction (synthetic, no checkpoint)
# ---------------------------------------------------------------------------
def _fold_bn(gamma, beta, mean, var):
    scale = gamma / jnp.sqrt(var + EPS)
    bias = beta - mean * scale
    return scale.astype(jnp.float32), bias.astype(jnp.float32)


def make_params(key, in_c, out_c, expand):
    mid_c = int(round(in_c * expand))
    keys = jax.random.split(key, 12)
    params = {}
    # 1x1 expansion conv: PyTorch weight (mid_c, in_c, 1, 1) -> (in_c, mid_c)
    params["w1"] = 0.1 * jax.random.normal(keys[0], (in_c, mid_c), jnp.float32)
    params["bn1_scale"], params["bn1_bias"] = _fold_bn(
        1.0 + 0.1 * jax.random.normal(keys[1], (mid_c,)),
        0.1 * jax.random.normal(keys[2], (mid_c,)),
        0.1 * jax.random.normal(keys[3], (mid_c,)),
        0.5 + jax.random.uniform(keys[4], (mid_c,)))
    # 3x3 depthwise conv: PyTorch weight (mid_c, 1, 3, 3) -> (3, 3, mid_c)
    params["w_dw"] = 0.1 * jax.random.normal(keys[5], (3, 3, mid_c), jnp.float32)
    params["bn2_scale"], params["bn2_bias"] = _fold_bn(
        1.0 + 0.1 * jax.random.normal(keys[6], (mid_c,)),
        0.1 * jax.random.normal(keys[7], (mid_c,)),
        0.1 * jax.random.normal(keys[8], (mid_c,)),
        0.5 + jax.random.uniform(keys[9], (mid_c,)))
    # 1x1 projection conv: PyTorch weight (out_c, mid_c, 1, 1) -> (mid_c, out_c)
    params["w3"] = 0.1 * jax.random.normal(keys[10], (mid_c, out_c), jnp.float32)
    params["bn3_scale"], params["bn3_bias"] = _fold_bn(
        1.0 + 0.1 * jax.random.normal(keys[11], (out_c,)),
        jnp.zeros((out_c,)), jnp.zeros((out_c,)), jnp.ones((out_c,)))
    return params


# ---------------------------------------------------------------------------
# Pure-JAX reference (lax.conv) for correctness check
# ---------------------------------------------------------------------------
def ref_forward(x_nchw, params, *, expand, stride):
    x = jnp.transpose(x_nchw, (0, 2, 3, 1)).astype(jnp.float32)
    dn = ("NHWC", "HWIO", "NHWC")
    h = x
    if expand != 1:
        h = jax.lax.conv_general_dilated(
            h, params["w1"][None, None], (1, 1), "SAME", dimension_numbers=dn)
        h = jnp.clip(h * params["bn1_scale"] + params["bn1_bias"], 0.0, 6.0)
    C = h.shape[-1]
    wdw = params["w_dw"].reshape(3, 3, 1, C)
    h = jax.lax.conv_general_dilated(
        h, wdw, (stride, stride), ((1, 1), (1, 1)),
        dimension_numbers=dn, feature_group_count=C)
    h = jnp.clip(h * params["bn2_scale"] + params["bn2_bias"], 0.0, 6.0)
    y = jax.lax.conv_general_dilated(
        h, params["w3"][None, None], (1, 1), "SAME", dimension_numbers=dn)
    y = y * params["bn3_scale"] + params["bn3_bias"]
    if stride == 1 and x.shape[-1] == y.shape[-1]:
        y = y + x
    return jnp.transpose(y, (0, 3, 1, 2))


if __name__ == "__main__":
    test_cfgs = [
        # (N, in_c, out_c, H,  W,  expand, stride)
        (2, 4, 4, 16, 16, 6, 1),    # residual path, single strip
        (2, 4, 8, 15, 15, 6, 2),    # strided, odd spatial size
        (2, 8, 8, 16, 16, 1, 1),    # no expansion sub-block, residual
        (1, 4, 4, 40, 40, 6, 1),    # multiple strips + ragged tail, residual
        (1, 4, 8, 33, 33, 6, 2),    # strided, multiple strips + ragged tail
    ]
    key = jax.random.PRNGKey(0)
    for (N, in_c, out_c, H, W, expand, stride) in test_cfgs:
        key, kx, kp = jax.random.split(key, 3)
        x = jax.random.normal(kx, (N, in_c, H, W), jnp.float32)  # NCHW
        params = make_params(kp, in_c, out_c, expand)

        out = jax.block_until_ready(
            bottleneck_forward(x, params, expand=expand, stride=stride))
        ref = jax.block_until_ready(
            ref_forward(x, params, expand=expand, stride=stride))

        assert out.shape == ref.shape, (out.shape, ref.shape)
        max_err = float(jnp.abs(out - ref).max())
        assert jnp.allclose(out, ref, atol=1e-3, rtol=1e-3), max_err

    print("KERNEL_OK")
</pallas_src>

<mosaic_0001>
module attributes {stable_mosaic.version = 11 : i64} {
  func.func @_bottleneck_kernel(%arg0: i32, %arg1: i32, %arg2: memref<1x288x128xf32, #tpu.memory_space<vmem>>, %arg3: memref<128x128xf32, #tpu.memory_space<vmem>>, %arg4: memref<1x128xf32, #tpu.memory_space<vmem>>, %arg5: memref<3x3x128xf32, #tpu.memory_space<vmem>>, %arg6: memref<1x128xf32, #tpu.memory_space<vmem>>, %arg7: memref<128x128xf32, #tpu.memory_space<vmem>>, %arg8: memref<1x128xf32, #tpu.memory_space<vmem>>, %arg9: memref<1x1x256x128xf32, #tpu.memory_space<vmem>>, %arg10: memref<304x128xf32, #tpu.memory_space<vmem>>, %arg11: memref<256x128xf32, #tpu.memory_space<vmem>>) attributes {dimension_semantics = [#tpu.dimension_semantics<parallel>, #tpu.dimension_semantics<parallel>], iteration_bounds = array<i64: 2, 1>, scalar_prefetch = 0 : i64, scratch_operands = 2 : i64, tpu.core_type = #tpu.core_type<tc>, window_params = [{transform_indices = @transform_0, window_bounds = array<i64: 1, 288, 128>}, {pipeline_mode = #tpu.pipeline_mode<synchronous>, transform_indices = @transform_1, window_bounds = array<i64: 128, 128>}, {pipeline_mode = #tpu.pipeline_mode<synchronous>, transform_indices = @transform_2, window_bounds = array<i64: 1, 128>}, {pipeline_mode = #tpu.pipeline_mode<synchronous>, transform_indices = @transform_3, window_bounds = array<i64: 3, 3, 128>}, {pipeline_mode = #tpu.pipeline_mode<synchronous>, transform_indices = @transform_4, window_bounds = array<i64: 1, 128>}, {pipeline_mode = #tpu.pipeline_mode<synchronous>, transform_indices = @transform_5, window_bounds = array<i64: 128, 128>}, {pipeline_mode = #tpu.pipeline_mode<synchronous>, transform_indices = @transform_6, window_bounds = array<i64: 1, 128>}, {transform_indices = @transform_7, window_bounds = array<i64: 1, 1, 256, 128>}]} {
    %c16_i32 = arith.constant 16 : i32
    %0 = arith.muli %arg1, %c16_i32 : i32
    %c1_i32 = arith.constant 1 : i32
    %1 = arith.muli %0, %c1_i32 : i32
    %c1_i32_0 = arith.constant 1 : i32
    %2 = arith.subi %1, %c1_i32_0 : i32
    %cst = arith.constant 0.000000e+00 : f32
    %3 = vector.broadcast %cst : f32 to vector<8x128xf32>
    %c0 = arith.constant 0 : index
    %c0_1 = arith.constant 0 : index
    %4 = vector.load %arg10[%c0, %c0_1] : memref<304x128xf32, #tpu.memory_space<vmem>>, vector<8x128xf32>
    tpu.vector_store %arg10[%c0, %c0_1], %3 {strides = array<i32>} : memref<304x128xf32, #tpu.memory_space<vmem>>, vector<8x128xf32>,
    %cst_2 = arith.constant 0.000000e+00 : f32
    %5 = vector.broadcast %cst_2 : f32 to vector<8x128xf32>
    %c296 = arith.constant 296 : index
    %c0_3 = arith.constant 0 : index
    %6 = vector.load %arg10[%c296, %c0_3] : memref<304x128xf32, #tpu.memory_space<vmem>>, vector<8x128xf32>
    tpu.vector_store %arg10[%c296, %c0_3], %5 {strides = array<i32>} : memref<304x128xf32, #tpu.memory_space<vmem>>, vector<8x128xf32>,
    %c256_i32 = arith.constant 256 : i32
    %7 = arith.muli %arg1, %c256_i32 : i32
    %8 = tpu.assume_multiple %7, 8 : i32
    %c0_4 = arith.constant 0 : index
    %9 = arith.index_cast %8 : i32 to index
    %c0_5 = arith.constant 0 : index
    %10 = vector.load %arg2[%c0_4, %9, %c0_5] : memref<1x288x128xf32, #tpu.memory_space<vmem>>, vector<1x288x128xf32>
    %11 = vector.shape_cast %10 : vector<1x288x128xf32> to vector<288x128xf32>
    %c0_6 = arith.constant 0 : index
    %c0_7 = arith.constant 0 : index
    %12 = vector.load %arg3[%c0_6, %c0_7] : memref<128x128xf32, #tpu.memory_space<vmem>>, vector<128x128xf32>
    %cst_8 = arith.constant dense<0.000000e+00> : vector<288x128xf32>
    %13 = tpu.matmul %11, %12, %cst_8 {dimension_numbers = #tpu.dot_dimension_numbers<[1], [0], [0], [1], [0, 0, 1, 1], [], []>} : vector<288x128xf32>, vector<128x128xf32>, vector<288x128xf32> -> vector<288x128xf32>
    %c0_9 = arith.constant 0 : index
    %c0_10 = arith.constant 0 : index
    %14 = vector.load %arg4[%c0_9, %c0_10] : memref<1x128xf32, #tpu.memory_space<vmem>>, vector<1x128xf32>
    %15 = vector.broadcast %14 : vector<1x128xf32> to vector<288x128xf32>
    %16 = arith.addf %13, %15 : vector<288x128xf32>
    %cst_11 = arith.constant 0.000000e+00 : f32
    %cst_12 = arith.constant 6.000000e+00 : f32
    %17 = vector.broadcast %cst_11 : f32 to vector<288x128xf32>
    %18 = arith.maximumf %17, %16 : vector<288x128xf32>
    %19 = vector.broadcast %cst_12 : f32 to vector<288x128xf32>
    %20 = arith.minimumf %19, %18 : vector<288x128xf32>
    %21 = tpu.iota {dimensions = array<i32: 0>} : vector<288x1xi32>
    %c0_i32 = arith.constant 0 : i32
    %22 = arith.subi %c0_i32, %2 : i32
    %c16_i32_13 = arith.constant 16 : i32
    %23 = arith.muli %22, %c16_i32_13 : i32
    %24 = vector.broadcast %23 : i32 to vector<288x1xi32>
    %25 = arith.cmpi sge, %21, %24 : vector<288x1xi32>
    %c16_i32_14 = arith.constant 16 : i32
    %26 = arith.subi %c16_i32_14, %2 : i32
    %c16_i32_15 = arith.constant 16 : i32
    %27 = arith.muli %26, %c16_i32_15 : i32
    %28 = vector.broadcast %27 : i32 to vector<288x1xi32>
    %29 = arith.cmpi slt, %21, %28 : vector<288x1xi32>
    %30 = arith.andi %25, %29 : vector<288x1xi1>
    %cst_16 = arith.constant 0.000000e+00 : f32
    %31 = vector.shape_cast %30 : vector<288x1xi1> to vector<288x1xi1>
    %32 = vector.broadcast %31 : vector<288x1xi1> to vector<288x128xi1>
    %33 = vector.broadcast %cst_16 : f32 to vector<288x128xf32>
    %34 = arith.select %32, %20, %33 : vector<288x128xi1>, vector<288x128xf32>
    %c8 = arith.constant 8 : index
    %c0_17 = arith.constant 0 : index
    %35 = vector.load %arg10[%c8, %c0_17] : memref<304x128xf32, #tpu.memory_space<vmem>>, vector<288x128xf32>
    tpu.vector_store %arg10[%c8, %c0_17], %34 {strides = array<i32>} : memref<304x128xf32, #tpu.memory_space<vmem>>, vector<288x128xf32>,
    %c0_18 = arith.constant 0 : index
    %c0_19 = arith.constant 0 : index
    %c0_20 = arith.constant 0 : index
    %36 = vector.load %arg5[%c0_18, %c0_19, %c0_20] : memref<3x3x128xf32, #tpu.memory_space<vmem>>, vector<1x1x128xf32>
    %37 = vector.shape_cast %36 : vector<1x1x128xf32> to vector<1x128xf32>
    %c0_21 = arith.constant 0 : index
    %c1 = arith.constant 1 : index
    %c0_22 = arith.constant 0 : index
    %38 = vector.load %arg5[%c0_21, %c1, %c0_22] : memref<3x3x128xf32, #tpu.memory_space<vmem>>, vector<1x1x128xf32>
    %39 = vector.shape_cast %38 : vector<1x1x128xf32> to vector<1x128xf32>
    %c0_23 = arith.constant 0 : index
    %c2 = arith.constant 2 : index
    %c0_24 = arith.constant 0 : index
    %40 = vector.load %arg5[%c0_23, %c2, %c0_24] : memref<3x3x128xf32, #tpu.memory_space<vmem>>, vector<1x1x128xf32>
    %41 = vector.shape_cast %40 : vector<1x1x128xf32> to vector<1x128xf32>
    %c1_25 = arith.constant 1 : index
    %c0_26 = arith.constant 0 : index
    %c0_27 = arith.constant 0 : index
    %42 = vector.load %arg5[%c1_25, %c0_26, %c0_27] : memref<3x3x128xf32, #tpu.memory_space<vmem>>, vector<1x1x128xf32>
    %43 = vector.shape_cast %42 : vector<1x1x128xf32> to vector<1x128xf32>
    %c1_28 = arith.constant 1 : index
    %c1_29 = arith.constant 1 : index
    %c0_30 = arith.constant 0 : index
    %44 = vector.load %arg5[%c1_28, %c1_29, %c0_30] : memref<3x3x128xf32, #tpu.memory_space<vmem>>, vector<1x1x128xf32>
    %45 = vector.shape_cast %44 : vector<1x1x128xf32> to vector<1x128xf32>
    %c1_31 = arith.constant 1 : index
    %c2_32 = arith.constant 2 : index
    %c0_33 = arith.constant 0 : index
    %46 = vector.load %arg5[%c1_31, %c2_32, %c0_33] : memref<3x3x128xf32, #tpu.memory_space<vmem>>, vector<1x1x128xf32>
    %47 = vector.shape_cast %46 : vector<1x1x128xf32> to vector<1x128xf32>
    %c2_34 = arith.constant 2 : index
    %c0_35 = arith.constant 0 : index
    %c0_36 = arith.constant 0 : index
    %48 = vector.load %arg5[%c2_34, %c0_35, %c0_36] : memref<3x3x128xf32, #tpu.memory_space<vmem>>, vector<1x1x128xf32>
    %49 = vector.shape_cast %48 : vector<1x1x128xf32> to vector<1x128xf32>
    %c2_37 = arith.constant 2 : index
    %c1_38 = arith.constant 1 : index
    %c0_39 = arith.constant 0 : index
    %50 = vector.load %arg5[%c2_37, %c1_38, %c0_39] : memref<3x3x128xf32, #tpu.memory_space<vmem>>, vector<1x1x128xf32>
    %51 = vector.shape_cast %50 : vector<1x1x128xf32> to vector<1x128xf32>
    %c2_40 = arith.constant 2 : index
    %c2_41 = arith.constant 2 : index
    %c0_42 = arith.constant 0 : index
    %52 = vector.load %arg5[%c2_40, %c2_41, %c0_42] : memref<3x3x128xf32, #tpu.memory_space<vmem>>, vector<1x1x128xf32>
    %53 = vector.shape_cast %52 : vector<1x1x128xf32> to vector<1x128xf32>
    %c0_43 = arith.constant 0 : index
    %c0_44 = arith.constant 0 : index
    %54 = vector.load %arg6[%c0_43, %c0_44] : memref<1x128xf32, #tpu.memory_space<vmem>>, vector<1x128xf32>
    %55 = tpu.iota {dimensions = array<i32: 0>} : vector<16x1xi32>
    %c0_i32_45 = arith.constant 0 : i32
    %56 = vector.broadcast %c0_i32_45 : i32 to vector<16x1xi32>
    %57 = arith.cmpi sgt, %55, %56 : vector<16x1xi32>
    %c15_i32 = arith.constant 15 : i32
    %58 = vector.broadcast %c15_i32 : i32 to vector<16x1xi32>
    %59 = arith.cmpi slt, %55, %58 : vector<16x1xi32>
    %c7 = arith.constant 7 : index
    %c0_46 = arith.constant 0 : index
    %60 = vector.load %arg10[%c7, %c0_46] : memref<304x128xf32, #tpu.memory_space<vmem>>, vector<16x128xf32>
    %cst_47 = arith.constant 0.000000e+00 : f32
    %61 = vector.shape_cast %57 : vector<16x1xi1> to vector<16x1xi1>
    %62 = vector.broadcast %61 : vector<16x1xi1> to vector<16x128xi1>
    %63 = vector.broadcast %cst_47 : f32 to vector<16x128xf32>
    %64 = arith.select %62, %60, %63 : vector<16x128xi1>, vector<16x128xf32>
    %65 = vector.broadcast %37 : vector<1x128xf32> to vector<16x128xf32>
    %66 = arith.mulf %64, %65 : vector<16x128xf32>
    %c8_48 = arith.constant 8 : index
    %c0_49 = arith.constant 0 : index
    %67 = vector.load %arg10[%c8_48, %c0_49] : memref<304x128xf32, #tpu.memory_space<vmem>>, vector<16x128xf32>
    %68 = vector.broadcast %39 : vector<1x128xf32> to vector<16x128xf32>
    %69 = arith.mulf %67, %68 : vector<16x128xf32>
    %70 = arith.addf %66, %69 : vector<16x128xf32>
    %c9 = arith.constant 9 : index
    %c0_50 = arith.constant 0 : index
    %71 = vector.load %arg10[%c9, %c0_50] : memref<304x128xf32, #tpu.memory_space<vmem>>, vector<16x128xf32>
    %cst_51 = arith.constant 0.000000e+00 : f32
    %72 = vector.shape_cast %59 : vector<16x1xi1> to vector<16x1xi1>
    %73 = vector.broadcast %72 : vector<16x1xi1> to vector<16x128xi1>
    %74 = vector.broadcast %cst_51 : f32 to vector<16x128xf32>
    %75 = arith.select %73, %71, %74 : vector<16x128xi1>, vector<16x128xf32>
    %76 = vector.broadcast %41 : vector<1x128xf32> to vector<16x128xf32>
    %77 = arith.mulf %75, %76 : vector<16x128xf32>
    %78 = arith.addf %70, %77 : vector<16x128xf32>
    %c23 = arith.constant 23 : index
    %c0_52 = arith.constant 0 : index
    %79 = vector.load %arg10[%c23, %c0_52] : memref<304x128xf32, #tpu.memory_space<vmem>>, vector<16x128xf32>
    %cst_53 = arith.constant 0.000000e+00 : f32
    %80 = vector.shape_cast %57 : vector<16x1xi1> to vector<16x1xi1>
    %81 = vector.broadcast %80 : vector<16x1xi1> to vector<16x128xi1>
    %82 = vector.broadcast %cst_53 : f32 to vector<16x128xf32>
    %83 = arith.select %81, %79, %82 : vector<16x128xi1>, vector<16x128xf32>
    %84 = vector.broadcast %43 : vector<1x128xf32> to vector<16x128xf32>
    %85 = arith.mulf %83, %84 : vector<16x128xf32>
    %86 = arith.addf %78, %85 : vector<16x128xf32>
    %c24 = arith.constant 24 : index
    %c0_54 = arith.constant 0 : index
    %87 = vector.load %arg10[%c24, %c0_54] : memref<304x128xf32, #tpu.memory_space<vmem>>, vector<16x128xf32>
    %88 = vector.broadcast %45 : vector<1x128xf32> to vector<16x128xf32>
    %89 = arith.mulf %87, %88 : vector<16x128xf32>
    %90 = arith.addf %86, %89 : vector<16x128xf32>
    %c25 = arith.constant 25 : index
    %c0_55 = arith.constant 0 : index
    %91 = vector.load %arg10[%c25, %c0_55] : memref<304x128xf32, #tpu.memory_space<vmem>>, vector<16x128xf32>
    %cst_56 = arith.constant 0.000000e+00 : f32
    %92 = vector.shape_cast %59 : vector<16x1xi1> to vector<16x1xi1>
    %93 = vector.broadcast %92 : vector<16x1xi1> to vector<16x128xi1>
    %94 = vector.broadcast %cst_56 : f32 to vector<16x128xf32>
    %95 = arith.select %93, %91, %94 : vector<16x128xi1>, vector<16x128xf32>
    %96 = vector.broadcast %47 : vector<1x128xf32> to vector<16x128xf32>
    %97 = arith.mulf %95, %96 : vector<16x128xf32>
    %98 = arith.addf %90, %97 : vector<16x128xf32>
    %c39 = arith.constant 39 : index
    %c0_57 = arith.constant 0 : index
    %99 = vector.load %arg10[%c39, %c0_57] : memref<304x128xf32, #tpu.memory_space<vmem>>, vector<16x128xf32>
    %cst_58 = arith.constant 0.000000e+00 : f32
    %100 = vector.shape_cast %57 : vector<16x1xi1> to vector<16x1xi1>
    %101 = vector.broadcast %100 : vector<16x1xi1> to vector<16x128xi1>
    %102 = vector.broadcast %cst_58 : f32 to vector<16x128xf32>
    %103 = arith.select %101, %99, %102 : vector<16x128xi1>, vector<16x128xf32>
    %104 = vector.broadcast %49 : vector<1x128xf32> to vector<16x128xf32>
    %105 = arith.mulf %103, %104 : vector<16x128xf32>
    %106 = arith.addf %98, %105 : vector<16x128xf32>
    %c40 = arith.constant 40 : index
    %c0_59 = arith.constant 0 : index
    %107 = vector.load %arg10[%c40, %c0_59] : memref<304x128xf32, #tpu.memory_space<vmem>>, vector<16x128xf32>
    %108 = vector.broadcast %51 : vector<1x128xf32> to vector<16x128xf32>
    %109 = arith.mulf %107, %108 : vector<16x128xf32>
    %110 = arith.addf %106, %109 : vector<16x128xf32>
    %c41 = arith.constant 41 : index
    %c0_60 = arith.constant 0 : index
    %111 = vector.load %arg10[%c41, %c0_60] : memref<304x128xf32, #tpu.memory_space<vmem>>, vector<16x128xf32>
    %cst_61 = arith.constant 0.000000e+00 : f32
    %112 = vector.shape_cast %59 : vector<16x1xi1> to vector<16x1xi1>
    %113 = vector.broadcast %112 : vector<16x1xi1> to vector<16x128xi1>
    %114 = vector.broadcast %cst_61 : f32 to vector<16x128xf32>
    %115 = arith.select %113, %111, %114 : vector<16x128xi1>, vector<16x128xf32>
    %116 = vector.broadcast %53 : vector<1x128xf32> to vector<16x128xf32>
    %117 = arith.mulf %115, %116 : vector<16x128xf32>
    %118 = arith.addf %110, %117 : vector<16x128xf32>
    %119 = vector.broadcast %54 : vector<1x128xf32> to vector<16x128xf32>
    %120 = arith.addf %118, %119 : vector<16x128xf32>
    %cst_62 = arith.constant 0.000000e+00 : f32
    %cst_63 = arith.constant 6.000000e+00 : f32
    %121 = vector.broadcast %cst_62 : f32 to vector<16x128xf32>
    %122 = arith.maximumf %121, %120 : vector<16x128xf32>
    %123 = vector.broadcast %cst_63 : f32 to vector<16x128xf32>
    %124 = arith.minimumf %123, %122 : vector<16x128xf32>
    %c0_64 = arith.constant 0 : index
    %c0_65 = arith.constant 0 : index
    %125 = vector.load %arg11[%c0_64, %c0_65] : memref<256x128xf32, #tpu.memory_space<vmem>>, vector<16x128xf32>
    tpu.vector_store %arg11[%c0_64, %c0_65], %124 {strides = array<i32>} : memref<256x128xf32, #tpu.memory_space<vmem>>, vector<16x128xf32>,
    %c23_66 = arith.constant 23 : index
    %c0_67 = arith.constant 0 : index
    %126 = vector.load %arg10[%c23_66, %c0_67] : memref<304x128xf32, #tpu.memory_space<vmem>>, vector<16x128xf32>
    %cst_68 = arith.constant 0.000000e+00 : f32
    %127 = vector.shape_cast %57 : vector<16x1xi1> to vector<16x1xi1>
    %128 = vector.broadcast %127 : vector<16x1xi1> to vector<16x128xi1>
    %129 = vector.broadcast %cst_68 : f32 to vector<16x128xf32>
    %130 = arith.select %128, %126, %129 : vector<16x128xi1>, vector<16x128xf32>
    %131 = vector.broadcast %37 : vector<1x128xf32> to vector<16x128xf32>
    %132 = arith.mulf %130, %131 : vector<16x128xf32>
    %c24_69 = arith.constant 24 : index
    %c0_70 = arith.constant 0 : index
    %133 = vector.load %arg10[%c24_69, %c0_70] : memref<304x128xf32, #tpu.memory_space<vmem>>, vector<16x128xf32>
    %134 = vector.broadcast %39 : vector<1x128xf32> to vector<16x128xf32>
    %135 = arith.mulf %133, %134 : vector<16x128xf32>
    %136 = arith.addf %132, %135 : vector<16x128xf32>
    %c25_71 = arith.constant 25 : index
    %c0_72 = arith.constant 0 : index
    %137 = vector.load %arg10[%c25_71, %c0_72] : memref<304x128xf32, #tpu.memory_space<vmem>>, vector<16x128xf32>
    %cst_73 = arith.constant 0.000000e+00 : f32
    %138 = vector.shape_cast %59 : vector<16x1xi1> to vector<16x1xi1>
    %139 = vector.broadcast %138 : vector<16x1xi1> to vector<16x128xi1>
    %140 = vector.broadcast %cst_73 : f32 to vector<16x128xf32>
    %141 = arith.select %139, %137, %140 : vector<16x128xi1>, vector<16x128xf32>
    %142 = vector.broadcast %41 : vector<1x128xf32> to vector<16x128xf32>
    %143 = arith.mulf %141, %142 : vector<16x128xf32>
    %144 = arith.addf %136, %143 : vector<16x128xf32>
    %c39_74 = arith.constant 39 : index
    %c0_75 = arith.constant 0 : index
    %145 = vector.load %arg10[%c39_74, %c0_75] : memref<304x128xf32, #tpu.memory_space<vmem>>, vector<16x128xf32>
    %cst_76 = arith.constant 0.000000e+00 : f32
    %146 = vector.shape_cast %57 : vector<16x1xi1> to vector<16x1xi1>
    %147 = vector.broadcast %146 : vector<16x1xi1> to vector<16x128xi1>
    %148 = vector.broadcast %cst_76 : f32 to vector<16x128xf32>
    %149 = arith.select %147, %145, %148 : vector<16x128xi1>, vector<16x128xf32>
    %150 = vector.broadcast %43 : vector<1x128xf32> to vector<16x128xf32>
    %151 = arith.mulf %149, %150 : vector<16x128xf32>
    %152 = arith.addf %144, %151 : vector<16x128xf32>
    %c40_77 = arith.constant 40 : index
    %c0_78 = arith.constant 0 : index
    %153 = vector.load %arg10[%c40_77, %c0_78] : memref<304x128xf32, #tpu.memory_space<vmem>>, vector<16x128xf32>
    %154 = vector.broadcast %45 : vector<1x128xf32> to vector<16x128xf32>
    %155 = arith.mulf %153, %154 : vector<16x128xf32>
    %156 = arith.addf %152, %155 : vector<16x128xf32>
    %c41_79 = arith.constant 41 : index
    %c0_80 = arith.constant 0 : index
    %157 = vector.load %arg10[%c41_79, %c0_80] : memref<304x128xf32, #tpu.memory_space<vmem>>, vector<16x128xf32>
    %cst_81 = arith.constant 0.000000e+00 : f32
    %158 = vector.shape_cast %59 : vector<16x1xi1> to vector<16x1xi1>
    %159 = vector.broadcast %158 : vector<16x1xi1> to vector<16x128xi1>
    %160 = vector.broadcast %cst_81 : f32 to vector<16x128xf32>
    %161 = arith.select %159, %157, %160 : vector<16x128xi1>, vector<16x128xf32>
    %162 = vector.broadcast %47 : vector<1x128xf32> to vector<16x128xf32>
    %163 = arith.mulf %161, %162 : vector<16x128xf32>
    %164 = arith.addf %156, %163 : vector<16x128xf32>
    %c55 = arith.constant 55 : index
    %c0_82 = arith.constant 0 : index
    %165 = vector.load %arg10[%c55, %c0_82] : memref<304x128xf32, #tpu.memory_space<vmem>>, vector<16x128xf32>
    %cst_83 = arith.constant 0.000000e+00 : f32
    %166 = vector.shape_cast %57 : vector<16x1xi1> to vector<16x1xi1>
    %167 = vector.broadcast %166 : vector<16x1xi1> to vector<16x128xi1>
    %168 = vector.broadcast %cst_83 : f32 to vector<16x128xf32>
    %169 = arith.select %167, %165, %168 : vector<16x128xi1>, vector<16x128xf32>
    %170 = vector.broadcast %49 : vector<1x128xf32> to vector<16x128xf32>
    %171 = arith.mulf %169, %170 : vector<16x128xf32>
    %172 = arith.addf %164, %171 : vector<16x128xf32>
    %c56 = arith.constant 56 : index
    %c0_84 = arith.constant 0 : index
    %173 = vector.load %arg10[%c56, %c0_84] : memref<304x128xf32, #tpu.memory_space<vmem>>, vector<16x128xf32>
    %174 = vector.broadcast %51 : vector<1x128xf32> to vector<16x128xf32>
    %175 = arith.mulf %173, %174 : vector<16x128xf32>
    %176 = arith.addf %172, %175 : vector<16x128xf32>
    %c57 = arith.constant 57 : index
    %c0_85 = arith.constant 0 : index
    %177 = vector.load %arg10[%c57, %c0_85] : memref<304x128xf32, #tpu.memory_space<vmem>>, vector<16x128xf32>
    %cst_86 = arith.constant 0.000000e+00 : f32
    %178 = vector.shape_cast %59 : vector<16x1xi1> to vector<16x1xi1>
    %179 = vector.broadcast %178 : vector<16x1xi1> to vector<16x128xi1>
    %180 = vector.broadcast %cst_86 : f32 to vector<16x128xf32>
    %181 = arith.select %179, %177, %180 : vector<16x128xi1>, vector<16x128xf32>
    %182 = vector.broadcast %53 : vector<1x128xf32> to vector<16x128xf32>
    %183 = arith.mulf %181, %182 : vector<16x128xf32>
    %184 = arith.addf %176, %183 : vector<16x128xf32>
    %185 = vector.broadcast %54 : vector<1x128xf32> to vector<16x128xf32>
    %186 = arith.addf %184, %185 : vector<16x128xf32>
    %cst_87 = arith.constant 0.000000e+00 : f32
    %cst_88 = arith.constant 6.000000e+00 : f32
    %187 = vector.broadcast %cst_87 : f32 to vector<16x128xf32>
    %188 = arith.maximumf %187, %186 : vector<16x128xf32>
    %189 = vector.broadcast %cst_88 : f32 to vector<16x128xf32>
    %190 = arith.minimumf %189, %188 : vector<16x128xf32>
    %c16 = arith.constant 16 : index
    %c0_89 = arith.constant 0 : index
    %191 = vector.load %arg11[%c16, %c0_89] : memref<256x128xf32, #tpu.memory_space<vmem>>, vector<16x128xf32>
    tpu.vector_store %arg11[%c16, %c0_89], %190 {strides = array<i32>} : memref<256x128xf32, #tpu.memory_space<vmem>>, vector<16x128xf32>,
    %c39_90 = arith.constant 39 : index
    %c0_91 = arith.constant 0 : index
    %192 = vector.load %arg10[%c39_90, %c0_91] : memref<304x128xf32, #tpu.memory_space<vmem>>, vector<16x128xf32>
    %cst_92 = arith.constant 0.000000e+00 : f32
    %193 = vector.shape_cast %57 : vector<16x1xi1> to vector<16x1xi1>
    %194 = vector.broadcast %193 : vector<16x1xi1> to vector<16x128xi1>
    %195 = vector.broadcast %cst_92 : f32 to vector<16x128xf32>
    %196 = arith.select %194, %192, %195 : vector<16x128xi1>, vector<16x128xf32>
    %197 = vector.broadcast %37 : vector<1x128xf32> to vector<16x128xf32>
    %198 = arith.mulf %196, %197 : vector<16x128xf32>
    %c40_93 = arith.constant 40 : index
    %c0_94 = arith.constant 0 : index
    %199 = vector.load %arg10[%c40_93, %c0_94] : memref<304x128xf32, #tpu.memory_space<vmem>>, vector<16x128xf32>
    %200 = vector.broadcast %39 : vector<1x128xf32> to vector<16x128xf32>
    %201 = arith.mulf %199, %200 : vector<16x128xf32>
    %202 = arith.addf %198, %201 : vector<16x128xf32>
    %c41_95 = arith.constant 41 : index
    %c0_96 = arith.constant 0 : index
    %203 = vector.load %arg10[%c41_95, %c0_96] : memref<304x128xf32, #tpu.memory_space<vmem>>, vector<16x128xf32>
    %cst_97 = arith.constant 0.000000e+00 : f32
    %204 = vector.shape_cast %59 : vector<16x1xi1> to vector<16x1xi1>
    %205 = vector.broadcast %204 : vector<16x1xi1> to vector<16x128xi1>
    %206 = vector.broadcast %cst_97 : f32 to vector<16x128xf32>
    %207 = arith.select %205, %203, %206 : vector<16x128xi1>, vector<16x128xf32>
    %208 = vector.broadcast %41 : vector<1x128xf32> to vector<16x128xf32>
    %209 = arith.mulf %207, %208 : vector<16x128xf32>
    %210 = arith.addf %202, %209 : vector<16x128xf32>
    %c55_98 = arith.constant 55 : index
    %c0_99 = arith.constant 0 : index
    %211 = vector.load %arg10[%c55_98, %c0_99] : memref<304x128xf32, #tpu.memory_space<vmem>>, vector<16x128xf32>
    %cst_100 = arith.constant 0.000000e+00 : f32
    %212 = vector.shape_cast %57 : vector<16x1xi1> to vector<16x1xi1>
    %213 = vector.broadcast %212 : vector<16x1xi1> to vector<16x128xi1>
    %214 = vector.broadcast %cst_100 : f32 to vector<16x128xf32>
    %215 = arith.select %213, %211, %214 : vector<16x128xi1>, vector<16x128xf32>
    %216 = vector.broadcast %43 : vector<1x128xf32> to vector<16x128xf32>
    %217 = arith.mulf %215, %216 : vector<16x128xf32>
    %218 = arith.addf %210, %217 : vector<16x128xf32>
    %c56_101 = arith.constant 56 : index
    %c0_102 = arith.constant 0 : index
    %219 = vector.load %arg10[%c56_101, %c0_102] : memref<304x128xf32, #tpu.memory_space<vmem>>, vector<16x128xf32>
    %220 = vector.broadcast %45 : vector<1x128xf32> to vector<16x128xf32>
    %221 = arith.mulf %219, %220 : vector<16x128xf32>
    %222 = arith.addf %218, %221 : vector<16x128xf32>
    %c57_103 = arith.constant 57 : index
    %c0_104 = arith.constant 0 : index
    %223 = vector.load %arg10[%c57_103, %c0_104] : memref<304x128xf32, #tpu.memory_space<vmem>>, vector<16x128xf32>
    %cst_105 = arith.constant 0.000000e+00 : f32
    %224 = vector.shape_cast %59 : vector<16x1xi1> to vector<16x1xi1>
    %225 = vector.broadcast %224 : vector<16x1xi1> to vector<16x128xi1>
    %226 = vector.broadcast %cst_105 : f32 to vector<16x128xf32>
    %227 = arith.select %225, %223, %226 : vector<16x128xi1>, vector<16x128xf32>
    %228 = vector.broadcast %47 : vector<1x128xf32> to vector<16x128xf32>
    %229 = arith.mulf %227, %228 : vector<16x128xf32>
    %230 = arith.addf %222, %229 : vector<16x128xf32>
    %c71 = arith.constant 71 : index
    %c0_106 = arith.constant 0 : index
    %231 = vector.load %arg10[%c71, %c0_106] : memref<304x128xf32, #tpu.memory_space<vmem>>, vector<16x128xf32>
    %cst_107 = arith.constant 0.000000e+00 : f32
    %232 = vector.shape_cast %57 : vector<16x1xi1> to vector<16x1xi1>
    %233 = vector.broadcast %232 : vector<16x1xi1> to vector<16x128xi1>
    %234 = vector.broadcast %cst_107 : f32 to vector<16x128xf32>
    %235 = arith.select %233, %231, %234 : vector<16x128xi1>, vector<16x128xf32>
    %236 = vector.broadcast %49 : vector<1x128xf32> to vector<16x128xf32>
    %237 = arith.mulf %235, %236 : vector<16x128xf32>
    %238 = arith.addf %230, %237 : vector<16x128xf32>
    %c72 = arith.constant 72 : index
    %c0_108 = arith.constant 0 : index
    %239 = vector.load %arg10[%c72, %c0_108] : memref<304x128xf32, #tpu.memory_space<vmem>>, vector<16x128xf32>
    %240 = vector.broadcast %51 : vector<1x128xf32> to vector<16x128xf32>
    %241 = arith.mulf %239, %240 : vector<16x128xf32>
    %242 = arith.addf %238, %241 : vector<16x128xf32>
    %c73 = arith.constant 73 : index
    %c0_109 = arith.constant 0 : index
    %243 = vector.load %arg10[%c73, %c0_109] : memref<304x128xf32, #tpu.memory_space<vmem>>, vector<16x128xf32>
    %cst_110 = arith.constant 0.000000e+00 : f32
    %244 = vector.shape_cast %59 : vector<16x1xi1> to vector<16x1xi1>
    %245 = vector.broadcast %244 : vector<16x1xi1> to vector<16x128xi1>
    %246 = vector.broadcast %cst_110 : f32 to vector<16x128xf32>
    %247 = arith.select %245, %243, %246 : vector<16x128xi1>, vector<16x128xf32>
    %248 = vector.broadcast %53 : vector<1x128xf32> to vector<16x128xf32>
    %249 = arith.mulf %247, %248 : vector<16x128xf32>
    %250 = arith.addf %242, %249 : vector<16x128xf32>
    %251 = vector.broadcast %54 : vector<1x128xf32> to vector<16x128xf32>
    %252 = arith.addf %250, %251 : vector<16x128xf32>
    %cst_111 = arith.constant 0.000000e+00 : f32
    %cst_112 = arith.constant 6.000000e+00 : f32
    %253 = vector.broadcast %cst_111 : f32 to vector<16x128xf32>
    %254 = arith.maximumf %253, %252 : vector<16x128xf32>
    %255 = vector.broadcast %cst_112 : f32 to vector<16x128xf32>
    %256 = arith.minimumf %255, %254 : vector<16x128xf32>
    %c32 = arith.constant 32 : index
    %c0_113 = arith.constant 0 : index
    %257 = vector.load %arg11[%c32, %c0_113] : memref<256x128xf32, #tpu.memory_space<vmem>>, vector<16x128xf32>
    tpu.vector_store %arg11[%c32, %c0_113], %256 {strides = array<i32>} : memref<256x128xf32, #tpu.memory_space<vmem>>, vector<16x128xf32>,
    %c55_114 = arith.constant 55 : index
    %c0_115 = arith.constant 0 : index
    %258 = vector.load %arg10[%c55_114, %c0_115] : memref<304x128xf32, #tpu.memory_space<vmem>>, vector<16x128xf32>
    %cst_116 = arith.constant 0.000000e+00 : f32
    %259 = vector.shape_cast %57 : vector<16x1xi1> to vector<16x1xi1>
    %260 = vector.broadcast %259 : vector<16x1xi1> to vector<16x128xi1>
    %261 = vector.broadcast %cst_116 : f32 to vector<16x128xf32>
    %262 = arith.select %260, %258, %261 : vector<16x128xi1>, vector<16x128xf32>
    %263 = vector.broadcast %37 : vector<1x128xf32> to vector<16x128xf32>
    %264 = arith.mulf %262, %263 : vector<16x128xf32>
    %c56_117 = arith.constant 56 : index
    %c0_118 = arith.constant 0 : index
    %265 = vector.load %arg10[%c56_117, %c0_118] : memref<304x128xf32, #tpu.memory_space<vmem>>, vector<16x128xf32>
    %266 = vector.broadcast %39 : vector<1x128xf32> to vector<16x128xf32>
    %267 = arith.mulf %265, %266 : vector<16x128xf32>
    %268 = arith.addf %264, %267 : vector<16x128xf32>
    %c57_119 = arith.constant 57 : index
    %c0_120 = arith.constant 0 : index
    %269 = vector.load %arg10[%c57_119, %c0_120] : memref<304x128xf32, #tpu.memory_space<vmem>>, vector<16x128xf32>
    %cst_121 = arith.constant 0.000000e+00 : f32
    %270 = vector.shape_cast %59 : vector<16x1xi1> to vector<16x1xi1>
    %271 = vector.broadcast %270 : vector<16x1xi1> to vector<16x128xi1>
    %272 = vector.broadcast %cst_121 : f32 to vector<16x128xf32>
    %273 = arith.select %271, %269, %272 : vector<16x128xi1>, vector<16x128xf32>
    %274 = vector.broadcast %41 : vector<1x128xf32> to vector<16x128xf32>
    %275 = arith.mulf %273, %274 : vector<16x128xf32>
    %276 = arith.addf %268, %275 : vector<16x128xf32>
    %c71_122 = arith.constant 71 : index
    %c0_123 = arith.constant 0 : index
    %277 = vector.load %arg10[%c71_122, %c0_123] : memref<304x128xf32, #tpu.memory_space<vmem>>, vector<16x128xf32>
    %cst_124 = arith.constant 0.000000e+00 : f32
    %278 = vector.shape_cast %57 : vector<16x1xi1> to vector<16x1xi1>
    %279 = vector.broadcast %278 : vector<16x1xi1> to vector<16x128xi1>
    %280 = vector.broadcast %cst_124 : f32 to vector<16x128xf32>
    %281 = arith.select %279, %277, %280 : vector<16x128xi1>, vector<16x128xf32>
    %282 = vector.broadcast %43 : vector<1x128xf32> to vector<16x128xf32>
    %283 = arith.mulf %281, %282 : vector<16x128xf32>
    %284 = arith.addf %276, %283 : vector<16x128xf32>
    %c72_125 = arith.constant 72 : index
    %c0_126 = arith.constant 0 : index
    %285 = vector.load %arg10[%c72_125, %c0_126] : memref<304x128xf32, #tpu.memory_space<vmem>>, vector<16x128xf32>
    %286 = vector.broadcast %45 : vector<1x128xf32> to vector<16x128xf32>
    %287 = arith.mulf %285, %286 : vector<16x128xf32>
    %288 = arith.addf %284, %287 : vector<16x128xf32>
    %c73_127 = arith.constant 73 : index
    %c0_128 = arith.constant 0 : index
    %289 = vector.load %arg10[%c73_127, %c0_128] : memref<304x128xf32, #tpu.memory_space<vmem>>, vector<16x128xf32>
    %cst_129 = arith.constant 0.000000e+00 : f32
    %290 = vector.shape_cast %59 : vector<16x1xi1> to vector<16x1xi1>
    %291 = vector.broadcast %290 : vector<16x1xi1> to vector<16x128xi1>
    %292 = vector.broadcast %cst_129 : f32 to vector<16x128xf32>
    %293 = arith.select %291, %289, %292 : vector<16x128xi1>, vector<16x128xf32>
    %294 = vector.broadcast %47 : vector<1x128xf32> to vector<16x128xf32>
    %295 = arith.mulf %293, %294 : vector<16x128xf32>
    %296 = arith.addf %288, %295 : vector<16x128xf32>
    %c87 = arith.constant 87 : index
    %c0_130 = arith.constant 0 : index
    %297 = vector.load %arg10[%c87, %c0_130] : memref<304x128xf32, #tpu.memory_space<vmem>>, vector<16x128xf32>
    %cst_131 = arith.constant 0.000000e+00 : f32
    %298 = vector.shape_cast %57 : vector<16x1xi1> to vector<16x1xi1>
    %299 = vector.broadcast %298 : vector<16x1xi1> to vector<16x128xi1>
    %300 = vector.broadcast %cst_131 : f32 to vector<16x128xf32>
    %301 = arith.select %299, %297, %300 : vector<16x128xi1>, vector<16x128xf32>
    %302 = vector.broadcast %49 : vector<1x128xf32> to vector<16x128xf32>
    %303 = arith.mulf %301, %302 : vector<16x128xf32>
    %304 = arith.addf %296, %303 : vector<16x128xf32>
    %c88 = arith.constant 88 : index
    %c0_132 = arith.constant 0 : index
    %305 = vector.load %arg10[%c88, %c0_132] : memref<304x128xf32, #tpu.memory_space<vmem>>, vector<16x128xf32>
    %306 = vector.broadcast %51 : vector<1x128xf32> to vector<16x128xf32>
    %307 = arith.mulf %305, %306 : vector<16x128xf32>
    %308 = arith.addf %304, %307 : vector<16x128xf32>
    %c89 = arith.constant 89 : index
    %c0_133 = arith.constant 0 : index
    %309 = vector.load %arg10[%c89, %c0_133] : memref<304x128xf32, #tpu.memory_space<vmem>>, vector<16x128xf32>
    %cst_134 = arith.constant 0.000000e+00 : f32
    %310 = vector.shape_cast %59 : vector<16x1xi1> to vector<16x1xi1>
    %311 = vector.broadcast %310 : vector<16x1xi1> to vector<16x128xi1>
    %312 = vector.broadcast %cst_134 : f32 to vector<16x128xf32>
    %313 = arith.select %311, %309, %312 : vector<16x128xi1>, vector<16x128xf32>
    %314 = vector.broadcast %53 : vector<1x128xf32> to vector<16x128xf32>
    %315 = arith.mulf %313, %314 : vector<16x128xf32>
    %316 = arith.addf %308, %315 : vector<16x128xf32>
    %317 = vector.broadcast %54 : vector<1x128xf32> to vector<16x128xf32>
    %318 = arith.addf %316, %317 : vector<16x128xf32>
    %cst_135 = arith.constant 0.000000e+00 : f32
    %cst_136 = arith.constant 6.000000e+00 : f32
    %319 = vector.broadcast %cst_135 : f32 to vector<16x128xf32>
    %320 = arith.maximumf %319, %318 : vector<16x128xf32>
    %321 = vector.broadcast %cst_136 : f32 to vector<16x128xf32>
    %322 = arith.minimumf %321, %320 : vector<16x128xf32>
    %c48 = arith.constant 48 : index
    %c0_137 = arith.constant 0 : index
    %323 = vector.load %arg11[%c48, %c0_137] : memref<256x128xf32, #tpu.memory_space<vmem>>, vector<16x128xf32>
    tpu.vector_store %arg11[%c48, %c0_137], %322 {strides = array<i32>} : memref<256x128xf32, #tpu.memory_space<vmem>>, vector<16x128xf32>,
    %c71_138 = arith.constant 71 : index
    %c0_139 = arith.constant 0 : index
    %324 = vector.load %arg10[%c71_138, %c0_139] : memref<304x128xf32, #tpu.memory_space<vmem>>, vector<16x128xf32>
    %cst_140 = arith.constant 0.000000e+00 : f32
    %325 = vector.shape_cast %57 : vector<16x1xi1> to vector<16x1xi1>
    %326 = vector.broadcast %325 : vector<16x1xi1> to vector<16x128xi1>
    %327 = vector.broadcast %cst_140 : f32 to vector<16x128xf32>
    %328 = arith.select %326, %324, %327 : vector<16x128xi1>, vector<16x128xf32>
    %329 = vector.broadcast %37 : vector<1x128xf32> to vector<16x128xf32>
    %330 = arith.mulf %328, %329 : vector<16x128xf32>
    %c72_141 = arith.constant 72 : index
    %c0_142 = arith.constant 0 : index
    %331 = vector.load %arg10[%c72_141, %c0_142] : memref<304x128xf32, #tpu.memory_space<vmem>>, vector<16x128xf32>
    %332 = vector.broadcast %39 : vector<1x128xf32> to vector<16x128xf32>
    %333 = arith.mulf %331, %332 : vector<16x128xf32>
    %334 = arith.addf %330, %333 : vector<16x128xf32>
    %c73_143 = arith.constant 73 : index
    %c0_144 = arith.constant 0 : index
    %335 = vector.load %arg10[%c73_143, %c0_144] : memref<304x128xf32, #tpu.memory_space<vmem>>, vector<16x128xf32>
    %cst_145 = arith.constant 0.000000e+00 : f32
    %336 = vector.shape_cast %59 : vector<16x1xi1> to vector<16x1xi1>
    %337 = vector.broadcast %336 : vector<16x1xi1> to vector<16x128xi1>
    %338 = vector.broadcast %cst_145 : f32 to vector<16x128xf32>
    %339 = arith.select %337, %335, %338 : vector<16x128xi1>, vector<16x128xf32>
    %340 = vector.broadcast %41 : vector<1x128xf32> to vector<16x128xf32>
    %341 = arith.mulf %339, %340 : vector<16x128xf32>
    %342 = arith.addf %334, %341 : vector<16x128xf32>
    %c87_146 = arith.constant 87 : index
    %c0_147 = arith.constant 0 : index
    %343 = vector.load %arg10[%c87_146, %c0_147] : memref<304x128xf32, #tpu.memory_space<vmem>>, vector<16x128xf32>
    %cst_148 = arith.constant 0.000000e+00 : f32
    %344 = vector.shape_cast %57 : vector<16x1xi1> to vector<16x1xi1>
    %345 = vector.broadcast %344 : vector<16x1xi1> to vector<16x128xi1>
    %346 = vector.broadcast %cst_148 : f32 to vector<16x128xf32>
    %347 = arith.select %345, %343, %346 : vector<16x128xi1>, vector<16x128xf32>
    %348 = vector.broadcast %43 : vector<1x128xf32> to vector<16x128xf32>
    %349 = arith.mulf %347, %348 : vector<16x128xf32>
    %350 = arith.addf %342, %349 : vector<16x128xf32>
    %c88_149 = arith.constant 88 : index
    %c0_150 = arith.constant 0 : index
    %351 = vector.load %arg10[%c88_149, %c0_150] : memref<304x128xf32, #tpu.memory_space<vmem>>, vector<16x128xf32>
    %352 = vector.broadcast %45 : vector<1x128xf32> to vector<16x128xf32>
    %353 = arith.mulf %351, %352 : vector<16x128xf32>
    %354 = arith.addf %350, %353 : vector<16x128xf32>
    %c89_151 = arith.constant 89 : index
    %c0_152 = arith.constant 0 : index
    %355 = vector.load %arg10[%c89_151, %c0_152] : memref<304x128xf32, #tpu.memory_space<vmem>>, vector<16x128xf32>
    %cst_153 = arith.constant 0.000000e+00 : f32
    %356 = vector.shape_cast %59 : vector<16x1xi1> to vector<16x1xi1>
    %357 = vector.broadcast %356 : vector<16x1xi1> to vector<16x128xi1>
    %358 = vector.broadcast %cst_153 : f32 to vector<16x128xf32>
    %359 = arith.select %357, %355, %358 : vector<16x128xi1>, vector<16x128xf32>
    %360 = vector.broadcast %47 : vector<1x128xf32> to vector<16x128xf32>
    %361 = arith.mulf %359, %360 : vector<16x128xf32>
    %362 = arith.addf %354, %361 : vector<16x128xf32>
    %c103 = arith.constant 103 : index
    %c0_154 = arith.constant 0 : index
    %363 = vector.load %arg10[%c103, %c0_154] : memref<304x128xf32, #tpu.memory_space<vmem>>, vector<16x128xf32>
    %cst_155 = arith.constant 0.000000e+00 : f32
    %364 = vector.shape_cast %57 : vector<16x1xi1> to vector<16x1xi1>
    %365 = vector.broadcast %364 : vector<16x1xi1> to vector<16x128xi1>
    %366 = vector.broadcast %cst_155 : f32 to vector<16x128xf32>
    %367 = arith.select %365, %363, %366 : vector<16x128xi1>, vector<16x128xf32>
    %368 = vector.broadcast %49 : vector<1x128xf32> to vector<16x128xf32>
    %369 = arith.mulf %367, %368 : vector<16x128xf32>
    %370 = arith.addf %362, %369 : vector<16x128xf32>
    %c104 = arith.constant 104 : index
    %c0_156 = arith.constant 0 : index
    %371 = vector.load %arg10[%c104, %c0_156] : memref<304x128xf32, #tpu.memory_space<vmem>>, vector<16x128xf32>
    %372 = vector.broadcast %51 : vector<1x128xf32> to vector<16x128xf32>
    %373 = arith.mulf %371, %372 : vector<16x128xf32>
    %374 = arith.addf %370, %373 : vector<16x128xf32>
    %c105 = arith.constant 105 : index
    %c0_157 = arith.constant 0 : index
    %375 = vector.load %arg10[%c105, %c0_157] : memref<304x128xf32, #tpu.memory_space<vmem>>, vector<16x128xf32>
    %cst_158 = arith.constant 0.000000e+00 : f32
    %376 = vector.shape_cast %59 : vector<16x1xi1> to vector<16x1xi1>
    %377 = vector.broadcast %376 : vector<16x1xi1> to vector<16x128xi1>
    %378 = vector.broadcast %cst_158 : f32 to vector<16x128xf32>
    %379 = arith.select %377, %375, %378 : vector<16x128xi1>, vector<16x128xf32>
    %380 = vector.broadcast %53 : vector<1x128xf32> to vector<16x128xf32>
    %381 = arith.mulf %379, %380 : vector<16x128xf32>
    %382 = arith.addf %374, %381 : vector<16x128xf32>
    %383 = vector.broadcast %54 : vector<1x128xf32> to vector<16x128xf32>
    %384 = arith.addf %382, %383 : vector<16x128xf32>
    %cst_159 = arith.constant 0.000000e+00 : f32
    %cst_160 = arith.constant 6.000000e+00 : f32
    %385 = vector.broadcast %cst_159 : f32 to vector<16x128xf32>
    %386 = arith.maximumf %385, %384 : vector<16x128xf32>
    %387 = vector.broadcast %cst_160 : f32 to vector<16x128xf32>
    %388 = arith.minimumf %387, %386 : vector<16x128xf32>
    %c64 = arith.constant 64 : index
    %c0_161 = arith.constant 0 : index
    %389 = vector.load %arg11[%c64, %c0_161] : memref<256x128xf32, #tpu.memory_space<vmem>>, vector<16x128xf32>
    tpu.vector_store %arg11[%c64, %c0_161], %388 {strides = array<i32>} : memref<256x128xf32, #tpu.memory_space<vmem>>, vector<16x128xf32>,
    %c87_162 = arith.constant 87 : index
    %c0_163 = arith.constant 0 : index
    %390 = vector.load %arg10[%c87_162, %c0_163] : memref<304x128xf32, #tpu.memory_space<vmem>>, vector<16x128xf32>
    %cst_164 = arith.constant 0.000000e+00 : f32
    %391 = vector.shape_cast %57 : vector<16x1xi1> to vector<16x1xi1>
    %392 = vector.broadcast %391 : vector<16x1xi1> to vector<16x128xi1>
    %393 = vector.broadcast %cst_164 : f32 to vector<16x128xf32>
    %394 = arith.select %392, %390, %393 : vector<16x128xi1>, vector<16x128xf32>
    %395 = vector.broadcast %37 : vector<1x128xf32> to vector<16x128xf32>
    %396 = arith.mulf %394, %395 : vector<16x128xf32>
    %c88_165 = arith.constant 88 : index
    %c0_166 = arith.constant 0 : index
    %397 = vector.load %arg10[%c88_165, %c0_166] : memref<304x128xf32, #tpu.memory_space<vmem>>, vector<16x128xf32>
    %398 = vector.broadcast %39 : vector<1x128xf32> to vector<16x128xf32>
    %399 = arith.mulf %397, %398 : vector<16x128xf32>
    %400 = arith.addf %396, %399 : vector<16x128xf32>
    %c89_167 = arith.constant 89 : index
    %c0_168 = arith.constant 0 : index
    %401 = vector.load %arg10[%c89_167, %c0_168] : memref<304x128xf32, #tpu.memory_space<vmem>>, vector<16x128xf32>
    %cst_169 = arith.constant 0.000000e+00 : f32
    %402 = vector.shape_cast %59 : vector<16x1xi1> to vector<16x1xi1>
    %403 = vector.broadcast %402 : vector<16x1xi1> to vector<16x128xi1>
    %404 = vector.broadcast %cst_169 : f32 to vector<16x128xf32>
    %405 = arith.select %403, %401, %404 : vector<16x128xi1>, vector<16x128xf32>
    %406 = vector.broadcast %41 : vector<1x128xf32> to vector<16x128xf32>
    %407 = arith.mulf %405, %406 : vector<16x128xf32>
    %408 = arith.addf %400, %407 : vector<16x128xf32>
    %c103_170 = arith.constant 103 : index
    %c0_171 = arith.constant 0 : index
    %409 = vector.load %arg10[%c103_170, %c0_171] : memref<304x128xf32, #tpu.memory_space<vmem>>, vector<16x128xf32>
    %cst_172 = arith.constant 0.000000e+00 : f32
    %410 = vector.shape_cast %57 : vector<16x1xi1> to vector<16x1xi1>
    %411 = vector.broadcast %410 : vector<16x1xi1> to vector<16x128xi1>
    %412 = vector.broadcast %cst_172 : f32 to vector<16x128xf32>
    %413 = arith.select %411, %409, %412 : vector<16x128xi1>, vector<16x128xf32>
    %414 = vector.broadcast %43 : vector<1x128xf32> to vector<16x128xf32>
    %415 = arith.mulf %413, %414 : vector<16x128xf32>
    %416 = arith.addf %408, %415 : vector<16x128xf32>
    %c104_173 = arith.constant 104 : index
    %c0_174 = arith.constant 0 : index
    %417 = vector.load %arg10[%c104_173, %c0_174] : memref<304x128xf32, #tpu.memory_space<vmem>>, vector<16x128xf32>
    %418 = vector.broadcast %45 : vector<1x128xf32> to vector<16x128xf32>
    %419 = arith.mulf %417, %418 : vector<16x128xf32>
    %420 = arith.addf %416, %419 : vector<16x128xf32>
    %c105_175 = arith.constant 105 : index
    %c0_176 = arith.constant 0 : index
    %421 = vector.load %arg10[%c105_175, %c0_176] : memref<304x128xf32, #tpu.memory_space<vmem>>, vector<16x128xf32>
    %cst_177 = arith.constant 0.000000e+00 : f32
    %422 = vector.shape_cast %59 : vector<16x1xi1> to vector<16x1xi1>
    %423 = vector.broadcast %422 : vector<16x1xi1> to vector<16x128xi1>
    %424 = vector.broadcast %cst_177 : f32 to vector<16x128xf32>
    %425 = arith.select %423, %421, %424 : vector<16x128xi1>, vector<16x128xf32>
    %426 = vector.broadcast %47 : vector<1x128xf32> to vector<16x128xf32>
    %427 = arith.mulf %425, %426 : vector<16x128xf32>
    %428 = arith.addf %420, %427 : vector<16x128xf32>
    %c119 = arith.constant 119 : index
    %c0_178 = arith.constant 0 : index
    %429 = vector.load %arg10[%c119, %c0_178] : memref<304x128xf32, #tpu.memory_space<vmem>>, vector<16x128xf32>
    %cst_179 = arith.constant 0.000000e+00 : f32
    %430 = vector.shape_cast %57 : vector<16x1xi1> to vector<16x1xi1>
    %431 = vector.broadcast %430 : vector<16x1xi1> to vector<16x128xi1>
    %432 = vector.broadcast %cst_179 : f32 to vector<16x128xf32>
    %433 = arith.select %431, %429, %432 : vector<16x128xi1>, vector<16x128xf32>
    %434 = vector.broadcast %49 : vector<1x128xf32> to vector<16x128xf32>
    %435 = arith.mulf %433, %434 : vector<16x128xf32>
    %436 = arith.addf %428, %435 : vector<16x128xf32>
    %c120 = arith.constant 120 : index
    %c0_180 = arith.constant 0 : index
    %437 = vector.load %arg10[%c120, %c0_180] : memref<304x128xf32, #tpu.memory_space<vmem>>, vector<16x128xf32>
    %438 = vector.broadcast %51 : vector<1x128xf32> to vector<16x128xf32>
    %439 = arith.mulf %437, %438 : vector<16x128xf32>
    %440 = arith.addf %436, %439 : vector<16x128xf32>
    %c121 = arith.constant 121 : index
    %c0_181 = arith.constant 0 : index
    %441 = vector.load %arg10[%c121, %c0_181] : memref<304x128xf32, #tpu.memory_space<vmem>>, vector<16x128xf32>
    %cst_182 = arith.constant 0.000000e+00 : f32
    %442 = vector.shape_cast %59 : vector<16x1xi1> to vector<16x1xi1>
    %443 = vector.broadcast %442 : vector<16x1xi1> to vector<16x128xi1>
    %444 = vector.broadcast %cst_182 : f32 to vector<16x128xf32>
    %445 = arith.select %443, %441, %444 : vector<16x128xi1>, vector<16x128xf32>
    %446 = vector.broadcast %53 : vector<1x128xf32> to vector<16x128xf32>
    %447 = arith.mulf %445, %446 : vector<16x128xf32>
    %448 = arith.addf %440, %447 : vector<16x128xf32>
    %449 = vector.broadcast %54 : vector<1x128xf32> to vector<16x128xf32>
    %450 = arith.addf %448, %449 : vector<16x128xf32>
    %cst_183 = arith.constant 0.000000e+00 : f32
    %cst_184 = arith.constant 6.000000e+00 : f32
    %451 = vector.broadcast %cst_183 : f32 to vector<16x128xf32>
    %452 = arith.maximumf %451, %450 : vector<16x128xf32>
    %453 = vector.broadcast %cst_184 : f32 to vector<16x128xf32>
    %454 = arith.minimumf %453, %452 : vector<16x128xf32>
    %c80 = arith.constant 80 : index
    %c0_185 = arith.constant 0 : index
    %455 = vector.load %arg11[%c80, %c0_185] : memref<256x128xf32, #tpu.memory_space<vmem>>, vector<16x128xf32>
    tpu.vector_store %arg11[%c80, %c0_185], %454 {strides = array<i32>} : memref<256x128xf32, #tpu.memory_space<vmem>>, vector<16x128xf32>,
    %c103_186 = arith.constant 103 : index
    %c0_187 = arith.constant 0 : index
    %456 = vector.load %arg10[%c103_186, %c0_187] : memref<304x128xf32, #tpu.memory_space<vmem>>, vector<16x128xf32>
    %cst_188 = arith.constant 0.000000e+00 : f32
    %457 = vector.shape_cast %57 : vector<16x1xi1> to vector<16x1xi1>
    %458 = vector.broadcast %457 : vector<16x1xi1> to vector<16x128xi1>
    %459 = vector.broadcast %cst_188 : f32 to vector<16x128xf32>
    %460 = arith.select %458, %456, %459 : vector<16x128xi1>, vector<16x128xf32>
    %461 = vector.broadcast %37 : vector<1x128xf32> to vector<16x128xf32>
    %462 = arith.mulf %460, %461 : vector<16x128xf32>
    %c104_189 = arith.constant 104 : index
    %c0_190 = arith.constant 0 : index
    %463 = vector.load %arg10[%c104_189, %c0_190] : memref<304x128xf32, #tpu.memory_space<vmem>>, vector<16x128xf32>
    %464 = vector.broadcast %39 : vector<1x128xf32> to vector<16x128xf32>
    %465 = arith.mulf %463, %464 : vector<16x128xf32>
    %466 = arith.addf %462, %465 : vector<16x128xf32>
    %c105_191 = arith.constant 105 : index
    %c0_192 = arith.constant 0 : index
    %467 = vector.load %arg10[%c105_191, %c0_192] : memref<304x128xf32, #tpu.memory_space<vmem>>, vector<16x128xf32>
    %cst_193 = arith.constant 0.000000e+00 : f32
    %468 = vector.shape_cast %59 : vector<16x1xi1> to vector<16x1xi1>
    %469 = vector.broadcast %468 : vector<16x1xi1> to vector<16x128xi1>
    %470 = vector.broadcast %cst_193 : f32 to vector<16x128xf32>
    %471 = arith.select %469, %467, %470 : vector<16x128xi1>, vector<16x128xf32>
    %472 = vector.broadcast %41 : vector<1x128xf32> to vector<16x128xf32>
    %473 = arith.mulf %471, %472 : vector<16x128xf32>
    %474 = arith.addf %466, %473 : vector<16x128xf32>
    %c119_194 = arith.constant 119 : index
    %c0_195 = arith.constant 0 : index
    %475 = vector.load %arg10[%c119_194, %c0_195] : memref<304x128xf32, #tpu.memory_space<vmem>>, vector<16x128xf32>
    %cst_196 = arith.constant 0.000000e+00 : f32
    %476 = vector.shape_cast %57 : vector<16x1xi1> to vector<16x1xi1>
    %477 = vector.broadcast %476 : vector<16x1xi1> to vector<16x128xi1>
    %478 = vector.broadcast %cst_196 : f32 to vector<16x128xf32>
    %479 = arith.select %477, %475, %478 : vector<16x128xi1>, vector<16x128xf32>
    %480 = vector.broadcast %43 : vector<1x128xf32> to vector<16x128xf32>
    %481 = arith.mulf %479, %480 : vector<16x128xf32>
    %482 = arith.addf %474, %481 : vector<16x128xf32>
    %c120_197 = arith.constant 120 : index
    %c0_198 = arith.constant 0 : index
    %483 = vector.load %arg10[%c120_197, %c0_198] : memref<304x128xf32, #tpu.memory_space<vmem>>, vector<16x128xf32>
    %484 = vector.broadcast %45 : vector<1x128xf32> to vector<16x128xf32>
    %485 = arith.mulf %483, %484 : vector<16x128xf32>
    %486 = arith.addf %482, %485 : vector<16x128xf32>
    %c121_199 = arith.constant 121 : index
    %c0_200 = arith.constant 0 : index
    %487 = vector.load %arg10[%c121_199, %c0_200] : memref<304x128xf32, #tpu.memory_space<vmem>>, vector<16x128xf32>
    %cst_201 = arith.constant 0.000000e+00 : f32
    %488 = vector.shape_cast %59 : vector<16x1xi1> to vector<16x1xi1>
    %489 = vector.broadcast %488 : vector<16x1xi1> to vector<16x128xi1>
    %490 = vector.broadcast %cst_201 : f32 to vector<16x128xf32>
    %491 = arith.select %489, %487, %490 : vector<16x128xi1>, vector<16x128xf32>
    %492 = vector.broadcast %47 : vector<1x128xf32> to vector<16x128xf32>
    %493 = arith.mulf %491, %492 : vector<16x128xf32>
    %494 = arith.addf %486, %493 : vector<16x128xf32>
    %c135 = arith.constant 135 : index
    %c0_202 = arith.constant 0 : index
    %495 = vector.load %arg10[%c135, %c0_202] : memref<304x128xf32, #tpu.memory_space<vmem>>, vector<16x128xf32>
    %cst_203 = arith.constant 0.000000e+00 : f32
    %496 = vector.shape_cast %57 : vector<16x1xi1> to vector<16x1xi1>
    %497 = vector.broadcast %496 : vector<16x1xi1> to vector<16x128xi1>
    %498 = vector.broadcast %cst_203 : f32 to vector<16x128xf32>
    %499 = arith.select %497, %495, %498 : vector<16x128xi1>, vector<16x128xf32>
    %500 = vector.broadcast %49 : vector<1x128xf32> to vector<16x128xf32>
    %501 = arith.mulf %499, %500 : vector<16x128xf32>
    %502 = arith.addf %494, %501 : vector<16x128xf32>
    %c136 = arith.constant 136 : index
    %c0_204 = arith.constant 0 : index
    %503 = vector.load %arg10[%c136, %c0_204] : memref<304x128xf32, #tpu.memory_space<vmem>>, vector<16x128xf32>
    %504 = vector.broadcast %51 : vector<1x128xf32> to vector<16x128xf32>
    %505 = arith.mulf %503, %504 : vector<16x128xf32>
    %506 = arith.addf %502, %505 : vector<16x128xf32>
    %c137 = arith.constant 137 : index
    %c0_205 = arith.constant 0 : index
    %507 = vector.load %arg10[%c137, %c0_205] : memref<304x128xf32, #tpu.memory_space<vmem>>, vector<16x128xf32>
    %cst_206 = arith.constant 0.000000e+00 : f32
    %508 = vector.shape_cast %59 : vector<16x1xi1> to vector<16x1xi1>
    %509 = vector.broadcast %508 : vector<16x1xi1> to vector<16x128xi1>
    %510 = vector.broadcast %cst_206 : f32 to vector<16x128xf32>
    %511 = arith.select %509, %507, %510 : vector<16x128xi1>, vector<16x128xf32>
    %512 = vector.broadcast %53 : vector<1x128xf32> to vector<16x128xf32>
    %513 = arith.mulf %511, %512 : vector<16x128xf32>
    %514 = arith.addf %506, %513 : vector<16x128xf32>
    %515 = vector.broadcast %54 : vector<1x128xf32> to vector<16x128xf32>
    %516 = arith.addf %514, %515 : vector<16x128xf32>
    %cst_207 = arith.constant 0.000000e+00 : f32
    %cst_208 = arith.constant 6.000000e+00 : f32
    %517 = vector.broadcast %cst_207 : f32 to vector<16x128xf32>
    %518 = arith.maximumf %517, %516 : vector<16x128xf32>
    %519 = vector.broadcast %cst_208 : f32 to vector<16x128xf32>
    %520 = arith.minimumf %519, %518 : vector<16x128xf32>
    %c96 = arith.constant 96 : index
    %c0_209 = arith.constant 0 : index
    %521 = vector.load %arg11[%c96, %c0_209] : memref<256x128xf32, #tpu.memory_space<vmem>>, vector<16x128xf32>
    tpu.vector_store %arg11[%c96, %c0_209], %520 {strides = array<i32>} : memref<256x128xf32, #tpu.memory_space<vmem>>, vector<16x128xf32>,
    %c119_210 = arith.constant 119 : index
    %c0_211 = arith.constant 0 : index
    %522 = vector.load %arg10[%c119_210, %c0_211] : memref<304x128xf32, #tpu.memory_space<vmem>>, vector<16x128xf32>
    %cst_212 = arith.constant 0.000000e+00 : f32
    %523 = vector.shape_cast %57 : vector<16x1xi1> to vector<16x1xi1>
    %524 = vector.broadcast %523 : vector<16x1xi1> to vector<16x128xi1>
    %525 = vector.broadcast %cst_212 : f32 to vector<16x128xf32>
    %526 = arith.select %524, %522, %525 : vector<16x128xi1>, vector<16x128xf32>
    %527 = vector.broadcast %37 : vector<1x128xf32> to vector<16x128xf32>
    %528 = arith.mulf %526, %527 : vector<16x128xf32>
    %c120_213 = arith.constant 120 : index
    %c0_214 = arith.constant 0 : index
    %529 = vector.load %arg10[%c120_213, %c0_214] : memref<304x128xf32, #tpu.memory_space<vmem>>, vector<16x128xf32>
    %530 = vector.broadcast %39 : vector<1x128xf32> to vector<16x128xf32>
    %531 = arith.mulf %529, %530 : vector<16x128xf32>
    %532 = arith.addf %528, %531 : vector<16x128xf32>
    %c121_215 = arith.constant 121 : index
    %c0_216 = arith.constant 0 : index
    %533 = vector.load %arg10[%c121_215, %c0_216] : memref<304x128xf32, #tpu.memory_space<vmem>>, vector<16x128xf32>
    %cst_217 = arith.constant 0.000000e+00 : f32
    %534 = vector.shape_cast %59 : vector<16x1xi1> to vector<16x1xi1>
    %535 = vector.broadcast %534 : vector<16x1xi1> to vector<16x128xi1>
    %536 = vector.broadcast %cst_217 : f32 to vector<16x128xf32>
    %537 = arith.select %535, %533, %536 : vector<16x128xi1>, vector<16x128xf32>
    %538 = vector.broadcast %41 : vector<1x128xf32> to vector<16x128xf32>
    %539 = arith.mulf %537, %538 : vector<16x128xf32>
    %540 = arith.addf %532, %539 : vector<16x128xf32>
    %c135_218 = arith.constant 135 : index
    %c0_219 = arith.constant 0 : index
    %541 = vector.load %arg10[%c135_218, %c0_219] : memref<304x128xf32, #tpu.memory_space<vmem>>, vector<16x128xf32>
    %cst_220 = arith.constant 0.000000e+00 : f32
    %542 = vector.shape_cast %57 : vector<16x1xi1> to vector<16x1xi1>
    %543 = vector.broadcast %542 : vector<16x1xi1> to vector<16x128xi1>
    %544 = vector.broadcast %cst_220 : f32 to vector<16x128xf32>
    %545 = arith.select %543, %541, %544 : vector<16x128xi1>, vector<16x128xf32>
    %546 = vector.broadcast %43 : vector<1x128xf32> to vector<16x128xf32>
    %547 = arith.mulf %545, %546 : vector<16x128xf32>
    %548 = arith.addf %540, %547 : vector<16x128xf32>
    %c136_221 = arith.constant 136 : index
    %c0_222 = arith.constant 0 : index
    %549 = vector.load %arg10[%c136_221, %c0_222] : memref<304x128xf32, #tpu.memory_space<vmem>>, vector<16x128xf32>
    %550 = vector.broadcast %45 : vector<1x128xf32> to vector<16x128xf32>
    %551 = arith.mulf %549, %550 : vector<16x128xf32>
    %552 = arith.addf %548, %551 : vector<16x128xf32>
    %c137_223 = arith.constant 137 : index
    %c0_224 = arith.constant 0 : index
    %553 = vector.load %arg10[%c137_223, %c0_224] : memref<304x128xf32, #tpu.memory_space<vmem>>, vector<16x128xf32>
    %cst_225 = arith.constant 0.000000e+00 : f32
    %554 = vector.shape_cast %59 : vector<16x1xi1> to vector<16x1xi1>
    %555 = vector.broadcast %554 : vector<16x1xi1> to vector<16x128xi1>
    %556 = vector.broadcast %cst_225 : f32 to vector<16x128xf32>
    %557 = arith.select %555, %553, %556 : vector<16x128xi1>, vector<16x128xf32>
    %558 = vector.broadcast %47 : vector<1x128xf32> to vector<16x128xf32>
    %559 = arith.mulf %557, %558 : vector<16x128xf32>
    %560 = arith.addf %552, %559 : vector<16x128xf32>
    %c151 = arith.constant 151 : index
    %c0_226 = arith.constant 0 : index
    %561 = vector.load %arg10[%c151, %c0_226] : memref<304x128xf32, #tpu.memory_space<vmem>>, vector<16x128xf32>
    %cst_227 = arith.constant 0.000000e+00 : f32
    %562 = vector.shape_cast %57 : vector<16x1xi1> to vector<16x1xi1>
    %563 = vector.broadcast %562 : vector<16x1xi1> to vector<16x128xi1>
    %564 = vector.broadcast %cst_227 : f32 to vector<16x128xf32>
    %565 = arith.select %563, %561, %564 : vector<16x128xi1>, vector<16x128xf32>
    %566 = vector.broadcast %49 : vector<1x128xf32> to vector<16x128xf32>
    %567 = arith.mulf %565, %566 : vector<16x128xf32>
    %568 = arith.addf %560, %567 : vector<16x128xf32>
    %c152 = arith.constant 152 : index
    %c0_228 = arith.constant 0 : index
    %569 = vector.load %arg10[%c152, %c0_228] : memref<304x128xf32, #tpu.memory_space<vmem>>, vector<16x128xf32>
    %570 = vector.broadcast %51 : vector<1x128xf32> to vector<16x128xf32>
    %571 = arith.mulf %569, %570 : vector<16x128xf32>
    %572 = arith.addf %568, %571 : vector<16x128xf32>
    %c153 = arith.constant 153 : index
    %c0_229 = arith.constant 0 : index
    %573 = vector.load %arg10[%c153, %c0_229] : memref<304x128xf32, #tpu.memory_space<vmem>>, vector<16x128xf32>
    %cst_230 = arith.constant 0.000000e+00 : f32
    %574 = vector.shape_cast %59 : vector<16x1xi1> to vector<16x1xi1>
    %575 = vector.broadcast %574 : vector<16x1xi1> to vector<16x128xi1>
    %576 = vector.broadcast %cst_230 : f32 to vector<16x128xf32>
    %577 = arith.select %575, %573, %576 : vector<16x128xi1>, vector<16x128xf32>
    %578 = vector.broadcast %53 : vector<1x128xf32> to vector<16x128xf32>
    %579 = arith.mulf %577, %578 : vector<16x128xf32>
    %580 = arith.addf %572, %579 : vector<16x128xf32>
    %581 = vector.broadcast %54 : vector<1x128xf32> to vector<16x128xf32>
    %582 = arith.addf %580, %581 : vector<16x128xf32>
    %cst_231 = arith.constant 0.000000e+00 : f32
    %cst_232 = arith.constant 6.000000e+00 : f32
    %583 = vector.broadcast %cst_231 : f32 to vector<16x128xf32>
    %584 = arith.maximumf %583, %582 : vector<16x128xf32>
    %585 = vector.broadcast %cst_232 : f32 to vector<16x128xf32>
    %586 = arith.minimumf %585, %584 : vector<16x128xf32>
    %c112 = arith.constant 112 : index
    %c0_233 = arith.constant 0 : index
    %587 = vector.load %arg11[%c112, %c0_233] : memref<256x128xf32, #tpu.memory_space<vmem>>, vector<16x128xf32>
    tpu.vector_store %arg11[%c112, %c0_233], %586 {strides = array<i32>} : memref<256x128xf32, #tpu.memory_space<vmem>>, vector<16x128xf32>,
    %c135_234 = arith.constant 135 : index
    %c0_235 = arith.constant 0 : index
    %588 = vector.load %arg10[%c135_234, %c0_235] : memref<304x128xf32, #tpu.memory_space<vmem>>, vector<16x128xf32>
    %cst_236 = arith.constant 0.000000e+00 : f32
    %589 = vector.shape_cast %57 : vector<16x1xi1> to vector<16x1xi1>
    %590 = vector.broadcast %589 : vector<16x1xi1> to vector<16x128xi1>
    %591 = vector.broadcast %cst_236 : f32 to vector<16x128xf32>
    %592 = arith.select %590, %588, %591 : vector<16x128xi1>, vector<16x128xf32>
    %593 = vector.broadcast %37 : vector<1x128xf32> to vector<16x128xf32>
    %594 = arith.mulf %592, %593 : vector<16x128xf32>
    %c136_237 = arith.constant 136 : index
    %c0_238 = arith.constant 0 : index
    %595 = vector.load %arg10[%c136_237, %c0_238] : memref<304x128xf32, #tpu.memory_space<vmem>>, vector<16x128xf32>
    %596 = vector.broadcast %39 : vector<1x128xf32> to vector<16x128xf32>
    %597 = arith.mulf %595, %596 : vector<16x128xf32>
    %598 = arith.addf %594, %597 : vector<16x128xf32>
    %c137_239 = arith.constant 137 : index
    %c0_240 = arith.constant 0 : index
    %599 = vector.load %arg10[%c137_239, %c0_240] : memref<304x128xf32, #tpu.memory_space<vmem>>, vector<16x128xf32>
    %cst_241 = arith.constant 0.000000e+00 : f32
    %600 = vector.shape_cast %59 : vector<16x1xi1> to vector<16x1xi1>
    %601 = vector.broadcast %600 : vector<16x1xi1> to vector<16x128xi1>
    %602 = vector.broadcast %cst_241 : f32 to vector<16x128xf32>
    %603 = arith.select %601, %599, %602 : vector<16x128xi1>, vector<16x128xf32>
    %604 = vector.broadcast %41 : vector<1x128xf32> to vector<16x128xf32>
    %605 = arith.mulf %603, %604 : vector<16x128xf32>
    %606 = arith.addf %598, %605 : vector<16x128xf32>
    %c151_242 = arith.constant 151 : index
    %c0_243 = arith.constant 0 : index
    %607 = vector.load %arg10[%c151_242, %c0_243] : memref<304x128xf32, #tpu.memory_space<vmem>>, vector<16x128xf32>
    %cst_244 = arith.constant 0.000000e+00 : f32
    %608 = vector.shape_cast %57 : vector<16x1xi1> to vector<16x1xi1>
    %609 = vector.broadcast %608 : vector<16x1xi1> to vector<16x128xi1>
    %610 = vector.broadcast %cst_244 : f32 to vector<16x128xf32>
    %611 = arith.select %609, %607, %610 : vector<16x128xi1>, vector<16x128xf32>
    %612 = vector.broadcast %43 : vector<1x128xf32> to vector<16x128xf32>
    %613 = arith.mulf %611, %612 : vector<16x128xf32>
    %614 = arith.addf %606, %613 : vector<16x128xf32>
    %c152_245 = arith.constant 152 : index
    %c0_246 = arith.constant 0 : index
    %615 = vector.load %arg10[%c152_245, %c0_246] : memref<304x128xf32, #tpu.memory_space<vmem>>, vector<16x128xf32>
    %616 = vector.broadcast %45 : vector<1x128xf32> to vector<16x128xf32>
    %617 = arith.mulf %615, %616 : vector<16x128xf32>
    %618 = arith.addf %614, %617 : vector<16x128xf32>
    %c153_247 = arith.constant 153 : index
    %c0_248 = arith.constant 0 : index
    %619 = vector.load %arg10[%c153_247, %c0_248] : memref<304x128xf32, #tpu.memory_space<vmem>>, vector<16x128xf32>
    %cst_249 = arith.constant 0.000000e+00 : f32
    %620 = vector.shape_cast %59 : vector<16x1xi1> to vector<16x1xi1>
    %621 = vector.broadcast %620 : vector<16x1xi1> to vector<16x128xi1>
    %622 = vector.broadcast %cst_249 : f32 to vector<16x128xf32>
    %623 = arith.select %621, %619, %622 : vector<16x128xi1>, vector<16x128xf32>
    %624 = vector.broadcast %47 : vector<1x128xf32> to vector<16x128xf32>
    %625 = arith.mulf %623, %624 : vector<16x128xf32>
    %626 = arith.addf %618, %625 : vector<16x128xf32>
    %c167 = arith.constant 167 : index
    %c0_250 = arith.constant 0 : index
    %627 = vector.load %arg10[%c167, %c0_250] : memref<304x128xf32, #tpu.memory_space<vmem>>, vector<16x128xf32>
    %cst_251 = arith.constant 0.000000e+00 : f32
    %628 = vector.shape_cast %57 : vector<16x1xi1> to vector<16x1xi1>
    %629 = vector.broadcast %628 : vector<16x1xi1> to vector<16x128xi1>
    %630 = vector.broadcast %cst_251 : f32 to vector<16x128xf32>
    %631 = arith.select %629, %627, %630 : vector<16x128xi1>, vector<16x128xf32>
    %632 = vector.broadcast %49 : vector<1x128xf32> to vector<16x128xf32>
    %633 = arith.mulf %631, %632 : vector<16x128xf32>
    %634 = arith.addf %626, %633 : vector<16x128xf32>
    %c168 = arith.constant 168 : index
    %c0_252 = arith.constant 0 : index
    %635 = vector.load %arg10[%c168, %c0_252] : memref<304x128xf32, #tpu.memory_space<vmem>>, vector<16x128xf32>
    %636 = vector.broadcast %51 : vector<1x128xf32> to vector<16x128xf32>
    %637 = arith.mulf %635, %636 : vector<16x128xf32>
    %638 = arith.addf %634, %637 : vector<16x128xf32>
    %c169 = arith.constant 169 : index
    %c0_253 = arith.constant 0 : index
    %639 = vector.load %arg10[%c169, %c0_253] : memref<304x128xf32, #tpu.memory_space<vmem>>, vector<16x128xf32>
    %cst_254 = arith.constant 0.000000e+00 : f32
    %640 = vector.shape_cast %59 : vector<16x1xi1> to vector<16x1xi1>
    %641 = vector.broadcast %640 : vector<16x1xi1> to vector<16x128xi1>
    %642 = vector.broadcast %cst_254 : f32 to vector<16x128xf32>
    %643 = arith.select %641, %639, %642 : vector<16x128xi1>, vector<16x128xf32>
    %644 = vector.broadcast %53 : vector<1x128xf32> to vector<16x128xf32>
    %645 = arith.mulf %643, %644 : vector<16x128xf32>
    %646 = arith.addf %638, %645 : vector<16x128xf32>
    %647 = vector.broadcast %54 : vector<1x128xf32> to vector<16x128xf32>
    %648 = arith.addf %646, %647 : vector<16x128xf32>
    %cst_255 = arith.constant 0.000000e+00 : f32
    %cst_256 = arith.constant 6.000000e+00 : f32
    %649 = vector.broadcast %cst_255 : f32 to vector<16x128xf32>
    %650 = arith.maximumf %649, %648 : vector<16x128xf32>
    %651 = vector.broadcast %cst_256 : f32 to vector<16x128xf32>
    %652 = arith.minimumf %651, %650 : vector<16x128xf32>
    %c128 = arith.constant 128 : index
    %c0_257 = arith.constant 0 : index
    %653 = vector.load %arg11[%c128, %c0_257] : memref<256x128xf32, #tpu.memory_space<vmem>>, vector<16x128xf32>
    tpu.vector_store %arg11[%c128, %c0_257], %652 {strides = array<i32>} : memref<256x128xf32, #tpu.memory_space<vmem>>, vector<16x128xf32>,
    %c151_258 = arith.constant 151 : index
    %c0_259 = arith.constant 0 : index
    %654 = vector.load %arg10[%c151_258, %c0_259] : memref<304x128xf32, #tpu.memory_space<vmem>>, vector<16x128xf32>
    %cst_260 = arith.constant 0.000000e+00 : f32
    %655 = vector.shape_cast %57 : vector<16x1xi1> to vector<16x1xi1>
    %656 = vector.broadcast %655 : vector<16x1xi1> to vector<16x128xi1>
    %657 = vector.broadcast %cst_260 : f32 to vector<16x128xf32>
    %658 = arith.select %656, %654, %657 : vector<16x128xi1>, vector<16x128xf32>
    %659 = vector.broadcast %37 : vector<1x128xf32> to vector<16x128xf32>
    %660 = arith.mulf %658, %659 : vector<16x128xf32>
    %c152_261 = arith.constant 152 : index
    %c0_262 = arith.constant 0 : index
    %661 = vector.load %arg10[%c152_261, %c0_262] : memref<304x128xf32, #tpu.memory_space<vmem>>, vector<16x128xf32>
    %662 = vector.broadcast %39 : vector<1x128xf32> to vector<16x128xf32>
    %663 = arith.mulf %661, %662 : vector<16x128xf32>
    %664 = arith.addf %660, %663 : vector<16x128xf32>
    %c153_263 = arith.constant 153 : index
    %c0_264 = arith.constant 0 : index
    %665 = vector.load %arg10[%c153_263, %c0_264] : memref<304x128xf32, #tpu.memory_space<vmem>>, vector<16x128xf32>
    %cst_265 = arith.constant 0.000000e+00 : f32
    %666 = vector.shape_cast %59 : vector<16x1xi1> to vector<16x1xi1>
    %667 = vector.broadcast %666 : vector<16x1xi1> to vector<16x128xi1>
    %668 = vector.broadcast %cst_265 : f32 to vector<16x128xf32>
    %669 = arith.select %667, %665, %668 : vector<16x128xi1>, vector<16x128xf32>
    %670 = vector.broadcast %41 : vector<1x128xf32> to vector<16x128xf32>
    %671 = arith.mulf %669, %670 : vector<16x128xf32>
    %672 = arith.addf %664, %671 : vector<16x128xf32>
    %c167_266 = arith.constant 167 : index
    %c0_267 = arith.constant 0 : index
    %673 = vector.load %arg10[%c167_266, %c0_267] : memref<304x128xf32, #tpu.memory_space<vmem>>, vector<16x128xf32>
    %cst_268 = arith.constant 0.000000e+00 : f32
    %674 = vector.shape_cast %57 : vector<16x1xi1> to vector<16x1xi1>
    %675 = vector.broadcast %674 : vector<16x1xi1> to vector<16x128xi1>
    %676 = vector.broadcast %cst_268 : f32 to vector<16x128xf32>
    %677 = arith.select %675, %673, %676 : vector<16x128xi1>, vector<16x128xf32>
    %678 = vector.broadcast %43 : vector<1x128xf32> to vector<16x128xf32>
    %679 = arith.mulf %677, %678 : vector<16x128xf32>
    %680 = arith.addf %672, %679 : vector<16x128xf32>
    %c168_269 = arith.constant 168 : index
    %c0_270 = arith.constant 0 : index
    %681 = vector.load %arg10[%c168_269, %c0_270] : memref<304x128xf32, #tpu.memory_space<vmem>>, vector<16x128xf32>
    %682 = vector.broadcast %45 : vector<1x128xf32> to vector<16x128xf32>
    %683 = arith.mulf %681, %682 : vector<16x128xf32>
    %684 = arith.addf %680, %683 : vector<16x128xf32>
    %c169_271 = arith.constant 169 : index
    %c0_272 = arith.constant 0 : index
    %685 = vector.load %arg10[%c169_271, %c0_272] : memref<304x128xf32, #tpu.memory_space<vmem>>, vector<16x128xf32>
    %cst_273 = arith.constant 0.000000e+00 : f32
    %686 = vector.shape_cast %59 : vector<16x1xi1> to vector<16x1xi1>
    %687 = vector.broadcast %686 : vector<16x1xi1> to vector<16x128xi1>
    %688 = vector.broadcast %cst_273 : f32 to vector<16x128xf32>
    %689 = arith.select %687, %685, %688 : vector<16x128xi1>, vector<16x128xf32>
    %690 = vector.broadcast %47 : vector<1x128xf32> to vector<16x128xf32>
    %691 = arith.mulf %689, %690 : vector<16x128xf32>
    %692 = arith.addf %684, %691 : vector<16x128xf32>
    %c183 = arith.constant 183 : index
    %c0_274 = arith.constant 0 : index
    %693 = vector.load %arg10[%c183, %c0_274] : memref<304x128xf32, #tpu.memory_space<vmem>>, vector<16x128xf32>
    %cst_275 = arith.constant 0.000000e+00 : f32
    %694 = vector.shape_cast %57 : vector<16x1xi1> to vector<16x1xi1>
    %695 = vector.broadcast %694 : vector<16x1xi1> to vector<16x128xi1>
    %696 = vector.broadcast %cst_275 : f32 to vector<16x128xf32>
    %697 = arith.select %695, %693, %696 : vector<16x128xi1>, vector<16x128xf32>
    %698 = vector.broadcast %49 : vector<1x128xf32> to vector<16x128xf32>
    %699 = arith.mulf %697, %698 : vector<16x128xf32>
    %700 = arith.addf %692, %699 : vector<16x128xf32>
    %c184 = arith.constant 184 : index
    %c0_276 = arith.constant 0 : index
    %701 = vector.load %arg10[%c184, %c0_276] : memref<304x128xf32, #tpu.memory_space<vmem>>, vector<16x128xf32>
    %702 = vector.broadcast %51 : vector<1x128xf32> to vector<16x128xf32>
    %703 = arith.mulf %701, %702 : vector<16x128xf32>
    %704 = arith.addf %700, %703 : vector<16x128xf32>
    %c185 = arith.constant 185 : index
    %c0_277 = arith.constant 0 : index
    %705 = vector.load %arg10[%c185, %c0_277] : memref<304x128xf32, #tpu.memory_space<vmem>>, vector<16x128xf32>
    %cst_278 = arith.constant 0.000000e+00 : f32
    %706 = vector.shape_cast %59 : vector<16x1xi1> to vector<16x1xi1>
    %707 = vector.broadcast %706 : vector<16x1xi1> to vector<16x128xi1>
    %708 = vector.broadcast %cst_278 : f32 to vector<16x128xf32>
    %709 = arith.select %707, %705, %708 : vector<16x128xi1>, vector<16x128xf32>
    %710 = vector.broadcast %53 : vector<1x128xf32> to vector<16x128xf32>
    %711 = arith.mulf %709, %710 : vector<16x128xf32>
    %712 = arith.addf %704, %711 : vector<16x128xf32>
    %713 = vector.broadcast %54 : vector<1x128xf32> to vector<16x128xf32>
    %714 = arith.addf %712, %713 : vector<16x128xf32>
    %cst_279 = arith.constant 0.000000e+00 : f32
    %cst_280 = arith.constant 6.000000e+00 : f32
    %715 = vector.broadcast %cst_279 : f32 to vector<16x128xf32>
    %716 = arith.maximumf %715, %714 : vector<16x128xf32>
    %717 = vector.broadcast %cst_280 : f32 to vector<16x128xf32>
    %718 = arith.minimumf %717, %716 : vector<16x128xf32>
    %c144 = arith.constant 144 : index
    %c0_281 = arith.constant 0 : index
    %719 = vector.load %arg11[%c144, %c0_281] : memref<256x128xf32, #tpu.memory_space<vmem>>, vector<16x128xf32>
    tpu.vector_store %arg11[%c144, %c0_281], %718 {strides = array<i32>} : memref<256x128xf32, #tpu.memory_space<vmem>>, vector<16x128xf32>,
    %c167_282 = arith.constant 167 : index
    %c0_283 = arith.constant 0 : index
    %720 = vector.load %arg10[%c167_282, %c0_283] : memref<304x128xf32, #tpu.memory_space<vmem>>, vector<16x128xf32>
    %cst_284 = arith.constant 0.000000e+00 : f32
    %721 = vector.shape_cast %57 : vector<16x1xi1> to vector<16x1xi1>
    %722 = vector.broadcast %721 : vector<16x1xi1> to vector<16x128xi1>
    %723 = vector.broadcast %cst_284 : f32 to vector<16x128xf32>
    %724 = arith.select %722, %720, %723 : vector<16x128xi1>, vector<16x128xf32>
    %725 = vector.broadcast %37 : vector<1x128xf32> to vector<16x128xf32>
    %726 = arith.mulf %724, %725 : vector<16x128xf32>
    %c168_285 = arith.constant 168 : index
    %c0_286 = arith.constant 0 : index
    %727 = vector.load %arg10[%c168_285, %c0_286] : memref<304x128xf32, #tpu.memory_space<vmem>>, vector<16x128xf32>
    %728 = vector.broadcast %39 : vector<1x128xf32> to vector<16x128xf32>
    %729 = arith.mulf %727, %728 : vector<16x128xf32>
    %730 = arith.addf %726, %729 : vector<16x128xf32>
    %c169_287 = arith.constant 169 : index
    %c0_288 = arith.constant 0 : index
    %731 = vector.load %arg10[%c169_287, %c0_288] : memref<304x128xf32, #tpu.memory_space<vmem>>, vector<16x128xf32>
    %cst_289 = arith.constant 0.000000e+00 : f32
    %732 = vector.shape_cast %59 : vector<16x1xi1> to vector<16x1xi1>
    %733 = vector.broadcast %732 : vector<16x1xi1> to vector<16x128xi1>
    %734 = vector.broadcast %cst_289 : f32 to vector<16x128xf32>
    %735 = arith.select %733, %731, %734 : vector<16x128xi1>, vector<16x128xf32>
    %736 = vector.broadcast %41 : vector<1x128xf32> to vector<16x128xf32>
    %737 = arith.mulf %735, %736 : vector<16x128xf32>
    %738 = arith.addf %730, %737 : vector<16x128xf32>
    %c183_290 = arith.constant 183 : index
    %c0_291 = arith.constant 0 : index
    %739 = vector.load %arg10[%c183_290, %c0_291] : memref<304x128xf32, #tpu.memory_space<vmem>>, vector<16x128xf32>
    %cst_292 = arith.constant 0.000000e+00 : f32
    %740 = vector.shape_cast %57 : vector<16x1xi1> to vector<16x1xi1>
    %741 = vector.broadcast %740 : vector<16x1xi1> to vector<16x128xi1>
    %742 = vector.broadcast %cst_292 : f32 to vector<16x128xf32>
    %743 = arith.select %741, %739, %742 : vector<16x128xi1>, vector<16x128xf32>
    %744 = vector.broadcast %43 : vector<1x128xf32> to vector<16x128xf32>
    %745 = arith.mulf %743, %744 : vector<16x128xf32>
    %746 = arith.addf %738, %745 : vector<16x128xf32>
    %c184_293 = arith.constant 184 : index
    %c0_294 = arith.constant 0 : index
    %747 = vector.load %arg10[%c184_293, %c0_294] : memref<304x128xf32, #tpu.memory_space<vmem>>, vector<16x128xf32>
    %748 = vector.broadcast %45 : vector<1x128xf32> to vector<16x128xf32>
    %749 = arith.mulf %747, %748 : vector<16x128xf32>
    %750 = arith.addf %746, %749 : vector<16x128xf32>
    %c185_295 = arith.constant 185 : index
    %c0_296 = arith.constant 0 : index
    %751 = vector.load %arg10[%c185_295, %c0_296] : memref<304x128xf32, #tpu.memory_space<vmem>>, vector<16x128xf32>
    %cst_297 = arith.constant 0.000000e+00 : f32
    %752 = vector.shape_cast %59 : vector<16x1xi1> to vector<16x1xi1>
    %753 = vector.broadcast %752 : vector<16x1xi1> to vector<16x128xi1>
    %754 = vector.broadcast %cst_297 : f32 to vector<16x128xf32>
    %755 = arith.select %753, %751, %754 : vector<16x128xi1>, vector<16x128xf32>
    %756 = vector.broadcast %47 : vector<1x128xf32> to vector<16x128xf32>
    %757 = arith.mulf %755, %756 : vector<16x128xf32>
    %758 = arith.addf %750, %757 : vector<16x128xf32>
    %c199 = arith.constant 199 : index
    %c0_298 = arith.constant 0 : index
    %759 = vector.load %arg10[%c199, %c0_298] : memref<304x128xf32, #tpu.memory_space<vmem>>, vector<16x128xf32>
    %cst_299 = arith.constant 0.000000e+00 : f32
    %760 = vector.shape_cast %57 : vector<16x1xi1> to vector<16x1xi1>
    %761 = vector.broadcast %760 : vector<16x1xi1> to vector<16x128xi1>
    %762 = vector.broadcast %cst_299 : f32 to vector<16x128xf32>
    %763 = arith.select %761, %759, %762 : vector<16x128xi1>, vector<16x128xf32>
    %764 = vector.broadcast %49 : vector<1x128xf32> to vector<16x128xf32>
    %765 = arith.mulf %763, %764 : vector<16x128xf32>
    %766 = arith.addf %758, %765 : vector<16x128xf32>
    %c200 = arith.constant 200 : index
    %c0_300 = arith.constant 0 : index
    %767 = vector.load %arg10[%c200, %c0_300] : memref<304x128xf32, #tpu.memory_space<vmem>>, vector<16x128xf32>
    %768 = vector.broadcast %51 : vector<1x128xf32> to vector<16x128xf32>
    %769 = arith.mulf %767, %768 : vector<16x128xf32>
    %770 = arith.addf %766, %769 : vector<16x128xf32>
    %c201 = arith.constant 201 : index
    %c0_301 = arith.constant 0 : index
    %771 = vector.load %arg10[%c201, %c0_301] : memref<304x128xf32, #tpu.memory_space<vmem>>, vector<16x128xf32>
    %cst_302 = arith.constant 0.000000e+00 : f32
    %772 = vector.shape_cast %59 : vector<16x1xi1> to vector<16x1xi1>
    %773 = vector.broadcast %772 : vector<16x1xi1> to vector<16x128xi1>
    %774 = vector.broadcast %cst_302 : f32 to vector<16x128xf32>
    %775 = arith.select %773, %771, %774 : vector<16x128xi1>, vector<16x128xf32>
    %776 = vector.broadcast %53 : vector<1x128xf32> to vector<16x128xf32>
    %777 = arith.mulf %775, %776 : vector<16x128xf32>
    %778 = arith.addf %770, %777 : vector<16x128xf32>
    %779 = vector.broadcast %54 : vector<1x128xf32> to vector<16x128xf32>
    %780 = arith.addf %778, %779 : vector<16x128xf32>
    %cst_303 = arith.constant 0.000000e+00 : f32
    %cst_304 = arith.constant 6.000000e+00 : f32
    %781 = vector.broadcast %cst_303 : f32 to vector<16x128xf32>
    %782 = arith.maximumf %781, %780 : vector<16x128xf32>
    %783 = vector.broadcast %cst_304 : f32 to vector<16x128xf32>
    %784 = arith.minimumf %783, %782 : vector<16x128xf32>
    %c160 = arith.constant 160 : index
    %c0_305 = arith.constant 0 : index
    %785 = vector.load %arg11[%c160, %c0_305] : memref<256x128xf32, #tpu.memory_space<vmem>>, vector<16x128xf32>
    tpu.vector_store %arg11[%c160, %c0_305], %784 {strides = array<i32>} : memref<256x128xf32, #tpu.memory_space<vmem>>, vector<16x128xf32>,
    %c183_306 = arith.constant 183 : index
    %c0_307 = arith.constant 0 : index
    %786 = vector.load %arg10[%c183_306, %c0_307] : memref<304x128xf32, #tpu.memory_space<vmem>>, vector<16x128xf32>
    %cst_308 = arith.constant 0.000000e+00 : f32
    %787 = vector.shape_cast %57 : vector<16x1xi1> to vector<16x1xi1>
    %788 = vector.broadcast %787 : vector<16x1xi1> to vector<16x128xi1>
    %789 = vector.broadcast %cst_308 : f32 to vector<16x128xf32>
    %790 = arith.select %788, %786, %789 : vector<16x128xi1>, vector<16x128xf32>
    %791 = vector.broadcast %37 : vector<1x128xf32> to vector<16x128xf32>
    %792 = arith.mulf %790, %791 : vector<16x128xf32>
    %c184_309 = arith.constant 184 : index
    %c0_310 = arith.constant 0 : index
    %793 = vector.load %arg10[%c184_309, %c0_310] : memref<304x128xf32, #tpu.memory_space<vmem>>, vector<16x128xf32>
    %794 = vector.broadcast %39 : vector<1x128xf32> to vector<16x128xf32>
    %795 = arith.mulf %793, %794 : vector<16x128xf32>
    %796 = arith.addf %792, %795 : vector<16x128xf32>
    %c185_311 = arith.constant 185 : index
    %c0_312 = arith.constant 0 : index
    %797 = vector.load %arg10[%c185_311, %c0_312] : memref<304x128xf32, #tpu.memory_space<vmem>>, vector<16x128xf32>
    %cst_313 = arith.constant 0.000000e+00 : f32
    %798 = vector.shape_cast %59 : vector<16x1xi1> to vector<16x1xi1>
    %799 = vector.broadcast %798 : vector<16x1xi1> to vector<16x128xi1>
    %800 = vector.broadcast %cst_313 : f32 to vector<16x128xf32>
    %801 = arith.select %799, %797, %800 : vector<16x128xi1>, vector<16x128xf32>
    %802 = vector.broadcast %41 : vector<1x128xf32> to vector<16x128xf32>
    %803 = arith.mulf %801, %802 : vector<16x128xf32>
    %804 = arith.addf %796, %803 : vector<16x128xf32>
    %c199_314 = arith.constant 199 : index
    %c0_315 = arith.constant 0 : index
    %805 = vector.load %arg10[%c199_314, %c0_315] : memref<304x128xf32, #tpu.memory_space<vmem>>, vector<16x128xf32>
    %cst_316 = arith.constant 0.000000e+00 : f32
    %806 = vector.shape_cast %57 : vector<16x1xi1> to vector<16x1xi1>
    %807 = vector.broadcast %806 : vector<16x1xi1> to vector<16x128xi1>
    %808 = vector.broadcast %cst_316 : f32 to vector<16x128xf32>
    %809 = arith.select %807, %805, %808 : vector<16x128xi1>, vector<16x128xf32>
    %810 = vector.broadcast %43 : vector<1x128xf32> to vector<16x128xf32>
    %811 = arith.mulf %809, %810 : vector<16x128xf32>
    %812 = arith.addf %804, %811 : vector<16x128xf32>
    %c200_317 = arith.constant 200 : index
    %c0_318 = arith.constant 0 : index
    %813 = vector.load %arg10[%c200_317, %c0_318] : memref<304x128xf32, #tpu.memory_space<vmem>>, vector<16x128xf32>
    %814 = vector.broadcast %45 : vector<1x128xf32> to vector<16x128xf32>
    %815 = arith.mulf %813, %814 : vector<16x128xf32>
    %816 = arith.addf %812, %815 : vector<16x128xf32>
    %c201_319 = arith.constant 201 : index
    %c0_320 = arith.constant 0 : index
    %817 = vector.load %arg10[%c201_319, %c0_320] : memref<304x128xf32, #tpu.memory_space<vmem>>, vector<16x128xf32>
    %cst_321 = arith.constant 0.000000e+00 : f32
    %818 = vector.shape_cast %59 : vector<16x1xi1> to vector<16x1xi1>
    %819 = vector.broadcast %818 : vector<16x1xi1> to vector<16x128xi1>
    %820 = vector.broadcast %cst_321 : f32 to vector<16x128xf32>
    %821 = arith.select %819, %817, %820 : vector<16x128xi1>, vector<16x128xf32>
    %822 = vector.broadcast %47 : vector<1x128xf32> to vector<16x128xf32>
    %823 = arith.mulf %821, %822 : vector<16x128xf32>
    %824 = arith.addf %816, %823 : vector<16x128xf32>
    %c215 = arith.constant 215 : index
    %c0_322 = arith.constant 0 : index
    %825 = vector.load %arg10[%c215, %c0_322] : memref<304x128xf32, #tpu.memory_space<vmem>>, vector<16x128xf32>
    %cst_323 = arith.constant 0.000000e+00 : f32
    %826 = vector.shape_cast %57 : vector<16x1xi1> to vector<16x1xi1>
    %827 = vector.broadcast %826 : vector<16x1xi1> to vector<16x128xi1>
    %828 = vector.broadcast %cst_323 : f32 to vector<16x128xf32>
    %829 = arith.select %827, %825, %828 : vector<16x128xi1>, vector<16x128xf32>
    %830 = vector.broadcast %49 : vector<1x128xf32> to vector<16x128xf32>
    %831 = arith.mulf %829, %830 : vector<16x128xf32>
    %832 = arith.addf %824, %831 : vector<16x128xf32>
    %c216 = arith.constant 216 : index
    %c0_324 = arith.constant 0 : index
    %833 = vector.load %arg10[%c216, %c0_324] : memref<304x128xf32, #tpu.memory_space<vmem>>, vector<16x128xf32>
    %834 = vector.broadcast %51 : vector<1x128xf32> to vector<16x128xf32>
    %835 = arith.mulf %833, %834 : vector<16x128xf32>
    %836 = arith.addf %832, %835 : vector<16x128xf32>
    %c217 = arith.constant 217 : index
    %c0_325 = arith.constant 0 : index
    %837 = vector.load %arg10[%c217, %c0_325] : memref<304x128xf32, #tpu.memory_space<vmem>>, vector<16x128xf32>
    %cst_326 = arith.constant 0.000000e+00 : f32
    %838 = vector.shape_cast %59 : vector<16x1xi1> to vector<16x1xi1>
    %839 = vector.broadcast %838 : vector<16x1xi1> to vector<16x128xi1>
    %840 = vector.broadcast %cst_326 : f32 to vector<16x128xf32>
    %841 = arith.select %839, %837, %840 : vector<16x128xi1>, vector<16x128xf32>
    %842 = vector.broadcast %53 : vector<1x128xf32> to vector<16x128xf32>
    %843 = arith.mulf %841, %842 : vector<16x128xf32>
    %844 = arith.addf %836, %843 : vector<16x128xf32>
    %845 = vector.broadcast %54 : vector<1x128xf32> to vector<16x128xf32>
    %846 = arith.addf %844, %845 : vector<16x128xf32>
    %cst_327 = arith.constant 0.000000e+00 : f32
    %cst_328 = arith.constant 6.000000e+00 : f32
    %847 = vector.broadcast %cst_327 : f32 to vector<16x128xf32>
    %848 = arith.maximumf %847, %846 : vector<16x128xf32>
    %849 = vector.broadcast %cst_328 : f32 to vector<16x128xf32>
    %850 = arith.minimumf %849, %848 : vector<16x128xf32>
    %c176 = arith.constant 176 : index
    %c0_329 = arith.constant 0 : index
    %851 = vector.load %arg11[%c176, %c0_329] : memref<256x128xf32, #tpu.memory_space<vmem>>, vector<16x128xf32>
    tpu.vector_store %arg11[%c176, %c0_329], %850 {strides = array<i32>} : memref<256x128xf32, #tpu.memory_space<vmem>>, vector<16x128xf32>,
    %c199_330 = arith.constant 199 : index
    %c0_331 = arith.constant 0 : index
    %852 = vector.load %arg10[%c199_330, %c0_331] : memref<304x128xf32, #tpu.memory_space<vmem>>, vector<16x128xf32>
    %cst_332 = arith.constant 0.000000e+00 : f32
    %853 = vector.shape_cast %57 : vector<16x1xi1> to vector<16x1xi1>
    %854 = vector.broadcast %853 : vector<16x1xi1> to vector<16x128xi1>
    %855 = vector.broadcast %cst_332 : f32 to vector<16x128xf32>
    %856 = arith.select %854, %852, %855 : vector<16x128xi1>, vector<16x128xf32>
    %857 = vector.broadcast %37 : vector<1x128xf32> to vector<16x128xf32>
    %858 = arith.mulf %856, %857 : vector<16x128xf32>
    %c200_333 = arith.constant 200 : index
    %c0_334 = arith.constant 0 : index
    %859 = vector.load %arg10[%c200_333, %c0_334] : memref<304x128xf32, #tpu.memory_space<vmem>>, vector<16x128xf32>
    %860 = vector.broadcast %39 : vector<1x128xf32> to vector<16x128xf32>
    %861 = arith.mulf %859, %860 : vector<16x128xf32>
    %862 = arith.addf %858, %861 : vector<16x128xf32>
    %c201_335 = arith.constant 201 : index
    %c0_336 = arith.constant 0 : index
    %863 = vector.load %arg10[%c201_335, %c0_336] : memref<304x128xf32, #tpu.memory_space<vmem>>, vector<16x128xf32>
    %cst_337 = arith.constant 0.000000e+00 : f32
    %864 = vector.shape_cast %59 : vector<16x1xi1> to vector<16x1xi1>
    %865 = vector.broadcast %864 : vector<16x1xi1> to vector<16x128xi1>
    %866 = vector.broadcast %cst_337 : f32 to vector<16x128xf32>
    %867 = arith.select %865, %863, %866 : vector<16x128xi1>, vector<16x128xf32>
    %868 = vector.broadcast %41 : vector<1x128xf32> to vector<16x128xf32>
    %869 = arith.mulf %867, %868 : vector<16x128xf32>
    %870 = arith.addf %862, %869 : vector<16x128xf32>
    %c215_338 = arith.constant 215 : index
    %c0_339 = arith.constant 0 : index
    %871 = vector.load %arg10[%c215_338, %c0_339] : memref<304x128xf32, #tpu.memory_space<vmem>>, vector<16x128xf32>
    %cst_340 = arith.constant 0.000000e+00 : f32
    %872 = vector.shape_cast %57 : vector<16x1xi1> to vector<16x1xi1>
    %873 = vector.broadcast %872 : vector<16x1xi1> to vector<16x128xi1>
    %874 = vector.broadcast %cst_340 : f32 to vector<16x128xf32>
    %875 = arith.select %873, %871, %874 : vector<16x128xi1>, vector<16x128xf32>
    %876 = vector.broadcast %43 : vector<1x128xf32> to vector<16x128xf32>
    %877 = arith.mulf %875, %876 : vector<16x128xf32>
    %878 = arith.addf %870, %877 : vector<16x128xf32>
    %c216_341 = arith.constant 216 : index
    %c0_342 = arith.constant 0 : index
    %879 = vector.load %arg10[%c216_341, %c0_342] : memref<304x128xf32, #tpu.memory_space<vmem>>, vector<16x128xf32>
    %880 = vector.broadcast %45 : vector<1x128xf32> to vector<16x128xf32>
    %881 = arith.mulf %879, %880 : vector<16x128xf32>
    %882 = arith.addf %878, %881 : vector<16x128xf32>
    %c217_343 = arith.constant 217 : index
    %c0_344 = arith.constant 0 : index
    %883 = vector.load %arg10[%c217_343, %c0_344] : memref<304x128xf32, #tpu.memory_space<vmem>>, vector<16x128xf32>
    %cst_345 = arith.constant 0.000000e+00 : f32
    %884 = vector.shape_cast %59 : vector<16x1xi1> to vector<16x1xi1>
    %885 = vector.broadcast %884 : vector<16x1xi1> to vector<16x128xi1>
    %886 = vector.broadcast %cst_345 : f32 to vector<16x128xf32>
    %887 = arith.select %885, %883, %886 : vector<16x128xi1>, vector<16x128xf32>
    %888 = vector.broadcast %47 : vector<1x128xf32> to vector<16x128xf32>
    %889 = arith.mulf %887, %888 : vector<16x128xf32>
    %890 = arith.addf %882, %889 : vector<16x128xf32>
    %c231 = arith.constant 231 : index
    %c0_346 = arith.constant 0 : index
    %891 = vector.load %arg10[%c231, %c0_346] : memref<304x128xf32, #tpu.memory_space<vmem>>, vector<16x128xf32>
    %cst_347 = arith.constant 0.000000e+00 : f32
    %892 = vector.shape_cast %57 : vector<16x1xi1> to vector<16x1xi1>
    %893 = vector.broadcast %892 : vector<16x1xi1> to vector<16x128xi1>
    %894 = vector.broadcast %cst_347 : f32 to vector<16x128xf32>
    %895 = arith.select %893, %891, %894 : vector<16x128xi1>, vector<16x128xf32>
    %896 = vector.broadcast %49 : vector<1x128xf32> to vector<16x128xf32>
    %897 = arith.mulf %895, %896 : vector<16x128xf32>
    %898 = arith.addf %890, %897 : vector<16x128xf32>
    %c232 = arith.constant 232 : index
    %c0_348 = arith.constant 0 : index
    %899 = vector.load %arg10[%c232, %c0_348] : memref<304x128xf32, #tpu.memory_space<vmem>>, vector<16x128xf32>
    %900 = vector.broadcast %51 : vector<1x128xf32> to vector<16x128xf32>
    %901 = arith.mulf %899, %900 : vector<16x128xf32>
    %902 = arith.addf %898, %901 : vector<16x128xf32>
    %c233 = arith.constant 233 : index
    %c0_349 = arith.constant 0 : index
    %903 = vector.load %arg10[%c233, %c0_349] : memref<304x128xf32, #tpu.memory_space<vmem>>, vector<16x128xf32>
    %cst_350 = arith.constant 0.000000e+00 : f32
    %904 = vector.shape_cast %59 : vector<16x1xi1> to vector<16x1xi1>
    %905 = vector.broadcast %904 : vector<16x1xi1> to vector<16x128xi1>
    %906 = vector.broadcast %cst_350 : f32 to vector<16x128xf32>
    %907 = arith.select %905, %903, %906 : vector<16x128xi1>, vector<16x128xf32>
    %908 = vector.broadcast %53 : vector<1x128xf32> to vector<16x128xf32>
    %909 = arith.mulf %907, %908 : vector<16x128xf32>
    %910 = arith.addf %902, %909 : vector<16x128xf32>
    %911 = vector.broadcast %54 : vector<1x128xf32> to vector<16x128xf32>
    %912 = arith.addf %910, %911 : vector<16x128xf32>
    %cst_351 = arith.constant 0.000000e+00 : f32
    %cst_352 = arith.constant 6.000000e+00 : f32
    %913 = vector.broadcast %cst_351 : f32 to vector<16x128xf32>
    %914 = arith.maximumf %913, %912 : vector<16x128xf32>
    %915 = vector.broadcast %cst_352 : f32 to vector<16x128xf32>
    %916 = arith.minimumf %915, %914 : vector<16x128xf32>
    %c192 = arith.constant 192 : index
    %c0_353 = arith.constant 0 : index
    %917 = vector.load %arg11[%c192, %c0_353] : memref<256x128xf32, #tpu.memory_space<vmem>>, vector<16x128xf32>
    tpu.vector_store %arg11[%c192, %c0_353], %916 {strides = array<i32>} : memref<256x128xf32, #tpu.memory_space<vmem>>, vector<16x128xf32>,
    %c215_354 = arith.constant 215 : index
    %c0_355 = arith.constant 0 : index
    %918 = vector.load %arg10[%c215_354, %c0_355] : memref<304x128xf32, #tpu.memory_space<vmem>>, vector<16x128xf32>
    %cst_356 = arith.constant 0.000000e+00 : f32
    %919 = vector.shape_cast %57 : vector<16x1xi1> to vector<16x1xi1>
    %920 = vector.broadcast %919 : vector<16x1xi1> to vector<16x128xi1>
    %921 = vector.broadcast %cst_356 : f32 to vector<16x128xf32>
    %922 = arith.select %920, %918, %921 : vector<16x128xi1>, vector<16x128xf32>
    %923 = vector.broadcast %37 : vector<1x128xf32> to vector<16x128xf32>
    %924 = arith.mulf %922, %923 : vector<16x128xf32>
    %c216_357 = arith.constant 216 : index
    %c0_358 = arith.constant 0 : index
    %925 = vector.load %arg10[%c216_357, %c0_358] : memref<304x128xf32, #tpu.memory_space<vmem>>, vector<16x128xf32>
    %926 = vector.broadcast %39 : vector<1x128xf32> to vector<16x128xf32>
    %927 = arith.mulf %925, %926 : vector<16x128xf32>
    %928 = arith.addf %924, %927 : vector<16x128xf32>
    %c217_359 = arith.constant 217 : index
    %c0_360 = arith.constant 0 : index
    %929 = vector.load %arg10[%c217_359, %c0_360] : memref<304x128xf32, #tpu.memory_space<vmem>>, vector<16x128xf32>
    %cst_361 = arith.constant 0.000000e+00 : f32
    %930 = vector.shape_cast %59 : vector<16x1xi1> to vector<16x1xi1>
    %931 = vector.broadcast %930 : vector<16x1xi1> to vector<16x128xi1>
    %932 = vector.broadcast %cst_361 : f32 to vector<16x128xf32>
    %933 = arith.select %931, %929, %932 : vector<16x128xi1>, vector<16x128xf32>
    %934 = vector.broadcast %41 : vector<1x128xf32> to vector<16x128xf32>
    %935 = arith.mulf %933, %934 : vector<16x128xf32>
    %936 = arith.addf %928, %935 : vector<16x128xf32>
    %c231_362 = arith.constant 231 : index
    %c0_363 = arith.constant 0 : index
    %937 = vector.load %arg10[%c231_362, %c0_363] : memref<304x128xf32, #tpu.memory_space<vmem>>, vector<16x128xf32>
    %cst_364 = arith.constant 0.000000e+00 : f32
    %938 = vector.shape_cast %57 : vector<16x1xi1> to vector<16x1xi1>
    %939 = vector.broadcast %938 : vector<16x1xi1> to vector<16x128xi1>
    %940 = vector.broadcast %cst_364 : f32 to vector<16x128xf32>
    %941 = arith.select %939, %937, %940 : vector<16x128xi1>, vector<16x128xf32>
    %942 = vector.broadcast %43 : vector<1x128xf32> to vector<16x128xf32>
    %943 = arith.mulf %941, %942 : vector<16x128xf32>
    %944 = arith.addf %936, %943 : vector<16x128xf32>
    %c232_365 = arith.constant 232 : index
    %c0_366 = arith.constant 0 : index
    %945 = vector.load %arg10[%c232_365, %c0_366] : memref<304x128xf32, #tpu.memory_space<vmem>>, vector<16x128xf32>
    %946 = vector.broadcast %45 : vector<1x128xf32> to vector<16x128xf32>
    %947 = arith.mulf %945, %946 : vector<16x128xf32>
    %948 = arith.addf %944, %947 : vector<16x128xf32>
    %c233_367 = arith.constant 233 : index
    %c0_368 = arith.constant 0 : index
    %949 = vector.load %arg10[%c233_367, %c0_368] : memref<304x128xf32, #tpu.memory_space<vmem>>, vector<16x128xf32>
    %cst_369 = arith.constant 0.000000e+00 : f32
    %950 = vector.shape_cast %59 : vector<16x1xi1> to vector<16x1xi1>
    %951 = vector.broadcast %950 : vector<16x1xi1> to vector<16x128xi1>
    %952 = vector.broadcast %cst_369 : f32 to vector<16x128xf32>
    %953 = arith.select %951, %949, %952 : vector<16x128xi1>, vector<16x128xf32>
    %954 = vector.broadcast %47 : vector<1x128xf32> to vector<16x128xf32>
    %955 = arith.mulf %953, %954 : vector<16x128xf32>
    %956 = arith.addf %948, %955 : vector<16x128xf32>
    %c247 = arith.constant 247 : index
    %c0_370 = arith.constant 0 : index
    %957 = vector.load %arg10[%c247, %c0_370] : memref<304x128xf32, #tpu.memory_space<vmem>>, vector<16x128xf32>
    %cst_371 = arith.constant 0.000000e+00 : f32
    %958 = vector.shape_cast %57 : vector<16x1xi1> to vector<16x1xi1>
    %959 = vector.broadcast %958 : vector<16x1xi1> to vector<16x128xi1>
    %960 = vector.broadcast %cst_371 : f32 to vector<16x128xf32>
    %961 = arith.select %959, %957, %960 : vector<16x128xi1>, vector<16x128xf32>
    %962 = vector.broadcast %49 : vector<1x128xf32> to vector<16x128xf32>
    %963 = arith.mulf %961, %962 : vector<16x128xf32>
    %964 = arith.addf %956, %963 : vector<16x128xf32>
    %c248 = arith.constant 248 : index
    %c0_372 = arith.constant 0 : index
    %965 = vector.load %arg10[%c248, %c0_372] : memref<304x128xf32, #tpu.memory_space<vmem>>, vector<16x128xf32>
    %966 = vector.broadcast %51 : vector<1x128xf32> to vector<16x128xf32>
    %967 = arith.mulf %965, %966 : vector<16x128xf32>
    %968 = arith.addf %964, %967 : vector<16x128xf32>
    %c249 = arith.constant 249 : index
    %c0_373 = arith.constant 0 : index
    %969 = vector.load %arg10[%c249, %c0_373] : memref<304x128xf32, #tpu.memory_space<vmem>>, vector<16x128xf32>
    %cst_374 = arith.constant 0.000000e+00 : f32
    %970 = vector.shape_cast %59 : vector<16x1xi1> to vector<16x1xi1>
    %971 = vector.broadcast %970 : vector<16x1xi1> to vector<16x128xi1>
    %972 = vector.broadcast %cst_374 : f32 to vector<16x128xf32>
    %973 = arith.select %971, %969, %972 : vector<16x128xi1>, vector<16x128xf32>
    %974 = vector.broadcast %53 : vector<1x128xf32> to vector<16x128xf32>
    %975 = arith.mulf %973, %974 : vector<16x128xf32>
    %976 = arith.addf %968, %975 : vector<16x128xf32>
    %977 = vector.broadcast %54 : vector<1x128xf32> to vector<16x128xf32>
    %978 = arith.addf %976, %977 : vector<16x128xf32>
    %cst_375 = arith.constant 0.000000e+00 : f32
    %cst_376 = arith.constant 6.000000e+00 : f32
    %979 = vector.broadcast %cst_375 : f32 to vector<16x128xf32>
    %980 = arith.maximumf %979, %978 : vector<16x128xf32>
    %981 = vector.broadcast %cst_376 : f32 to vector<16x128xf32>
    %982 = arith.minimumf %981, %980 : vector<16x128xf32>
    %c208 = arith.constant 208 : index
    %c0_377 = arith.constant 0 : index
    %983 = vector.load %arg11[%c208, %c0_377] : memref<256x128xf32, #tpu.memory_space<vmem>>, vector<16x128xf32>
    tpu.vector_store %arg11[%c208, %c0_377], %982 {strides = array<i32>} : memref<256x128xf32, #tpu.memory_space<vmem>>, vector<16x128xf32>,
    %c231_378 = arith.constant 231 : index
    %c0_379 = arith.constant 0 : index
    %984 = vector.load %arg10[%c231_378, %c0_379] : memref<304x128xf32, #tpu.memory_space<vmem>>, vector<16x128xf32>
    %cst_380 = arith.constant 0.000000e+00 : f32
    %985 = vector.shape_cast %57 : vector<16x1xi1> to vector<16x1xi1>
    %986 = vector.broadcast %985 : vector<16x1xi1> to vector<16x128xi1>
    %987 = vector.broadcast %cst_380 : f32 to vector<16x128xf32>
    %988 = arith.select %986, %984, %987 : vector<16x128xi1>, vector<16x128xf32>
    %989 = vector.broadcast %37 : vector<1x128xf32> to vector<16x128xf32>
    %990 = arith.mulf %988, %989 : vector<16x128xf32>
    %c232_381 = arith.constant 232 : index
    %c0_382 = arith.constant 0 : index
    %991 = vector.load %arg10[%c232_381, %c0_382] : memref<304x128xf32, #tpu.memory_space<vmem>>, vector<16x128xf32>
    %992 = vector.broadcast %39 : vector<1x128xf32> to vector<16x128xf32>
    %993 = arith.mulf %991, %992 : vector<16x128xf32>
    %994 = arith.addf %990, %993 : vector<16x128xf32>
    %c233_383 = arith.constant 233 : index
    %c0_384 = arith.constant 0 : index
    %995 = vector.load %arg10[%c233_383, %c0_384] : memref<304x128xf32, #tpu.memory_space<vmem>>, vector<16x128xf32>
    %cst_385 = arith.constant 0.000000e+00 : f32
    %996 = vector.shape_cast %59 : vector<16x1xi1> to vector<16x1xi1>
    %997 = vector.broadcast %996 : vector<16x1xi1> to vector<16x128xi1>
    %998 = vector.broadcast %cst_385 : f32 to vector<16x128xf32>
    %999 = arith.select %997, %995, %998 : vector<16x128xi1>, vector<16x128xf32>
    %1000 = vector.broadcast %41 : vector<1x128xf32> to vector<16x128xf32>
    %1001 = arith.mulf %999, %1000 : vector<16x128xf32>
    %1002 = arith.addf %994, %1001 : vector<16x128xf32>
    %c247_386 = arith.constant 247 : index
    %c0_387 = arith.constant 0 : index
    %1003 = vector.load %arg10[%c247_386, %c0_387] : memref<304x128xf32, #tpu.memory_space<vmem>>, vector<16x128xf32>
    %cst_388 = arith.constant 0.000000e+00 : f32
    %1004 = vector.shape_cast %57 : vector<16x1xi1> to vector<16x1xi1>
    %1005 = vector.broadcast %1004 : vector<16x1xi1> to vector<16x128xi1>
    %1006 = vector.broadcast %cst_388 : f32 to vector<16x128xf32>
    %1007 = arith.select %1005, %1003, %1006 : vector<16x128xi1>, vector<16x128xf32>
    %1008 = vector.broadcast %43 : vector<1x128xf32> to vector<16x128xf32>
    %1009 = arith.mulf %1007, %1008 : vector<16x128xf32>
    %1010 = arith.addf %1002, %1009 : vector<16x128xf32>
    %c248_389 = arith.constant 248 : index
    %c0_390 = arith.constant 0 : index
    %1011 = vector.load %arg10[%c248_389, %c0_390] : memref<304x128xf32, #tpu.memory_space<vmem>>, vector<16x128xf32>
    %1012 = vector.broadcast %45 : vector<1x128xf32> to vector<16x128xf32>
    %1013 = arith.mulf %1011, %1012 : vector<16x128xf32>
    %1014 = arith.addf %1010, %1013 : vector<16x128xf32>
    %c249_391 = arith.constant 249 : index
    %c0_392 = arith.constant 0 : index
    %1015 = vector.load %arg10[%c249_391, %c0_392] : memref<304x128xf32, #tpu.memory_space<vmem>>, vector<16x128xf32>
    %cst_393 = arith.constant 0.000000e+00 : f32
    %1016 = vector.shape_cast %59 : vector<16x1xi1> to vector<16x1xi1>
    %1017 = vector.broadcast %1016 : vector<16x1xi1> to vector<16x128xi1>
    %1018 = vector.broadcast %cst_393 : f32 to vector<16x128xf32>
    %1019 = arith.select %1017, %1015, %1018 : vector<16x128xi1>, vector<16x128xf32>
    %1020 = vector.broadcast %47 : vector<1x128xf32> to vector<16x128xf32>
    %1021 = arith.mulf %1019, %1020 : vector<16x128xf32>
    %1022 = arith.addf %1014, %1021 : vector<16x128xf32>
    %c263 = arith.constant 263 : index
    %c0_394 = arith.constant 0 : index
    %1023 = vector.load %arg10[%c263, %c0_394] : memref<304x128xf32, #tpu.memory_space<vmem>>, vector<16x128xf32>
    %cst_395 = arith.constant 0.000000e+00 : f32
    %1024 = vector.shape_cast %57 : vector<16x1xi1> to vector<16x1xi1>
    %1025 = vector.broadcast %1024 : vector<16x1xi1> to vector<16x128xi1>
    %1026 = vector.broadcast %cst_395 : f32 to vector<16x128xf32>
    %1027 = arith.select %1025, %1023, %1026 : vector<16x128xi1>, vector<16x128xf32>
    %1028 = vector.broadcast %49 : vector<1x128xf32> to vector<16x128xf32>
    %1029 = arith.mulf %1027, %1028 : vector<16x128xf32>
    %1030 = arith.addf %1022, %1029 : vector<16x128xf32>
    %c264 = arith.constant 264 : index
    %c0_396 = arith.constant 0 : index
    %1031 = vector.load %arg10[%c264, %c0_396] : memref<304x128xf32, #tpu.memory_space<vmem>>, vector<16x128xf32>
    %1032 = vector.broadcast %51 : vector<1x128xf32> to vector<16x128xf32>
    %1033 = arith.mulf %1031, %1032 : vector<16x128xf32>
    %1034 = arith.addf %1030, %1033 : vector<16x128xf32>
    %c265 = arith.constant 265 : index
    %c0_397 = arith.constant 0 : index
    %1035 = vector.load %arg10[%c265, %c0_397] : memref<304x128xf32, #tpu.memory_space<vmem>>, vector<16x128xf32>
    %cst_398 = arith.constant 0.000000e+00 : f32
    %1036 = vector.shape_cast %59 : vector<16x1xi1> to vector<16x1xi1>
    %1037 = vector.broadcast %1036 : vector<16x1xi1> to vector<16x128xi1>
    %1038 = vector.broadcast %cst_398 : f32 to vector<16x128xf32>
    %1039 = arith.select %1037, %1035, %1038 : vector<16x128xi1>, vector<16x128xf32>
    %1040 = vector.broadcast %53 : vector<1x128xf32> to vector<16x128xf32>
    %1041 = arith.mulf %1039, %1040 : vector<16x128xf32>
    %1042 = arith.addf %1034, %1041 : vector<16x128xf32>
    %1043 = vector.broadcast %54 : vector<1x128xf32> to vector<16x128xf32>
    %1044 = arith.addf %1042, %1043 : vector<16x128xf32>
    %cst_399 = arith.constant 0.000000e+00 : f32
    %cst_400 = arith.constant 6.000000e+00 : f32
    %1045 = vector.broadcast %cst_399 : f32 to vector<16x128xf32>
    %1046 = arith.maximumf %1045, %1044 : vector<16x128xf32>
    %1047 = vector.broadcast %cst_400 : f32 to vector<16x128xf32>
    %1048 = arith.minimumf %1047, %1046 : vector<16x128xf32>
    %c224 = arith.constant 224 : index
    %c0_401 = arith.constant 0 : index
    %1049 = vector.load %arg11[%c224, %c0_401] : memref<256x128xf32, #tpu.memory_space<vmem>>, vector<16x128xf32>
    tpu.vector_store %arg11[%c224, %c0_401], %1048 {strides = array<i32>} : memref<256x128xf32, #tpu.memory_space<vmem>>, vector<16x128xf32>,
    %c247_402 = arith.constant 247 : index
    %c0_403 = arith.constant 0 : index
    %1050 = vector.load %arg10[%c247_402, %c0_403] : memref<304x128xf32, #tpu.memory_space<vmem>>, vector<16x128xf32>
    %cst_404 = arith.constant 0.000000e+00 : f32
    %1051 = vector.shape_cast %57 : vector<16x1xi1> to vector<16x1xi1>
    %1052 = vector.broadcast %1051 : vector<16x1xi1> to vector<16x128xi1>
    %1053 = vector.broadcast %cst_404 : f32 to vector<16x128xf32>
    %1054 = arith.select %1052, %1050, %1053 : vector<16x128xi1>, vector<16x128xf32>
    %1055 = vector.broadcast %37 : vector<1x128xf32> to vector<16x128xf32>
    %1056 = arith.mulf %1054, %1055 : vector<16x128xf32>
    %c248_405 = arith.constant 248 : index
    %c0_406 = arith.constant 0 : index
    %1057 = vector.load %arg10[%c248_405, %c0_406] : memref<304x128xf32, #tpu.memory_space<vmem>>, vector<16x128xf32>
    %1058 = vector.broadcast %39 : vector<1x128xf32> to vector<16x128xf32>
    %1059 = arith.mulf %1057, %1058 : vector<16x128xf32>
    %1060 = arith.addf %1056, %1059 : vector<16x128xf32>
    %c249_407 = arith.constant 249 : index
    %c0_408 = arith.constant 0 : index
    %1061 = vector.load %arg10[%c249_407, %c0_408] : memref<304x128xf32, #tpu.memory_space<vmem>>, vector<16x128xf32>
    %cst_409 = arith.constant 0.000000e+00 : f32
    %1062 = vector.shape_cast %59 : vector<16x1xi1> to vector<16x1xi1>
    %1063 = vector.broadcast %1062 : vector<16x1xi1> to vector<16x128xi1>
    %1064 = vector.broadcast %cst_409 : f32 to vector<16x128xf32>
    %1065 = arith.select %1063, %1061, %1064 : vector<16x128xi1>, vector<16x128xf32>
    %1066 = vector.broadcast %41 : vector<1x128xf32> to vector<16x128xf32>
    %1067 = arith.mulf %1065, %1066 : vector<16x128xf32>
    %1068 = arith.addf %1060, %1067 : vector<16x128xf32>
    %c263_410 = arith.constant 263 : index
    %c0_411 = arith.constant 0 : index
    %1069 = vector.load %arg10[%c263_410, %c0_411] : memref<304x128xf32, #tpu.memory_space<vmem>>, vector<16x128xf32>
    %cst_412 = arith.constant 0.000000e+00 : f32
    %1070 = vector.shape_cast %57 : vector<16x1xi1> to vector<16x1xi1>
    %1071 = vector.broadcast %1070 : vector<16x1xi1> to vector<16x128xi1>
    %1072 = vector.broadcast %cst_412 : f32 to vector<16x128xf32>
    %1073 = arith.select %1071, %1069, %1072 : vector<16x128xi1>, vector<16x128xf32>
    %1074 = vector.broadcast %43 : vector<1x128xf32> to vector<16x128xf32>
    %1075 = arith.mulf %1073, %1074 : vector<16x128xf32>
    %1076 = arith.addf %1068, %1075 : vector<16x128xf32>
    %c264_413 = arith.constant 264 : index
    %c0_414 = arith.constant 0 : index
    %1077 = vector.load %arg10[%c264_413, %c0_414] : memref<304x128xf32, #tpu.memory_space<vmem>>, vector<16x128xf32>
    %1078 = vector.broadcast %45 : vector<1x128xf32> to vector<16x128xf32>
    %1079 = arith.mulf %1077, %1078 : vector<16x128xf32>
    %1080 = arith.addf %1076, %1079 : vector<16x128xf32>
    %c265_415 = arith.constant 265 : index
    %c0_416 = arith.constant 0 : index
    %1081 = vector.load %arg10[%c265_415, %c0_416] : memref<304x128xf32, #tpu.memory_space<vmem>>, vector<16x128xf32>
    %cst_417 = arith.constant 0.000000e+00 : f32
    %1082 = vector.shape_cast %59 : vector<16x1xi1> to vector<16x1xi1>
    %1083 = vector.broadcast %1082 : vector<16x1xi1> to vector<16x128xi1>
    %1084 = vector.broadcast %cst_417 : f32 to vector<16x128xf32>
    %1085 = arith.select %1083, %1081, %1084 : vector<16x128xi1>, vector<16x128xf32>
    %1086 = vector.broadcast %47 : vector<1x128xf32> to vector<16x128xf32>
    %1087 = arith.mulf %1085, %1086 : vector<16x128xf32>
    %1088 = arith.addf %1080, %1087 : vector<16x128xf32>
    %c279 = arith.constant 279 : index
    %c0_418 = arith.constant 0 : index
    %1089 = vector.load %arg10[%c279, %c0_418] : memref<304x128xf32, #tpu.memory_space<vmem>>, vector<16x128xf32>
    %cst_419 = arith.constant 0.000000e+00 : f32
    %1090 = vector.shape_cast %57 : vector<16x1xi1> to vector<16x1xi1>
    %1091 = vector.broadcast %1090 : vector<16x1xi1> to vector<16x128xi1>
    %1092 = vector.broadcast %cst_419 : f32 to vector<16x128xf32>
    %1093 = arith.select %1091, %1089, %1092 : vector<16x128xi1>, vector<16x128xf32>
    %1094 = vector.broadcast %49 : vector<1x128xf32> to vector<16x128xf32>
    %1095 = arith.mulf %1093, %1094 : vector<16x128xf32>
    %1096 = arith.addf %1088, %1095 : vector<16x128xf32>
    %c280 = arith.constant 280 : index
    %c0_420 = arith.constant 0 : index
    %1097 = vector.load %arg10[%c280, %c0_420] : memref<304x128xf32, #tpu.memory_space<vmem>>, vector<16x128xf32>
    %1098 = vector.broadcast %51 : vector<1x128xf32> to vector<16x128xf32>
    %1099 = arith.mulf %1097, %1098 : vector<16x128xf32>
    %1100 = arith.addf %1096, %1099 : vector<16x128xf32>
    %c281 = arith.constant 281 : index
    %c0_421 = arith.constant 0 : index
    %1101 = vector.load %arg10[%c281, %c0_421] : memref<304x128xf32, #tpu.memory_space<vmem>>, vector<16x128xf32>
    %cst_422 = arith.constant 0.000000e+00 : f32
    %1102 = vector.shape_cast %59 : vector<16x1xi1> to vector<16x1xi1>
    %1103 = vector.broadcast %1102 : vector<16x1xi1> to vector<16x128xi1>
    %1104 = vector.broadcast %cst_422 : f32 to vector<16x128xf32>
    %1105 = arith.select %1103, %1101, %1104 : vector<16x128xi1>, vector<16x128xf32>
    %1106 = vector.broadcast %53 : vector<1x128xf32> to vector<16x128xf32>
    %1107 = arith.mulf %1105, %1106 : vector<16x128xf32>
    %1108 = arith.addf %1100, %1107 : vector<16x128xf32>
    %1109 = vector.broadcast %54 : vector<1x128xf32> to vector<16x128xf32>
    %1110 = arith.addf %1108, %1109 : vector<16x128xf32>
    %cst_423 = arith.constant 0.000000e+00 : f32
    %cst_424 = arith.constant 6.000000e+00 : f32
    %1111 = vector.broadcast %cst_423 : f32 to vector<16x128xf32>
    %1112 = arith.maximumf %1111, %1110 : vector<16x128xf32>
    %1113 = vector.broadcast %cst_424 : f32 to vector<16x128xf32>
    %1114 = arith.minimumf %1113, %1112 : vector<16x128xf32>
    %c240 = arith.constant 240 : index
    %c0_425 = arith.constant 0 : index
    %1115 = vector.load %arg11[%c240, %c0_425] : memref<256x128xf32, #tpu.memory_space<vmem>>, vector<16x128xf32>
    tpu.vector_store %arg11[%c240, %c0_425], %1114 {strides = array<i32>} : memref<256x128xf32, #tpu.memory_space<vmem>>, vector<16x128xf32>,
    %c0_426 = arith.constant 0 : index
    %c0_427 = arith.constant 0 : index
    %1116 = vector.load %arg11[%c0_426, %c0_427] : memref<256x128xf32, #tpu.memory_space<vmem>>, vector<256x128xf32>
    %c0_428 = arith.constant 0 : index
    %c0_429 = arith.constant 0 : index
    %1117 = vector.load %arg7[%c0_428, %c0_429] : memref<128x128xf32, #tpu.memory_space<vmem>>, vector<128x128xf32>
    %cst_430 = arith.constant dense<0.000000e+00> : vector<256x128xf32>
    %1118 = tpu.matmul %1116, %1117, %cst_430 {dimension_numbers = #tpu.dot_dimension_numbers<[1], [0], [0], [1], [0, 0, 1, 1], [], []>} : vector<256x128xf32>, vector<128x128xf32>, vector<256x128xf32> -> vector<256x128xf32>
    %c0_431 = arith.constant 0 : index
    %c0_432 = arith.constant 0 : index
    %1119 = vector.load %arg8[%c0_431, %c0_432] : memref<1x128xf32, #tpu.memory_space<vmem>>, vector<1x128xf32>
    %1120 = vector.broadcast %1119 : vector<1x128xf32> to vector<256x128xf32>
    %1121 = arith.addf %1118, %1120 : vector<256x128xf32>
    %c1_i32_433 = arith.constant 1 : i32
    %1122 = arith.addi %0, %c1_i32_433 : i32
    %c16_i32_434 = arith.constant 16 : i32
    %1123 = arith.muli %1122, %c16_i32_434 : i32
    %c0_435 = arith.constant 0 : index
    %1124 = arith.index_cast %1123 : i32 to index
    %c0_436 = arith.constant 0 : index
    %1125 = vector.load %arg2[%c0_435, %1124, %c0_436] : memref<1x288x128xf32, #tpu.memory_space<vmem>>, vector<1x256x128xf32>
    %1126 = vector.shape_cast %1125 : vector<1x256x128xf32> to vector<256x128xf32>
    %1127 = arith.addf %1121, %1126 : vector<256x128xf32>
    %c0_437 = arith.constant 0 : index
    %c0_438 = arith.constant 0 : index
    %c0_439 = arith.constant 0 : index
    %c0_440 = arith.constant 0 : index
    %1128 = vector.load %arg9[%c0_437, %c0_438, %c0_439, %c0_440] : memref<1x1x256x128xf32, #tpu.memory_space<vmem>>, vector<1x1x256x128xf32>
    %1129 = vector.shape_cast %1128 : vector<1x1x256x128xf32> to vector<256x128xf32>
    %1130 = vector.shape_cast %1127 : vector<256x128xf32> to vector<1x1x256x128xf32>
    tpu.vector_store %arg9[%c0_437, %c0_438, %c0_439, %c0_440], %1130 {strides = array<i32>} : memref<1x1x256x128xf32, #tpu.memory_space<vmem>>, vector<1x1x256x128xf32>,
    return
  }
  func.func @transform_0(%arg0: i32, %arg1: i32) -> (i32, i32, i32) {
    %c0_i32 = arith.constant 0 : i32
    %c0_i32_0 = arith.constant 0 : i32
    %c0_i32_1 = arith.constant 0 : i32
    return %arg0, %c0_i32, %c0_i32_0 : i32, i32, i32
  }
  func.func @transform_1(%arg0: i32, %arg1: i32) -> (i32, i32) {
    %c0_i32 = arith.constant 0 : i32
    %c0_i32_0 = arith.constant 0 : i32
    %c0_i32_1 = arith.constant 0 : i32
    return %c0_i32, %c0_i32_0 : i32, i32
  }
  func.func @transform_2(%arg0: i32, %arg1: i32) -> (i32, i32) {
    %c0_i32 = arith.constant 0 : i32
    %c0_i32_0 = arith.constant 0 : i32
    %c0_i32_1 = arith.constant 0 : i32
    return %c0_i32, %c0_i32_0 : i32, i32
  }
  func.func @transform_3(%arg0: i32, %arg1: i32) -> (i32, i32, i32) {
    %c0_i32 = arith.constant 0 : i32
    %c0_i32_0 = arith.constant 0 : i32
    %c0_i32_1 = arith.constant 0 : i32
    %c0_i32_2 = arith.constant 0 : i32
    return %c0_i32, %c0_i32_0, %c0_i32_1 : i32, i32, i32
  }
  func.func @transform_4(%arg0: i32, %arg1: i32) -> (i32, i32) {
    %c0_i32 = arith.constant 0 : i32
    %c0_i32_0 = arith.constant 0 : i32
    %c0_i32_1 = arith.constant 0 : i32
    return %c0_i32, %c0_i32_0 : i32, i32
  }
  func.func @transform_5(%arg0: i32, %arg1: i32) -> (i32, i32) {
    %c0_i32 = arith.constant 0 : i32
    %c0_i32_0 = arith.constant 0 : i32
    %c0_i32_1 = arith.constant 0 : i32
    return %c0_i32, %c0_i32_0 : i32, i32
  }
  func.func @transform_6(%arg0: i32, %arg1: i32) -> (i32, i32) {
    %c0_i32 = arith.constant 0 : i32
    %c0_i32_0 = arith.constant 0 : i32
    %c0_i32_1 = arith.constant 0 : i32
    return %c0_i32, %c0_i32_0 : i32, i32
  }
  func.func @transform_7(%arg0: i32, %arg1: i32) -> (i32, i32, i32, i32) {
    %c0_i32 = arith.constant 0 : i32
    %c0_i32_0 = arith.constant 0 : i32
    %c0_i32_1 = arith.constant 0 : i32
    return %arg0, %arg1, %c0_i32, %c0_i32_0 : i32, i32, i32, i32
  }
}

</mosaic_0001>

<llo_original>
// kernel: tpu_custom_call.1
$region0: #{tpu_custom_call.1}
  #allocation0 [shape = 'u32[]', space=smem, size = 0x4, offset = 0x4, fixed_abs, tag = 'smem constant byte address 0x4 - core index']
  #allocation1 [shape = 'u32[72,128]{1,0:T(1,128)}', space=vmem, size = 0x9000, scoped, tag = 'internal scratch']
  #allocation2 [shape = 'f32[304,128]{1,0:T(8,128)}', space=vmem, size = 0x26000, scoped, tag = 'scratch operand']
  #allocation3 [shape = 'f32[256,128]{1,0:T(8,128)}', space=vmem, size = 0x20000, scoped, tag = 'scratch operand']
  %s0 = inlined_call_operand.hbm [shape: f32[2,288,128], index: 0, kind: input, shape index: {}]
  %s1 = inlined_call_operand.hbm [shape: f32[128,128], index: 1, kind: input, shape index: {}]
  %s2 = inlined_call_operand.vmem [shape: f32[1,128], index: 2, kind: input, shape index: {}]
  %s3 = inlined_call_operand.hbm [shape: f32[3,3,128], index: 3, kind: input, shape index: {}]
  %s4 = inlined_call_operand.vmem [shape: f32[1,128], index: 4, kind: input, shape index: {}]
  %s5 = inlined_call_operand.hbm [shape: f32[128,128], index: 5, kind: input, shape index: {}]
  %s6 = inlined_call_operand.vmem [shape: f32[1,128], index: 6, kind: input, shape index: {}]
  %s7 = inlined_call_operand.hbm [shape: f32[2,1,256,128], index: 7, kind: output, shape index: {}]
  %s8 = sld [smem:[#allocation0]]
  $region77: #{tpu_custom_call.1} parent=0
    _
  %s10 = ssub.s32 1, %s8
  %s11 = scalar_select 0, %s10, %s8
  $region1: #{tpu_custom_call.1} parent=0
    #allocation4 [shape = 'u8[294912]{0}', space=vmem, size = 0x48000, scoped, tag = 'input window, operand 0']
    #allocation5 [shape = 's32[2]{0}', space=sflag, size = 0x8, scoped, tag = 'scoped memory for tpu_custom_call.1']
    #allocation6 [shape = 's32[2]{0}', space=sflag, size = 0x8, scoped, tag = 'scoped memory for tpu_custom_call.1']
    #allocation7 [shape = 'u8[65536]{0}', space=vmem, size = 0x10000, scoped, tag = 'input window, operand 1, single buffered']
    #allocation8 [shape = 's32[1]{0}', space=sflag, size = 0x4, scoped, tag = 'scoped memory for tpu_custom_call.1']
    #allocation9 [shape = 'u8[6144]{0}', space=vmem, size = 0x1800, scoped, tag = 'input window, operand 3, single buffered']
    #allocation10 [shape = 'u8[65536]{0}', space=vmem, size = 0x10000, scoped, tag = 'input window, operand 5, single buffered']
    #allocation11 [shape = 's32[1]{0}', space=sflag, size = 0x4, scoped, tag = 'scoped memory for tpu_custom_call.1']
    #allocation12 [shape = 'u8[262144]{0}', space=vmem, size = 0x40000, scoped, tag = 'output window, operand 0']
    %12 = vsyncpa [#allocation5], 0
    %s13 = scalar_lea.sflag [#allocation5], 1
    %14 = vsyncpa %s13, 0
    %15 = vsyncpa [#allocation8], 0
    %16 = vsyncpa [#allocation11], 0
    %17 = vsyncpa [#allocation6], 0
    %s18 = scalar_lea.sflag [#allocation6], 1
    %19 = vsyncpa %s18, 0
    loop: start=0, step=1, limit=4
    $region2: #{tpu_custom_call.1} parent=1 // loop_pre_header
      _
    $region3: #{tpu_custom_call.1} parent=1 // loop_header
      %s21 = sphi 0, %s25
      %p22 = scmp.ge.s32.totalorder %s21, 4
      %s28 = sphi 0, %s40
      %s29 = sphi 0, %s36
      %s30 = sphi 0, %s28
      %s31 = sphi 0, %s29
      %s32 = sphi 0, %s30
      %s33 = sphi 0, %s31
      %s43 = sphi 0, %s45
      %s46 = sphi 0, %s43
      %s47 = sphi 0, %s46
      %s63 = sphi 0, %s47
      %s67 = sphi 0, %s67
      %s69 = sphi 0, %s67
      %s70 = sphi 0, %s69
      %s84 = sphi 0, %s70
      %s88 = sphi 0, %s88
      %s90 = sphi 0, %s88
      %s91 = sphi 0, %s90
      %s105 = sphi 0, %s91
      %s109 = sphi 0, %s109
      %s111 = sphi 0, %s109
      %s112 = sphi 0, %s111
      %s126 = sphi 0, %s112
      %s130 = sphi 0, %s130
      %s132 = sphi 0, %s130
      %s133 = sphi 0, %s132
      %s147 = sphi 0, %s133
      %s151 = sphi 0, %s151
      %s153 = sphi 0, %s151
      %s154 = sphi 0, %s153
      %s168 = sphi 0, %s154
      %s172 = sphi 0, %s172
      %s174 = sphi 0, %s172
      %s175 = sphi 0, %s174
      %s189 = sphi 0, %s175
      %s197 = sphi 0, %s199
      %s200 = sphi 0, %s197
      %s201 = sphi 0, %s200
      %s217 = sphi 0, %s201
    $region4: #{tpu_custom_call.1} parent=1 // loop_header_branch
      %24 = sbr.rel (%p22) target = $region8
    $region5: #{tpu_custom_call.1} parent=1 // loop_body
      %s26 = ssub.s32 %s21, 1
      %s27 = ssub.s32 %s21, 2
      %s34 = sadd.s32 1, %s29
      %p35 = scmp.ge.s32.totalorder %s34, 1
      %s36 = scalar_select %p35, 0, %s34
      %s37 = sadd.s32 1, %s28
      %s38 = scalar_select %p35, %s37, %s28
      %p39 = scmp.ge.s32.totalorder %s38, 2
      %s40 = scalar_select %p39, 0, %s38
      %s41 = ssub.s32 %s28, %s40
      %p42 = scmp.eq.s32.totalorder %s41, 0
      %s44 = sadd.s32 %s43, 1
      %s45 = scalar_select %p42, %s43, %s44
      %p48 = pneg %p42
      %p49 = scmp.eq.s32.totalorder %s21, 1
      %p50 = por %p48, %p49
      %p51 = scmp.ne.s32.totalorder %s43, %s46
      %p52 = scmp.eq.s32.totalorder %s21, 0
      %p53 = por %p51, %p52
      %p54 = scmp.ne.s32.totalorder %s43, %s46
      %p55 = scmp.eq.s32.totalorder %s26, 1
      %p56 = por %p54, %p55
      %p57 = scmp.ne.s32.totalorder %s46, %s47
      %p58 = scmp.eq.s32.totalorder %s26, 0
      %p59 = por %p57, %p58
      %p60 = scmp.ne.s32.totalorder %s46, %s47
      %p61 = scmp.eq.s32.totalorder %s27, 1
      %p62 = por %p60, %p61
      %p64 = scmp.ne.s32.totalorder %s47, %s63
      %p65 = scmp.eq.s32.totalorder %s27, 0
      %p66 = por %p64, %p65
      %s68 = sadd.s32 %s67, 1
      %p71 = scmp.eq.s32.totalorder %s21, 1
      %p72 = scmp.ne.s32.totalorder %s67, %s69
      %p73 = scmp.eq.s32.totalorder %s21, 0
      %p74 = por %p72, %p73
      %p75 = scmp.ne.s32.totalorder %s67, %s69
      %p76 = scmp.eq.s32.totalorder %s26, 1
      %p77 = por %p75, %p76
      %p78 = scmp.ne.s32.totalorder %s69, %s70
      %p79 = scmp.eq.s32.totalorder %s26, 0
      %p80 = por %p78, %p79
      %p81 = scmp.ne.s32.totalorder %s69, %s70
      %p82 = scmp.eq.s32.totalorder %s27, 1
      %p83 = por %p81, %p82
      %p85 = scmp.ne.s32.totalorder %s70, %s84
      %p86 = scmp.eq.s32.totalorder %s27, 0
      %p87 = por %p85, %p86
      %s89 = sadd.s32 %s88, 1
      %p92 = scmp.eq.s32.totalorder %s21, 1
      %p93 = scmp.ne.s32.totalorder %s88, %s90
      %p94 = scmp.eq.s32.totalorder %s21, 0
      %p95 = por %p93, %p94
      %p96 = scmp.ne.s32.totalorder %s88, %s90
      %p97 = scmp.eq.s32.totalorder %s26, 1
      %p98 = por %p96, %p97
      %p99 = scmp.ne.s32.totalorder %s90, %s91
      %p100 = scmp.eq.s32.totalorder %s26, 0
      %p101 = por %p99, %p100
      %p102 = scmp.ne.s32.totalorder %s90, %s91
      %p103 = scmp.eq.s32.totalorder %s27, 1
      %p104 = por %p102, %p103
      %p106 = scmp.ne.s32.totalorder %s91, %s105
      %p107 = scmp.eq.s32.totalorder %s27, 0
      %p108 = por %p106, %p107
      %s110 = sadd.s32 %s109, 1
      %p113 = scmp.eq.s32.totalorder %s21, 1
      %p114 = scmp.ne.s32.totalorder %s109, %s111
      %p115 = scmp.eq.s32.totalorder %s21, 0
      %p116 = por %p114, %p115
      %p117 = scmp.ne.s32.totalorder %s109, %s111
      %p118 = scmp.eq.s32.totalorder %s26, 1
      %p119 = por %p117, %p118
      %p120 = scmp.ne.s32.totalorder %s111, %s112
      %p121 = scmp.eq.s32.totalorder %s26, 0
      %p122 = por %p120, %p121
      %p123 = scmp.ne.s32.totalorder %s111, %s112
      %p124 = scmp.eq.s32.totalorder %s27, 1
      %p125 = por %p123, %p124
      %p127 = scmp.ne.s32.totalorder %s112, %s126
      %p128 = scmp.eq.s32.totalorder %s27, 0
      %p129 = por %p127, %p128
      %s131 = sadd.s32 %s130, 1
      %p134 = scmp.eq.s32.totalorder %s21, 1
      %p135 = scmp.ne.s32.totalorder %s130, %s132
      %p136 = scmp.eq.s32.totalorder %s21, 0
      %p137 = por %p135, %p136
      %p138 = scmp.ne.s32.totalorder %s130, %s132
      %p139 = scmp.eq.s32.totalorder %s26, 1
      %p140 = por %p138, %p139
      %p141 = scmp.ne.s32.totalorder %s132, %s133
      %p142 = scmp.eq.s32.totalorder %s26, 0
      %p143 = por %p141, %p142
      %p144 = scmp.ne.s32.totalorder %s132, %s133
      %p145 = scmp.eq.s32.totalorder %s27, 1
      %p146 = por %p144, %p145
      %p148 = scmp.ne.s32.totalorder %s133, %s147
      %p149 = scmp.eq.s32.totalorder %s27, 0
      %p150 = por %p148, %p149
      %s152 = sadd.s32 %s151, 1
      %p155 = scmp.eq.s32.totalorder %s21, 1
      %p156 = scmp.ne.s32.totalorder %s151, %s153
      %p157 = scmp.eq.s32.totalorder %s21, 0
      %p158 = por %p156, %p157
      %p159 = scmp.ne.s32.totalorder %s151, %s153
      %p160 = scmp.eq.s32.totalorder %s26, 1
      %p161 = por %p159, %p160
      %p162 = scmp.ne.s32.totalorder %s153, %s154
      %p163 = scmp.eq.s32.totalorder %s26, 0
      %p164 = por %p162, %p163
      %p165 = scmp.ne.s32.totalorder %s153, %s154
      %p166 = scmp.eq.s32.totalorder %s27, 1
      %p167 = por %p165, %p166
      %p169 = scmp.ne.s32.totalorder %s154, %s168
      %p170 = scmp.eq.s32.totalorder %s27, 0
      %p171 = por %p169, %p170
      %s173 = sadd.s32 %s172, 1
      %p176 = scmp.eq.s32.totalorder %s21, 1
      %p177 = scmp.ne.s32.totalorder %s172, %s174
      %p178 = scmp.eq.s32.totalorder %s21, 0
      %p179 = por %p177, %p178
      %p180 = scmp.ne.s32.totalorder %s172, %s174
      %p181 = scmp.eq.s32.totalorder %s26, 1
      %p182 = por %p180, %p181
      %p183 = scmp.ne.s32.totalorder %s174, %s175
      %p184 = scmp.eq.s32.totalorder %s26, 0
      %p185 = por %p183, %p184
      %p186 = scmp.ne.s32.totalorder %s174, %s175
      %p187 = scmp.eq.s32.totalorder %s27, 1
      %p188 = por %p186, %p187
      %p190 = scmp.ne.s32.totalorder %s175, %s189
      %p191 = scmp.eq.s32.totalorder %s27, 0
      %p192 = por %p190, %p191
      %s193 = ssub.s32 %s28, %s40
      %s194 = ssub.s32 %s29, %s36
      %s195 = sor.u32 %s193, %s194
      %p196 = scmp.eq.s32.totalorder %s195, 0
      %s198 = sadd.s32 %s197, 1
      %s199 = scalar_select %p196, %s197, %s198
      %p202 = pneg %p196
      %p203 = scmp.eq.s32.totalorder %s21, 1
      %p204 = por %p202, %p203
      %p205 = scmp.ne.s32.totalorder %s197, %s200
      %p206 = scmp.eq.s32.totalorder %s21, 0
      %p207 = por %p205, %p206
      %p208 = scmp.ne.s32.totalorder %s197, %s200
      %p209 = scmp.eq.s32.totalorder %s26, 1
      %p210 = por %p208, %p209
      %p211 = scmp.ne.s32.totalorder %s200, %s201
      %p212 = scmp.eq.s32.totalorder %s26, 0
      %p213 = por %p211, %p212
      %p214 = scmp.ne.s32.totalorder %s200, %s201
      %p215 = scmp.eq.s32.totalorder %s27, 1
      %p216 = por %p214, %p215
      %p218 = scmp.ne.s32.totalorder %s201, %s217
      %p219 = scmp.eq.s32.totalorder %s27, 0
      %p220 = por %p218, %p219
      %p221 = scmp.le.s32.totalorder 1, %s21
      %p222 = scmp.lt.s32.totalorder %s21, 3
      %p223 = pnand %p221, %p222
      %p224 = pneg %p223
      // Predicated region
      $region9: #{tpu_custom_call.1} parent=5 // pred_check
        _
      $region10: #{tpu_custom_call.1} parent=5 // pred_check_branch
        %226 = sbr.rel (%p223) target = $region12
      $region11: #{tpu_custom_call.1} parent=5 // pred_region
        %s227 = ssub.s32 %s21, 1
        // Predicated region
        $region13: #{tpu_custom_call.1} parent=11 // pred_check
          %p228 = pneg %p80
        $region14: #{tpu_custom_call.1} parent=11 // pred_check_branch
          %230 = sbr.rel (%p228) target = $region16
        $region15: #{tpu_custom_call.1} parent=11 // pred_region
          %232 = vsyncadd [#allocation8], 0
          %s233 = sshll.u32 %s1, 4
          %s234 = int_to_ptr.hbm [resolvable:$true] %s233
          %s235 = sshll.u32 [#allocation7], 4
          %s236 = int_to_ptr.vmem [resolvable:$true] %s235
          %241 = dma.hbm_to_vmem [thread:$0]  %s234, 2048, %s236, [#allocation8], 128, 128, 8
        $region16: #{tpu_custom_call.1} parent=11 // pred_fallthru
          _
        // Predicated region
        $region17: #{tpu_custom_call.1} parent=11 // pred_check
          %p242 = pneg %p101
        $region18: #{tpu_custom_call.1} parent=11 // pred_check_branch
          %244 = sbr.rel (%p242) target = $region20
        $region19: #{tpu_custom_call.1} parent=11 // pred_region
          _
        $region20: #{tpu_custom_call.1} parent=11 // pred_fallthru
          _
        // Predicated region
        $region21: #{tpu_custom_call.1} parent=11 // pred_check
          %p245 = pneg %p122
        $region22: #{tpu_custom_call.1} parent=11 // pred_check_branch
          %247 = sbr.rel (%p245) target = $region24
        $region23: #{tpu_custom_call.1} parent=11 // pred_region
          %249 = vsyncadd [#allocation8], 0
          %s250 = sshll.u32 %s3, 4
          %s251 = int_to_ptr.hbm [resolvable:$true] %s250
          %s252 = sshll.u32 [#allocation9], 4
          %s253 = int_to_ptr.vmem [resolvable:$true] %s252
          %258 = dma.hbm_to_vmem [thread:$0]  %s251, 192, %s253, [#allocation8], 64, 64, 4
        $region24: #{tpu_custom_call.1} parent=11 // pred_fallthru
          _
        // Predicated region
        $region25: #{tpu_custom_call.1} parent=11 // pred_check
          %p259 = pneg %p143
        $region26: #{tpu_custom_call.1} parent=11 // pred_check_branch
          %261 = sbr.rel (%p259) target = $region28
        $region27: #{tpu_custom_call.1} parent=11 // pred_region
          _
        $region28: #{tpu_custom_call.1} parent=11 // pred_fallthru
          _
        // Predicated region
        $region29: #{tpu_custom_call.1} parent=11 // pred_check
          %p262 = pneg %p164
        $region30: #{tpu_custom_call.1} parent=11 // pred_check_branch
          %264 = sbr.rel (%p262) target = $region32
        $region31: #{tpu_custom_call.1} parent=11 // pred_region
          %266 = vsyncadd [#allocation11], 0
          %s267 = sshll.u32 %s5, 4
          %s268 = int_to_ptr.hbm [resolvable:$true] %s267
          %s269 = sshll.u32 [#allocation10], 4
          %s270 = int_to_ptr.vmem [resolvable:$true] %s269
          %275 = dma.hbm_to_vmem [thread:$0]  %s268, 2048, %s270, [#allocation11], 128, 128, 8
        $region32: #{tpu_custom_call.1} parent=11 // pred_fallthru
          _
        // Predicated region
        $region33: #{tpu_custom_call.1} parent=11 // pred_check
          %p276 = pneg %p185
        $region34: #{tpu_custom_call.1} parent=11 // pred_check_branch
          %278 = sbr.rel (%p276) target = $region36
        $region35: #{tpu_custom_call.1} parent=11 // pred_region
          _
        $region36: #{tpu_custom_call.1} parent=11 // pred_fallthru
          _
      $region12: #{tpu_custom_call.1} parent=5 // pred_fallthru
        _
      %p279 = scmp.lt.s32.totalorder %s21, 2
      // Predicated region
      $region37: #{tpu_custom_call.1} parent=5 // pred_check
        %p280 = pneg %p279
      $region38: #{tpu_custom_call.1} parent=5 // pred_check_branch
        %282 = sbr.rel (%p280) target = $region40
      $region39: #{tpu_custom_call.1} parent=5 // pred_region
        // Predicated region
        $region41: #{tpu_custom_call.1} parent=39 // pred_check
          %p283 = pneg %p53
        $region42: #{tpu_custom_call.1} parent=39 // pred_check_branch
          %285 = sbr.rel (%p283) target = $region44
        $region43: #{tpu_custom_call.1} parent=39 // pred_region
          %s286 = sand.u32 %s43, 1
          %s287 = scalar_lea.sflag [#allocation5], %s286
          %s288 = sand.u32 %s43, 1
          %s289 = smul.addr %s288, 288
          %s290 = scalar_lea.vmem [#allocation4], %s289
          %292 = vsyncadd %s287, 0
          %s293 = smul.addr %s28, 36
          %s294 = smul.addr %s293, 8
          %s295 = scalar_lea.hbm %s0, %s294
          %s296 = sshll.u32 %s295, 4
          %s297 = int_to_ptr.hbm [resolvable:$true] %s296
          %s298 = sshll.u32 %s290, 4
          %s299 = int_to_ptr.vmem [resolvable:$true] %s298
          %304 = dma.hbm_to_vmem [thread:$0]  %s297, 4608, %s299, %s287, 128, 128, 8
        $region44: #{tpu_custom_call.1} parent=39 // pred_fallthru
          _
      $region40: #{tpu_custom_call.1} parent=5 // pred_fallthru
        _
      %p305 = scmp.le.s32.totalorder 1, %s21
      %p306 = scmp.lt.s32.totalorder %s21, 3
      %p307 = pnand %p305, %p306
      %p308 = pneg %p307
      // Predicated region
      $region45: #{tpu_custom_call.1} parent=5 // pred_check
        _
      $region46: #{tpu_custom_call.1} parent=5 // pred_check_branch
        %310 = sbr.rel (%p307) target = $region48
      $region47: #{tpu_custom_call.1} parent=5 // pred_region
        %s311 = ssub.s32 %s21, 1
        %s312 = sand.u32 %s46, 1
        %s313 = scalar_lea.sflag [#allocation5], %s312
        %s314 = sand.u32 %s46, 1
        %s315 = smul.addr %s314, 288
        %s316 = scalar_lea.vmem [#allocation4], %s315
        // Predicated region
        $region49: #{tpu_custom_call.1} parent=47 // pred_check
          %p317 = pneg %p59
        $region50: #{tpu_custom_call.1} parent=47 // pred_check_branch
          %319 = sbr.rel (%p317) target = $region52
        $region51: #{tpu_custom_call.1} parent=47 // pred_region
          %321 = dma.done %s313, 4608
        $region52: #{tpu_custom_call.1} parent=47 // pred_fallthru
          _
        // Predicated region
        $region53: #{tpu_custom_call.1} parent=47 // pred_check
          %p322 = pneg %p80
        $region54: #{tpu_custom_call.1} parent=47 // pred_check_branch
          %324 = sbr.rel (%p322) target = $region56
        $region55: #{tpu_custom_call.1} parent=47 // pred_region
          %326 = dma.done [#allocation8], 2048
        $region56: #{tpu_custom_call.1} parent=47 // pred_fallthru
          _
        // Predicated region
        $region57: #{tpu_custom_call.1} parent=47 // pred_check
          %p327 = pneg %p122
        $region58: #{tpu_custom_call.1} parent=47 // pred_check_branch
          %329 = sbr.rel (%p327) target = $region60
        $region59: #{tpu_custom_call.1} parent=47 // pred_region
          %331 = dma.done [#allocation8], 192
        $region60: #{tpu_custom_call.1} parent=47 // pred_fallthru
          _
        // Predicated region
        $region61: #{tpu_custom_call.1} parent=47 // pred_check
          %p332 = pneg %p164
        $region62: #{tpu_custom_call.1} parent=47 // pred_check_branch
          %334 = sbr.rel (%p332) target = $region64
        $region63: #{tpu_custom_call.1} parent=47 // pred_region
          %336 = dma.done [#allocation11], 2048
        $region64: #{tpu_custom_call.1} parent=47 // pred_fallthru
          _
        %s337 = sand.u32 %s46, 1
        %s338 = scalar_lea.sflag [#allocation5], %s337
        %s339 = sand.u32 %s46, 1
        %s340 = smul.addr %s339, 288
        %s341 = scalar_lea.vmem [#allocation4], %s340
        %p342 = pneg %p59
        %p343 = pneg %p56
        %p344 = pneg %p80
        %p345 = pneg %p77
        %p346 = pneg %p101
        %p347 = pneg %p98
        %p348 = pneg %p122
        %p349 = pneg %p119
        %p350 = pneg %p143
        %p351 = pneg %p140
        %p352 = pneg %p164
        %p353 = pneg %p161
        %p354 = pneg %p185
        %p355 = pneg %p182
        %p356 = pneg %p213
        %p357 = pneg %p210
        %s358 = sand.u32 %s200, 1
        %s359 = scalar_lea.sflag [#allocation6], %s358
        %s360 = sand.u32 %s200, 1
        %s361 = smul.addr %s360, 256
        %s362 = scalar_lea.vmem [#allocation12], %s361
        %s363 = smul.u32 %s31, 16
        %364 = vst [vmem:[#allocation2] sm:$0xff] 0.0
        %365 = vst [vmem:[#allocation2 + $0x128] sm:$0xff] 0.0
        %s366 = smul.u32 %s31, 256
        %s367 = scalar_lea.vmem %s316, %s366 [#allocation4]
        %v368 = vld [vmem:[%s367] sm:$0xff]
        %v369 = vld [vmem:[%s367 + $0x8] sm:$0xff]
        %v370 = vld [vmem:[%s367 + $0x10] sm:$0xff]
        %v371 = vld [vmem:[%s367 + $0x18] sm:$0xff]
        %v372 = vld [vmem:[%s367 + $0x20] sm:$0xff]
        %v373 = vld [vmem:[%s367 + $0x28] sm:$0xff]
        %v374 = vld [vmem:[%s367 + $0x30] sm:$0xff]
        %v375 = vld [vmem:[%s367 + $0x38] sm:$0xff]
        %v376 = vld [vmem:[%s367 + $0x40] sm:$0xff]
        %v377 = vld [vmem:[%s367 + $0x48] sm:$0xff]
        %v378 = vld [vmem:[%s367 + $0x50] sm:$0xff]
        %v379 = vld [vmem:[%s367 + $0x58] sm:$0xff]
        %v380 = vld [vmem:[%s367 + $0x60] sm:$0xff]
        %v381 = vld [vmem:[%s367 + $0x68] sm:$0xff]
        %v382 = vld [vmem:[%s367 + $0x70] sm:$0xff]
        %v383 = vld [vmem:[%s367 + $0x78] sm:$0xff]
        %v384 = vld [vmem:[%s367 + $0x80] sm:$0xff]
        %v385 = vld [vmem:[%s367 + $0x88] sm:$0xff]
        %v386 = vld [vmem:[%s367 + $0x90] sm:$0xff]
        %v387 = vld [vmem:[%s367 + $0x98] sm:$0xff]
        %v388 = vld [vmem:[%s367 + $0xa0] sm:$0xff]
        %v389 = vld [vmem:[%s367 + $0xa8] sm:$0xff]
        %v390 = vld [vmem:[%s367 + $0xb0] sm:$0xff]
        %v391 = vld [vmem:[%s367 + $0xb8] sm:$0xff]
        %v392 = vld [vmem:[%s367 + $0xc0] sm:$0xff]
        %v393 = vld [vmem:[%s367 + $0xc8] sm:$0xff]
        %v394 = vld [vmem:[%s367 + $0xd0] sm:$0xff]
        %v395 = vld [vmem:[%s367 + $0xd8] sm:$0xff]
        %v396 = vld [vmem:[%s367 + $0xe0] sm:$0xff]
        %v397 = vld [vmem:[%s367 + $0xe8] sm:$0xff]
        %v398 = vld [vmem:[%s367 + $0xf0] sm:$0xff]
        %v399 = vld [vmem:[%s367 + $0xf8] sm:$0xff]
        %v400 = vld [vmem:[%s367 + $0x100] sm:$0xff]
        %v401 = vld [vmem:[%s367 + $0x108] sm:$0xff]
        %v402 = vld [vmem:[%s367 + $0x110] sm:$0xff]
        %v403 = vld [vmem:[%s367 + $0x118] sm:$0xff]
        %v404 = vld [vmem:[#allocation7] sm:$0xff]
        %v405 = vld [vmem:[#allocation7 + $0x8] sm:$0xff]
        %v406 = vld [vmem:[#allocation7 + $0x10] sm:$0xff]
        %v407 = vld [vmem:[#allocation7 + $0x18] sm:$0xff]
        %v408 = vld [vmem:[#allocation7 + $0x20] sm:$0xff]
        %v409 = vld [vmem:[#allocation7 + $0x28] sm:$0xff]
        %v410 = vld [vmem:[#allocation7 + $0x30] sm:$0xff]
        %v411 = vld [vmem:[#allocation7 + $0x38] sm:$0xff]
        %v412 = vld [vmem:[#allocation7 + $0x40] sm:$0xff]
        %v413 = vld [vmem:[#allocation7 + $0x48] sm:$0xff]
        %v414 = vld [vmem:[#allocation7 + $0x50] sm:$0xff]
        %v415 = vld [vmem:[#allocation7 + $0x58] sm:$0xff]
        %v416 = vld [vmem:[#allocation7 + $0x60] sm:$0xff]
        %v417 = vld [vmem:[#allocation7 + $0x68] sm:$0xff]
        %v418 = vld [vmem:[#allocation7 + $0x70] sm:$0xff]
        %v419 = vld [vmem:[#allocation7 + $0x78] sm:$0xff]
        %v420 = vld [vmem:[%s2] sm:$0x1]
        %v422 = vperm.slane %v420, 0
        %424 = vmatpush.msra.mxu0 %v419
        %425 = vmatpush.msra.mxu0 %v418
        %426 = vmatpush.msra.mxu0 %v417
        %427 = vmatpush.msra.mxu0 %v416
        %428 = vmatpush.msra.mxu0 %v415
        %429 = vmatpush.msra.mxu0 %v414
        %430 = vmatpush.msra.mxu0 %v413
        %431 = vmatpush.msra.mxu0 %v412
        %432 = vmatpush.msra.mxu0 %v411
        %433 = vmatpush.msra.mxu0 %v410
        %434 = vmatpush.msra.mxu0 %v409
        %435 = vmatpush.msra.mxu0 %v408
        %436 = vmatpush.msra.mxu0 %v407
        %437 = vmatpush.msra.mxu0 %v406
        %438 = vmatpush.msra.mxu0 %v405
        %439 = vmatpush.msra.mxu0 %v404
        %440 = vmatmul.f32.gmra.mxu0 %v368
        %v441 = vpop.f32.mrf.mxu0
        %v442 = vadd.f32 %v422, %v441
        %443 = vmatmul.f32.gmra.mxu0 %v369
        %v444 = vpop.f32.mrf.mxu0
        %v445 = vadd.f32 %v422, %v444
        %446 = vmatmul.f32.gmra.mxu0 %v370
        %v447 = vpop.f32.mrf.mxu0
        %v448 = vadd.f32 %v422, %v447
        %449 = vmatmul.f32.gmra.mxu0 %v371
        %v450 = vpop.f32.mrf.mxu0
        %v451 = vadd.f32 %v422, %v450
        %452 = vmatmul.f32.gmra.mxu0 %v372
        %v453 = vpop.f32.mrf.mxu0
        %v454 = vadd.f32 %v422, %v453
        %455 = vmatmul.f32.gmra.mxu0 %v373
        %v456 = vpop.f32.mrf.mxu0
        %v457 = vadd.f32 %v422, %v456
        %458 = vmatmul.f32.gmra.mxu0 %v374
        %v459 = vpop.f32.mrf.mxu0
        %v460 = vadd.f32 %v422, %v459
        %461 = vmatmul.f32.gmra.mxu0 %v375
        %v462 = vpop.f32.mrf.mxu0
        %v463 = vadd.f32 %v422, %v462
        %464 = vmatmul.f32.gmra.mxu0 %v376
        %v465 = vpop.f32.mrf.mxu0
        %v466 = vadd.f32 %v422, %v465
        %467 = vmatmul.f32.gmra.mxu0 %v377
        %v468 = vpop.f32.mrf.mxu0
        %v469 = vadd.f32 %v422, %v468
        %470 = vmatmul.f32.gmra.mxu0 %v378
        %v471 = vpop.f32.mrf.mxu0
        %v472 = vadd.f32 %v422, %v471
        %473 = vmatmul.f32.gmra.mxu0 %v379
        %v474 = vpop.f32.mrf.mxu0
        %v475 = vadd.f32 %v422, %v474
        %476 = vmatmul.f32.gmra.mxu0 %v380
        %v477 = vpop.f32.mrf.mxu0
        %v478 = vadd.f32 %v422, %v477
        %479 = vmatmul.f32.gmra.mxu0 %v381
        %v480 = vpop.f32.mrf.mxu0
        %v481 = vadd.f32 %v422, %v480
        %482 = vmatmul.f32.gmra.mxu0 %v382
        %v483 = vpop.f32.mrf.mxu0
        %v484 = vadd.f32 %v422, %v483
        %485 = vmatmul.f32.gmra.mxu0 %v383
        %v486 = vpop.f32.mrf.mxu0
        %v487 = vadd.f32 %v422, %v486
        %488 = vmatmul.f32.gmra.mxu0 %v384
        %v489 = vpop.f32.mrf.mxu0
        %v490 = vadd.f32 %v422, %v489
        %491 = vmatmul.f32.gmra.mxu0 %v385
        %v492 = vpop.f32.mrf.mxu0
        %v493 = vadd.f32 %v422, %v492
        %494 = vmatmul.f32.gmra.mxu0 %v386
        %v495 = vpop.f32.mrf.mxu0
        %v496 = vadd.f32 %v422, %v495
        %497 = vmatmul.f32.gmra.mxu0 %v387
        %v498 = vpop.f32.mrf.mxu0
        %v499 = vadd.f32 %v422, %v498
        %500 = vmatmul.f32.gmra.mxu0 %v388
        %v501 = vpop.f32.mrf.mxu0
        %v502 = vadd.f32 %v422, %v501
        %503 = vmatmul.f32.gmra.mxu0 %v389
        %v504 = vpop.f32.mrf.mxu0
        %v505 = vadd.f32 %v422, %v504
        %506 = vmatmul.f32.gmra.mxu0 %v390
        %v507 = vpop.f32.mrf.mxu0
        %v508 = vadd.f32 %v422, %v507
        %509 = vmatmul.f32.gmra.mxu0 %v391
        %v510 = vpop.f32.mrf.mxu0
        %v511 = vadd.f32 %v422, %v510
        %512 = vmatmul.f32.gmra.mxu0 %v392
        %v513 = vpop.f32.mrf.mxu0
        %v514 = vadd.f32 %v422, %v513
        %515 = vmatmul.f32.gmra.mxu0 %v393
        %v516 = vpop.f32.mrf.mxu0
        %v517 = vadd.f32 %v422, %v516
        %518 = vmatmul.f32.gmra.mxu0 %v394
        %v519 = vpop.f32.mrf.mxu0
        %v520 = vadd.f32 %v422, %v519
        %521 = vmatmul.f32.gmra.mxu0 %v395
        %v522 = vpop.f32.mrf.mxu0
        %v523 = vadd.f32 %v422, %v522
        %524 = vmatmul.f32.gmra.mxu0 %v396
        %v525 = vpop.f32.mrf.mxu0
        %v526 = vadd.f32 %v422, %v525
        %527 = vmatmul.f32.gmra.mxu0 %v397
        %v528 = vpop.f32.mrf.mxu0
        %v529 = vadd.f32 %v422, %v528
        %530 = vmatmul.f32.gmra.mxu0 %v398
        %v531 = vpop.f32.mrf.mxu0
        %v532 = vadd.f32 %v422, %v531
        %533 = vmatmul.f32.gmra.mxu0 %v399
        %v534 = vpop.f32.mrf.mxu0
        %v535 = vadd.f32 %v422, %v534
        %536 = vmatmul.f32.gmra.mxu0 %v400
        %v537 = vpop.f32.mrf.mxu0
        %v538 = vadd.f32 %v422, %v537
        %539 = vmatmul.f32.gmra.mxu0 %v401
        %v540 = vpop.f32.mrf.mxu0
        %v541 = vadd.f32 %v422, %v540
        %542 = vmatmul.f32.gmra.mxu0 %v402
        %v543 = vpop.f32.mrf.mxu0
        %v544 = vadd.f32 %v422, %v543
        %545 = vmatmul.f32.gmra.mxu0 %v403
        %v546 = vpop.f32.mrf.mxu0
        %v547 = vadd.f32 %v422, %v546
        %548 = vdwg.mxu0
        %v549 = vmax.f32 %v442, 0.0
        %v550 = vmax.f32 %v445, 0.0
        %v551 = vmax.f32 %v448, 0.0
        %v552 = vmax.f32 %v451, 0.0
        %v553 = vmax.f32 %v454, 0.0
        %v554 = vmax.f32 %v457, 0.0
        %v555 = vmax.f32 %v460, 0.0
        %v556 = vmax.f32 %v463, 0.0
        %v557 = vmax.f32 %v466, 0.0
        %v558 = vmax.f32 %v469, 0.0
        %v559 = vmax.f32 %v472, 0.0
        %v560 = vmax.f32 %v475, 0.0
        %v561 = vmax.f32 %v478, 0.0
        %v562 = vmax.f32 %v481, 0.0
        %v563 = vmax.f32 %v484, 0.0
        %v564 = vmax.f32 %v487, 0.0
        %v565 = vmax.f32 %v490, 0.0
        %v566 = vmax.f32 %v493, 0.0
        %v567 = vmax.f32 %v496, 0.0
        %v568 = vmax.f32 %v499, 0.0
        %v569 = vmax.f32 %v502, 0.0
        %v570 = vmax.f32 %v505, 0.0
        %v571 = vmax.f32 %v508, 0.0
        %v572 = vmax.f32 %v511, 0.0
        %v573 = vmax.f32 %v514, 0.0
        %v574 = vmax.f32 %v517, 0.0
        %v575 = vmax.f32 %v520, 0.0
        %v576 = vmax.f32 %v523, 0.0
        %v577 = vmax.f32 %v526, 0.0
        %v578 = vmax.f32 %v529, 0.0
        %v579 = vmax.f32 %v532, 0.0
        %v580 = vmax.f32 %v535, 0.0
        %v581 = vmax.f32 %v538, 0.0
        %v582 = vmax.f32 %v541, 0.0
        %v583 = vmax.f32 %v544, 0.0
        %v584 = vmax.f32 %v547, 0.0
        %v585 = vmin.f32 %v549, 6.0
        %v586 = vmin.f32 %v550, 6.0
        %v587 = vmin.f32 %v551, 6.0
        %v588 = vmin.f32 %v552, 6.0
        %v589 = vmin.f32 %v553, 6.0
        %v590 = vmin.f32 %v554, 6.0
        %v591 = vmin.f32 %v555, 6.0
        %v592 = vmin.f32 %v556, 6.0
        %v593 = vmin.f32 %v557, 6.0
        %v594 = vmin.f32 %v558, 6.0
        %v595 = vmin.f32 %v559, 6.0
        %v596 = vmin.f32 %v560, 6.0
        %v597 = vmin.f32 %v561, 6.0
        %v598 = vmin.f32 %v562, 6.0
        %v599 = vmin.f32 %v563, 6.0
        %v600 = vmin.f32 %v564, 6.0
        %v601 = vmin.f32 %v565, 6.0
        %v602 = vmin.f32 %v566, 6.0
        %v603 = vmin.f32 %v567, 6.0
        %v604 = vmin.f32 %v568, 6.0
        %v605 = vmin.f32 %v569, 6.0
        %v606 = vmin.f32 %v570, 6.0
        %v607 = vmin.f32 %v571, 6.0
        %v608 = vmin.f32 %v572, 6.0
        %v609 = vmin.f32 %v573, 6.0
        %v610 = vmin.f32 %v574, 6.0
        %v611 = vmin.f32 %v575, 6.0
        %v612 = vmin.f32 %v576, 6.0
        %v613 = vmin.f32 %v577, 6.0
        %v614 = vmin.f32 %v578, 6.0
        %v615 = vmin.f32 %v579, 6.0
        %v616 = vmin.f32 %v580, 6.0
        %v617 = vmin.f32 %v581, 6.0
        %v618 = vmin.f32 %v582, 6.0
        %v619 = vmin.f32 %v583, 6.0
        %v620 = vmin.f32 %v584, 6.0
        %v621 = vlaneseq
        %v622 = vshrl.u32 %v621, 7
        %v623 = vadd.s32 %v622, 8
        %v624 = vadd.s32 %v622, 16
        %v625 = vadd.s32 %v622, 24
        %v626 = vadd.s32 %v622, 32
        %v627 = vadd.s32 %v622, 40
        %v628 = vadd.s32 %v622, 48
        %v629 = vadd.s32 %v622, 56
        %v630 = vadd.s32 %v622, 64
        %v631 = vadd.s32 %v622, 72
        %v632 = vadd.s32 %v622, 80
        %v633 = vadd.s32 %v622, 88
        %v634 = vadd.s32 %v622, 96
        %v635 = vadd.s32 %v622, 104
        %v636 = vadd.s32 %v622, 112
        %v637 = vadd.s32 %v622, 120
        %v638 = vadd.s32 %v622, 128
        %v639 = vadd.s32 %v622, 136
        %v640 = vadd.s32 %v622, 144
        %v641 = vadd.s32 %v622, 152
        %v642 = vadd.s32 %v622, 160
        %v643 = vadd.s32 %v622, 168
        %v644 = vadd.s32 %v622, 176
        %v645 = vadd.s32 %v622, 184
        %v646 = vadd.s32 %v622, 192
        %v647 = vadd.s32 %v622, 200
        %v648 = vadd.s32 %v622, 208
        %v649 = vadd.s32 %v622, 216
        %v650 = vadd.s32 %v622, 224
        %v651 = vadd.s32 %v622, 232
        %v652 = vadd.s32 %v622, 240
        %v653 = vadd.s32 %v622, 248
        %v654 = vadd.s32 %v622, 256
        %v655 = vadd.s32 %v622, 264
        %v656 = vadd.s32 %v622, 272
        %v657 = vadd.s32 %v622, 280
        %s658 = ssub.s32 1, %s363
        %s659 = smul.u32 %s658, 16
        %v660 = vstv %s659
        %vm661 = vcmp.ge.s32.totalorder %v622, %v660
        %vm662 = vcmp.ge.s32.totalorder %v623, %v660
        %vm663 = vcmp.ge.s32.totalorder %v624, %v660
        %vm664 = vcmp.ge.s32.totalorder %v625, %v660
        %vm665 = vcmp.ge.s32.totalorder %v626, %v660
        %vm666 = vcmp.ge.s32.totalorder %v627, %v660
        %vm667 = vcmp.ge.s32.totalorder %v628, %v660
        %vm668 = vcmp.ge.s32.totalorder %v629, %v660
        %vm669 = vcmp.ge.s32.totalorder %v630, %v660
        %vm670 = vcmp.ge.s32.totalorder %v631, %v660
        %vm671 = vcmp.ge.s32.totalorder %v632, %v660
        %vm672 = vcmp.ge.s32.totalorder %v633, %v660
        %vm673 = vcmp.ge.s32.totalorder %v634, %v660
        %vm674 = vcmp.ge.s32.totalorder %v635, %v660
        %vm675 = vcmp.ge.s32.totalorder %v636, %v660
        %vm676 = vcmp.ge.s32.totalorder %v637, %v660
        %vm677 = vcmp.ge.s32.totalorder %v638, %v660
        %vm678 = vcmp.ge.s32.totalorder %v639, %v660
        %vm679 = vcmp.ge.s32.totalorder %v640, %v660
        %vm680 = vcmp.ge.s32.totalorder %v641, %v660
        %vm681 = vcmp.ge.s32.totalorder %v642, %v660
        %vm682 = vcmp.ge.s32.totalorder %v643, %v660
        %vm683 = vcmp.ge.s32.totalorder %v644, %v660
        %vm684 = vcmp.ge.s32.totalorder %v645, %v660
        %vm685 = vcmp.ge.s32.totalorder %v646, %v660
        %vm686 = vcmp.ge.s32.totalorder %v647, %v660
        %vm687 = vcmp.ge.s32.totalorder %v648, %v660
        %vm688 = vcmp.ge.s32.totalorder %v649, %v660
        %vm689 = vcmp.ge.s32.totalorder %v650, %v660
        %vm690 = vcmp.ge.s32.totalorder %v651, %v660
        %vm691 = vcmp.ge.s32.totalorder %v652, %v660
        %vm692 = vcmp.ge.s32.totalorder %v653, %v660
        %vm693 = vcmp.ge.s32.totalorder %v654, %v660
        %vm694 = vcmp.ge.s32.totalorder %v655, %v660
        %vm695 = vcmp.ge.s32.totalorder %v656, %v660
        %vm696 = vcmp.ge.s32.totalorder %v657, %v660
        %s697 = ssub.s32 17, %s363
        %s698 = smul.u32 %s697, 16
        %v699 = vstv %s698
        %vm700 = vcmp.lt.s32.totalorder %v622, %v699
        %vm701 = vcmp.lt.s32.totalorder %v623, %v699
        %vm702 = vcmp.lt.s32.totalorder %v624, %v699
        %vm703 = vcmp.lt.s32.totalorder %v625, %v699
        %vm704 = vcmp.lt.s32.totalorder %v626, %v699
        %vm705 = vcmp.lt.s32.totalorder %v627, %v699
        %vm706 = vcmp.lt.s32.totalorder %v628, %v699
        %vm707 = vcmp.lt.s32.totalorder %v629, %v699
        %vm708 = vcmp.lt.s32.totalorder %v630, %v699
        %vm709 = vcmp.lt.s32.totalorder %v631, %v699
        %vm710 = vcmp.lt.s32.totalorder %v632, %v699
        %vm711 = vcmp.lt.s32.totalorder %v633, %v699
        %vm712 = vcmp.lt.s32.totalorder %v634, %v699
        %vm713 = vcmp.lt.s32.totalorder %v635, %v699
        %vm714 = vcmp.lt.s32.totalorder %v636, %v699
        %vm715 = vcmp.lt.s32.totalorder %v637, %v699
        %vm716 = vcmp.lt.s32.totalorder %v638, %v699
        %vm717 = vcmp.lt.s32.totalorder %v639, %v699
        %vm718 = vcmp.lt.s32.totalorder %v640, %v699
        %vm719 = vcmp.lt.s32.totalorder %v641, %v699
        %vm720 = vcmp.lt.s32.totalorder %v642, %v699
        %vm721 = vcmp.lt.s32.totalorder %v643, %v699
        %vm722 = vcmp.lt.s32.totalorder %v644, %v699
        %vm723 = vcmp.lt.s32.totalorder %v645, %v699
        %vm724 = vcmp.lt.s32.totalorder %v646, %v699
        %vm725 = vcmp.lt.s32.totalorder %v647, %v699
        %vm726 = vcmp.lt.s32.totalorder %v648, %v699
        %vm727 = vcmp.lt.s32.totalorder %v649, %v699
        %vm728 = vcmp.lt.s32.totalorder %v650, %v699
        %vm729 = vcmp.lt.s32.totalorder %v651, %v699
        %vm730 = vcmp.lt.s32.totalorder %v652, %v699
        %vm731 = vcmp.lt.s32.totalorder %v653, %v699
        %vm732 = vcmp.lt.s32.totalorder %v654, %v699
        %vm733 = vcmp.lt.s32.totalorder %v655, %v699
        %vm734 = vcmp.lt.s32.totalorder %v656, %v699
        %vm735 = vcmp.lt.s32.totalorder %v657, %v699
        %vm736 = vmand %vm661, %vm700
        %vm737 = vmand %vm662, %vm701
        %vm738 = vmand %vm663, %vm702
        %vm739 = vmand %vm664, %vm703
        %vm740 = vmand %vm665, %vm704
        %vm741 = vmand %vm666, %vm705
        %vm742 = vmand %vm667, %vm706
        %vm743 = vmand %vm668, %vm707
        %vm744 = vmand %vm669, %vm708
        %vm745 = vmand %vm670, %vm709
        %vm746 = vmand %vm671, %vm710
        %vm747 = vmand %vm672, %vm711
        %vm748 = vmand %vm673, %vm712
        %vm749 = vmand %vm674, %vm713
        %vm750 = vmand %vm675, %vm714
        %vm751 = vmand %vm676, %vm715
        %vm752 = vmand %vm677, %vm716
        %vm753 = vmand %vm678, %vm717
        %vm754 = vmand %vm679, %vm718
        %vm755 = vmand %vm680, %vm719
        %vm756 = vmand %vm681, %vm720
        %vm757 = vmand %vm682, %vm721
        %vm758 = vmand %vm683, %vm722
        %vm759 = vmand %vm684, %vm723
        %vm760 = vmand %vm685, %vm724
        %vm761 = vmand %vm686, %vm725
        %vm762 = vmand %vm687, %vm726
        %vm763 = vmand %vm688, %vm727
        %vm764 = vmand %vm689, %vm728
        %vm765 = vmand %vm690, %vm729
        %vm766 = vmand %vm691, %vm730
        %vm767 = vmand %vm692, %vm731
        %vm768 = vmand %vm693, %vm732
        %vm769 = vmand %vm694, %vm733
        %vm770 = vmand %vm695, %vm734
        %vm771 = vmand %vm696, %vm735
        %v772 = vsel %vm736, 1, 0
        %v773 = vsel %vm737, 1, 0
        %v774 = vsel %vm738, 1, 0
        %v775 = vsel %vm739, 1, 0
        %v776 = vsel %vm740, 1, 0
        %v777 = vsel %vm741, 1, 0
        %v778 = vsel %vm742, 1, 0
        %v779 = vsel %vm743, 1, 0
        %v780 = vsel %vm744, 1, 0
        %v781 = vsel %vm745, 1, 0
        %v782 = vsel %vm746, 1, 0
        %v783 = vsel %vm747, 1, 0
        %v784 = vsel %vm748, 1, 0
        %v785 = vsel %vm749, 1, 0
        %v786 = vsel %vm750, 1, 0
        %v787 = vsel %vm751, 1, 0
        %v788 = vsel %vm752, 1, 0
        %v789 = vsel %vm753, 1, 0
        %v790 = vsel %vm754, 1, 0
        %v791 = vsel %vm755, 1, 0
        %v792 = vsel %vm756, 1, 0
        %v793 = vsel %vm757, 1, 0
        %v794 = vsel %vm758, 1, 0
        %v795 = vsel %vm759, 1, 0
        %v796 = vsel %vm760, 1, 0
        %v797 = vsel %vm761, 1, 0
        %v798 = vsel %vm762, 1, 0
        %v799 = vsel %vm763, 1, 0
        %v800 = vsel %vm764, 1, 0
        %v801 = vsel %vm765, 1, 0
        %v802 = vsel %vm766, 1, 0
        %v803 = vsel %vm767, 1, 0
        %v804 = vsel %vm768, 1, 0
        %v805 = vsel %vm769, 1, 0
        %v806 = vsel %vm770, 1, 0
        %v807 = vsel %vm771, 1, 0
        %vm808 = vcmp.eq.s32.totalorder %v772, 1
        %vm809 = vcmp.eq.s32.totalorder %v773, 1
        %vm810 = vcmp.eq.s32.totalorder %v774, 1
        %vm811 = vcmp.eq.s32.totalorder %v775, 1
        %vm812 = vcmp.eq.s32.totalorder %v776, 1
        %vm813 = vcmp.eq.s32.totalorder %v777, 1
        %vm814 = vcmp.eq.s32.totalorder %v778, 1
        %vm815 = vcmp.eq.s32.totalorder %v779, 1
        %vm816 = vcmp.eq.s32.totalorder %v780, 1
        %vm817 = vcmp.eq.s32.totalorder %v781, 1
        %vm818 = vcmp.eq.s32.totalorder %v782, 1
        %vm819 = vcmp.eq.s32.totalorder %v783, 1
        %vm820 = vcmp.eq.s32.totalorder %v784, 1
        %vm821 = vcmp.eq.s32.totalorder %v785, 1
        %vm822 = vcmp.eq.s32.totalorder %v786, 1
        %vm823 = vcmp.eq.s32.totalorder %v787, 1
        %vm824 = vcmp.eq.s32.totalorder %v788, 1
        %vm825 = vcmp.eq.s32.totalorder %v789, 1
        %vm826 = vcmp.eq.s32.totalorder %v790, 1
        %vm827 = vcmp.eq.s32.totalorder %v791, 1
        %vm828 = vcmp.eq.s32.totalorder %v792, 1
        %vm829 = vcmp.eq.s32.totalorder %v793, 1
        %vm830 = vcmp.eq.s32.totalorder %v794, 1
        %vm831 = vcmp.eq.s32.totalorder %v795, 1
        %vm832 = vcmp.eq.s32.totalorder %v796, 1
        %vm833 = vcmp.eq.s32.totalorder %v797, 1
        %vm834 = vcmp.eq.s32.totalorder %v798, 1
        %vm835 = vcmp.eq.s32.totalorder %v799, 1
        %vm836 = vcmp.eq.s32.totalorder %v800, 1
        %vm837 = vcmp.eq.s32.totalorder %v801, 1
        %vm838 = vcmp.eq.s32.totalorder %v802, 1
        %vm839 = vcmp.eq.s32.totalorder %v803, 1
        %vm840 = vcmp.eq.s32.totalorder %v804, 1
        %vm841 = vcmp.eq.s32.totalorder %v805, 1
        %vm842 = vcmp.eq.s32.totalorder %v806, 1
        %vm843 = vcmp.eq.s32.totalorder %v807, 1
        %v844 = vsel %vm808, %v585, 0.0
        %v845 = vsel %vm809, %v586, 0.0
        %v846 = vsel %vm810, %v587, 0.0
        %v847 = vsel %vm811, %v588, 0.0
        %v848 = vsel %vm812, %v589, 0.0
        %v849 = vsel %vm813, %v590, 0.0
        %v850 = vsel %vm814, %v591, 0.0
        %v851 = vsel %vm815, %v592, 0.0
        %v852 = vsel %vm816, %v593, 0.0
        %v853 = vsel %vm817, %v594, 0.0
        %v854 = vsel %vm818, %v595, 0.0
        %v855 = vsel %vm819, %v596, 0.0
        %v856 = vsel %vm820, %v597, 0.0
        %v857 = vsel %vm821, %v598, 0.0
        %v858 = vsel %vm822, %v599, 0.0
        %v859 = vsel %vm823, %v600, 0.0
        %v860 = vsel %vm824, %v601, 0.0
        %v861 = vsel %vm825, %v602, 0.0
        %v862 = vsel %vm826, %v603, 0.0
        %v863 = vsel %vm827, %v604, 0.0
        %v864 = vsel %vm828, %v605, 0.0
        %v865 = vsel %vm829, %v606, 0.0
        %v866 = vsel %vm830, %v607, 0.0
        %v867 = vsel %vm831, %v608, 0.0
        %v868 = vsel %vm832, %v609, 0.0
        %v869 = vsel %vm833, %v610, 0.0
        %v870 = vsel %vm834, %v611, 0.0
        %v871 = vsel %vm835, %v612, 0.0
        %v872 = vsel %vm836, %v613, 0.0
        %v873 = vsel %vm837, %v614, 0.0
        %v874 = vsel %vm838, %v615, 0.0
        %v875 = vsel %vm839, %v616, 0.0
        %v876 = vsel %vm840, %v617, 0.0
        %v877 = vsel %vm841, %v618, 0.0
        %v878 = vsel %vm842, %v619, 0.0
        %v879 = vsel %vm843, %v620, 0.0
        %880 = vst [vmem:[#allocation2 + $0x8] sm:$0xff] %v844
        %881 = vst [vmem:[#allocation2 + $0x10] sm:$0xff] %v845
        %882 = vst [vmem:[#allocation2 + $0x18] sm:$0xff] %v846
        %883 = vst [vmem:[#allocation2 + $0x20] sm:$0xff] %v847
        %884 = vst [vmem:[#allocation2 + $0x28] sm:$0xff] %v848
        %885 = vst [vmem:[#allocation2 + $0x30] sm:$0xff] %v849
        %886 = vst [vmem:[#allocation2 + $0x38] sm:$0xff] %v850
        %887 = vst [vmem:[#allocation2 + $0x40] sm:$0xff] %v851
        %888 = vst [vmem:[#allocation2 + $0x48] sm:$0xff] %v852
        %889 = vst [vmem:[#allocation2 + $0x50] sm:$0xff] %v853
        %890 = vst [vmem:[#allocation2 + $0x58] sm:$0xff] %v854
        %891 = vst [vmem:[#allocation2 + $0x60] sm:$0xff] %v855
        %892 = vst [vmem:[#allocation2 + $0x68] sm:$0xff] %v856
        %893 = vst [vmem:[#allocation2 + $0x70] sm:$0xff] %v857
        %894 = vst [vmem:[#allocation2 + $0x78] sm:$0xff] %v858
        %895 = vst [vmem:[#allocation2 + $0x80] sm:$0xff] %v859
        %896 = vst [vmem:[#allocation2 + $0x88] sm:$0xff] %v860
        %897 = vst [vmem:[#allocation2 + $0x90] sm:$0xff] %v861
        %898 = vst [vmem:[#allocation2 + $0x98] sm:$0xff] %v862
        %899 = vst [vmem:[#allocation2 + $0xa0] sm:$0xff] %v863
        %900 = vst [vmem:[#allocation2 + $0xa8] sm:$0xff] %v864
        %901 = vst [vmem:[#allocation2 + $0xb0] sm:$0xff] %v865
        %902 = vst [vmem:[#allocation2 + $0xb8] sm:$0xff] %v866
        %903 = vst [vmem:[#allocation2 + $0xc0] sm:$0xff] %v867
        %904 = vst [vmem:[#allocation2 + $0xc8] sm:$0xff] %v868
        %905 = vst [vmem:[#allocation2 + $0xd0] sm:$0xff] %v869
        %906 = vst [vmem:[#allocation2 + $0xd8] sm:$0xff] %v870
        %907 = vst [vmem:[#allocation2 + $0xe0] sm:$0xff] %v871
        %908 = vst [vmem:[#allocation2 + $0xe8] sm:$0xff] %v872
        %909 = vst [vmem:[#allocation2 + $0xf0] sm:$0xff] %v873
        %910 = vst [vmem:[#allocation2 + $0xf8] sm:$0xff] %v874
        %911 = vst [vmem:[#allocation2 + $0x100] sm:$0xff] %v875
        %912 = vst [vmem:[#allocation2 + $0x108] sm:$0xff] %v876
        %913 = vst [vmem:[#allocation2 + $0x110] sm:$0xff] %v877
        %914 = vst [vmem:[#allocation2 + $0x118] sm:$0xff] %v878
        %915 = vst [vmem:[#allocation2 + $0x120] sm:$0xff] %v879
        %v916 = vld [vmem:[#allocation9] sm:$0x1]
        %v917 = vld [vmem:[#allocation9 + $0x1] sm:$0x1]
        %v918 = vld [vmem:[#allocation9 + $0x2] sm:$0x1]
        %s919 = scalar_lea.vmem [#allocation9], 4
        %v920 = vld [vmem:[%s919] sm:$0x1]
        %v921 = vld [vmem:[%s919 + $0x1] sm:$0x1]
        %v922 = vld [vmem:[%s919 + $0x2] sm:$0x1]
        %s923 = scalar_lea.vmem [#allocation9], 8
        %v924 = vld [vmem:[%s923] sm:$0x1]
        %v925 = vld [vmem:[%s923 + $0x1] sm:$0x1]
        %v926 = vld [vmem:[%s923 + $0x2] sm:$0x1]
        %v927 = vld [vmem:[%s4] sm:$0x1]
        %vm928 = vcmp.gt.s32.totalorder %v622, 0
        %vm929 = vcmp.gt.s32.totalorder %v623, 0
        %vm930 = vcmp.lt.s32.totalorder %v622, 15
        %vm931 = vcmp.lt.s32.totalorder %v623, 15
        %v932 = vld [vmem:[#allocation2 + $0x7] sm:$0xff]
        %v933 = vld [vmem:[#allocation2 + $0xf] sm:$0xff]
        %v934 = vsel %vm928, 1, 0
        %v935 = vsel %vm929, 1, 0
        %vm936 = vcmp.eq.s32.totalorder %v934, 1
        %vm937 = vcmp.eq.s32.totalorder %v935, 1
        %v938 = vsel %vm936, %v932, 0.0
        %v939 = vsel %vm937, %v933, 0.0
        %v940 = vperm.slane %v916, 0
        %v941 = vmul.f32 %v938, %v940
        %v942 = vmul.f32 %v939, %v940
        %v943 = vld [vmem:[#allocation2 + $0x8] sm:$0xff]
        %v944 = vld [vmem:[#allocation2 + $0x10] sm:$0xff]
        %v945 = vperm.slane %v917, 0
        %v946 = vmul.f32 %v943, %v945
        %v947 = vmul.f32 %v944, %v945
        %v948 = vadd.f32 %v941, %v946
        %v949 = vadd.f32 %v942, %v947
        %v950 = vld [vmem:[#allocation2 + $0x9] sm:$0xff]
        %v951 = vld [vmem:[#allocation2 + $0x11] sm:$0xff]
        %v952 = vsel %vm930, 1, 0
        %v953 = vsel %vm931, 1, 0
        %vm954 = vcmp.eq.s32.totalorder %v952, 1
        %vm955 = vcmp.eq.s32.totalorder %v953, 1
        %v956 = vsel %vm954, %v950, 0.0
        %v957 = vsel %vm955, %v951, 0.0
        %v958 = vperm.slane %v918, 0
        %v959 = vmul.f32 %v956, %v958
        %v960 = vmul.f32 %v957, %v958
        %v961 = vadd.f32 %v948, %v959
        %v962 = vadd.f32 %v949, %v960
        %v963 = vld [vmem:[#allocation2 + $0x17] sm:$0xff]
        %v964 = vld [vmem:[#allocation2 + $0x1f] sm:$0xff]
        %v965 = vsel %vm936, %v963, 0.0
        %v966 = vsel %vm937, %v964, 0.0
        %v967 = vperm.slane %v920, 0
        %v968 = vmul.f32 %v965, %v967
        %v969 = vmul.f32 %v966, %v967
        %v970 = vadd.f32 %v961, %v968
        %v971 = vadd.f32 %v962, %v969
        %v972 = vld [vmem:[#allocation2 + $0x18] sm:$0xff]
        %v973 = vld [vmem:[#allocation2 + $0x20] sm:$0xff]
        %v974 = vperm.slane %v921, 0
        %v975 = vmul.f32 %v972, %v974
        %v976 = vmul.f32 %v973, %v974
        %v977 = vadd.f32 %v970, %v975
        %v978 = vadd.f32 %v971, %v976
        %v979 = vld [vmem:[#allocation2 + $0x19] sm:$0xff]
        %v980 = vld [vmem:[#allocation2 + $0x21] sm:$0xff]
        %v981 = vsel %vm954, %v979, 0.0
        %v982 = vsel %vm955, %v980, 0.0
        %v983 = vperm.slane %v922, 0
        %v984 = vmul.f32 %v981, %v983
        %v985 = vmul.f32 %v982, %v983
        %v986 = vadd.f32 %v977, %v984
        %v987 = vadd.f32 %v978, %v985
        %v988 = vld [vmem:[#allocation2 + $0x27] sm:$0xff]
        %v989 = vld [vmem:[#allocation2 + $0x2f] sm:$0xff]
        %v990 = vsel %vm936, %v988, 0.0
        %v991 = vsel %vm937, %v989, 0.0
        %v992 = vperm.slane %v924, 0
        %v993 = vmul.f32 %v990, %v992
        %v994 = vmul.f32 %v991, %v992
        %v995 = vadd.f32 %v986, %v993
        %v996 = vadd.f32 %v987, %v994
        %v997 = vld [vmem:[#allocation2 + $0x28] sm:$0xff]
        %v998 = vld [vmem:[#allocation2 + $0x30] sm:$0xff]
        %v999 = vperm.slane %v925, 0
        %v1000 = vmul.f32 %v997, %v999
        %v1001 = vmul.f32 %v998, %v999
        %v1002 = vadd.f32 %v995, %v1000
        %v1003 = vadd.f32 %v996, %v1001
        %v1004 = vld [vmem:[#allocation2 + $0x29] sm:$0xff]
        %v1005 = vld [vmem:[#allocation2 + $0x31] sm:$0xff]
        %v1006 = vsel %vm954, %v1004, 0.0
        %v1007 = vsel %vm955, %v1005, 0.0
        %v1008 = vperm.slane %v926, 0
        %v1009 = vmul.f32 %v1006, %v1008
        %v1010 = vmul.f32 %v1007, %v1008
        %v1011 = vadd.f32 %v1002, %v1009
        %v1012 = vadd.f32 %v1003, %v1010
        %v1014 = vperm.slane %v927, 0
        %v1016 = vadd.f32 %v1011, %v1014
        %v1017 = vadd.f32 %v1012, %v1014
        %v1018 = vmax.f32 %v1016, 0.0
        %v1019 = vmax.f32 %v1017, 0.0
        %v1020 = vmin.f32 %v1018, 6.0
        %v1021 = vmin.f32 %v1019, 6.0
        %1022 = vst [vmem:[#allocation3] sm:$0xff] %v1020
        %1023 = vst [vmem:[#allocation3 + $0x8] sm:$0xff] %v1021
        %v1024 = vld [vmem:[#allocation2 + $0x17] sm:$0xff]
        %v1025 = vld [vmem:[#allocation2 + $0x1f] sm:$0xff]
        %v1026 = vsel %vm936, %v1024, 0.0
        %v1027 = vsel %vm937, %v1025, 0.0
        %v1028 = vmul.f32 %v1026, %v940
        %v1029 = vmul.f32 %v1027, %v940
        %v1030 = vld [vmem:[#allocation2 + $0x18] sm:$0xff]
        %v1031 = vld [vmem:[#allocation2 + $0x20] sm:$0xff]
        %v1032 = vmul.f32 %v1030, %v945
        %v1033 = vmul.f32 %v1031, %v945
        %v1034 = vadd.f32 %v1028, %v1032
        %v1035 = vadd.f32 %v1029, %v1033
        %v1036 = vld [vmem:[#allocation2 + $0x19] sm:$0xff]
        %v1037 = vld [vmem:[#allocation2 + $0x21] sm:$0xff]
        %v1038 = vsel %vm954, %v1036, 0.0
        %v1039 = vsel %vm955, %v1037, 0.0
        %v1040 = vmul.f32 %v1038, %v958
        %v1041 = vmul.f32 %v1039, %v958
        %v1042 = vadd.f32 %v1034, %v1040
        %v1043 = vadd.f32 %v1035, %v1041
        %v1044 = vld [vmem:[#allocation2 + $0x27] sm:$0xff]
        %v1045 = vld [vmem:[#allocation2 + $0x2f] sm:$0xff]
        %v1046 = vsel %vm936, %v1044, 0.0
        %v1047 = vsel %vm937, %v1045, 0.0
        %v1048 = vmul.f32 %v1046, %v967
        %v1049 = vmul.f32 %v1047, %v967
        %v1050 = vadd.f32 %v1042, %v1048
        %v1051 = vadd.f32 %v1043, %v1049
        %v1052 = vld [vmem:[#allocation2 + $0x28] sm:$0xff]
        %v1053 = vld [vmem:[#allocation2 + $0x30] sm:$0xff]
        %v1054 = vmul.f32 %v1052, %v974
        %v1055 = vmul.f32 %v1053, %v974
        %v1056 = vadd.f32 %v1050, %v1054
        %v1057 = vadd.f32 %v1051, %v1055
        %v1058 = vld [vmem:[#allocation2 + $0x29] sm:$0xff]
        %v1059 = vld [vmem:[#allocation2 + $0x31] sm:$0xff]
        %v1060 = vsel %vm954, %v1058, 0.0
        %v1061 = vsel %vm955, %v1059, 0.0
        %v1062 = vmul.f32 %v1060, %v983
        %v1063 = vmul.f32 %v1061, %v983
        %v1064 = vadd.f32 %v1056, %v1062
        %v1065 = vadd.f32 %v1057, %v1063
        %v1066 = vld [vmem:[#allocation2 + $0x37] sm:$0xff]
        %v1067 = vld [vmem:[#allocation2 + $0x3f] sm:$0xff]
        %v1068 = vsel %vm936, %v1066, 0.0
        %v1069 = vsel %vm937, %v1067, 0.0
        %v1070 = vmul.f32 %v1068, %v992
        %v1071 = vmul.f32 %v1069, %v992
        %v1072 = vadd.f32 %v1064, %v1070
        %v1073 = vadd.f32 %v1065, %v1071
        %v1074 = vld [vmem:[#allocation2 + $0x38] sm:$0xff]
        %v1075 = vld [vmem:[#allocation2 + $0x40] sm:$0xff]
        %v1076 = vmul.f32 %v1074, %v999
        %v1077 = vmul.f32 %v1075, %v999
        %v1078 = vadd.f32 %v1072, %v1076
        %v1079 = vadd.f32 %v1073, %v1077
        %v1080 = vld [vmem:[#allocation2 + $0x39] sm:$0xff]
        %v1081 = vld [vmem:[#allocation2 + $0x41] sm:$0xff]
        %v1082 = vsel %vm954, %v1080, 0.0
        %v1083 = vsel %vm955, %v1081, 0.0
        %v1084 = vmul.f32 %v1082, %v1008
        %v1085 = vmul.f32 %v1083, %v1008
        %v1086 = vadd.f32 %v1078, %v1084
        %v1087 = vadd.f32 %v1079, %v1085
        %v1088 = vadd.f32 %v1086, %v1014
        %v1089 = vadd.f32 %v1087, %v1014
        %v1090 = vmax.f32 %v1088, 0.0
        %v1091 = vmax.f32 %v1089, 0.0
        %v1092 = vmin.f32 %v1090, 6.0
        %v1093 = vmin.f32 %v1091, 6.0
        %1094 = vst [vmem:[#allocation3 + $0x10] sm:$0xff] %v1092
        %1095 = vst [vmem:[#allocation3 + $0x18] sm:$0xff] %v1093
        %v1096 = vld [vmem:[#allocation2 + $0x27] sm:$0xff]
        %v1097 = vld [vmem:[#allocation2 + $0x2f] sm:$0xff]
        %v1098 = vsel %vm936, %v1096, 0.0
        %v1099 = vsel %vm937, %v1097, 0.0
        %v1100 = vmul.f32 %v1098, %v940
        %v1101 = vmul.f32 %v1099, %v940
        %v1102 = vld [vmem:[#allocation2 + $0x28] sm:$0xff]
        %v1103 = vld [vmem:[#allocation2 + $0x30] sm:$0xff]
        %v1104 = vmul.f32 %v1102, %v945
        %v1105 = vmul.f32 %v1103, %v945
        %v1106 = vadd.f32 %v1100, %v1104
        %v1107 = vadd.f32 %v1101, %v1105
        %v1108 = vld [vmem:[#allocation2 + $0x29] sm:$0xff]
        %v1109 = vld [vmem:[#allocation2 + $0x31] sm:$0xff]
        %v1110 = vsel %vm954, %v1108, 0.0
        %v1111 = vsel %vm955, %v1109, 0.0
        %v1112 = vmul.f32 %v1110, %v958
        %v1113 = vmul.f32 %v1111, %v958
        %v1114 = vadd.f32 %v1106, %v1112
        %v1115 = vadd.f32 %v1107, %v1113
        %v1116 = vld [vmem:[#allocation2 + $0x37] sm:$0xff]
        %v1117 = vld [vmem:[#allocation2 + $0x3f] sm:$0xff]
        %v1118 = vsel %vm936, %v1116, 0.0
        %v1119 = vsel %vm937, %v1117, 0.0
        %v1120 = vmul.f32 %v1118, %v967
        %v1121 = vmul.f32 %v1119, %v967
        %v1122 = vadd.f32 %v1114, %v1120
        %v1123 = vadd.f32 %v1115, %v1121
        %v1124 = vld [vmem:[#allocation2 + $0x38] sm:$0xff]
        %v1125 = vld [vmem:[#allocation2 + $0x40] sm:$0xff]
        %v1126 = vmul.f32 %v1124, %v974
        %v1127 = vmul.f32 %v1125, %v974
        %v1128 = vadd.f32 %v1122, %v1126
        %v1129 = vadd.f32 %v1123, %v1127
        %v1130 = vld [vmem:[#allocation2 + $0x39] sm:$0xff]
        %v1131 = vld [vmem:[#allocation2 + $0x41] sm:$0xff]
        %v1132 = vsel %vm954, %v1130, 0.0
        %v1133 = vsel %vm955, %v1131, 0.0
        %v1134 = vmul.f32 %v1132, %v983
        %v1135 = vmul.f32 %v1133, %v983
        %v1136 = vadd.f32 %v1128, %v1134
        %v1137 = vadd.f32 %v1129, %v1135
        %v1138 = vld [vmem:[#allocation2 + $0x47] sm:$0xff]
        %v1139 = vld [vmem:[#allocation2 + $0x4f] sm:$0xff]
        %v1140 = vsel %vm936, %v1138, 0.0
        %v1141 = vsel %vm937, %v1139, 0.0
        %v1142 = vmul.f32 %v1140, %v992
        %v1143 = vmul.f32 %v1141, %v992
        %v1144 = vadd.f32 %v1136, %v1142
        %v1145 = vadd.f32 %v1137, %v1143
        %v1146 = vld [vmem:[#allocation2 + $0x48] sm:$0xff]
        %v1147 = vld [vmem:[#allocation2 + $0x50] sm:$0xff]
        %v1148 = vmul.f32 %v1146, %v999
        %v1149 = vmul.f32 %v1147, %v999
        %v1150 = vadd.f32 %v1144, %v1148
        %v1151 = vadd.f32 %v1145, %v1149
        %v1152 = vld [vmem:[#allocation2 + $0x49] sm:$0xff]
        %v1153 = vld [vmem:[#allocation2 + $0x51] sm:$0xff]
        %v1154 = vsel %vm954, %v1152, 0.0
        %v1155 = vsel %vm955, %v1153, 0.0
        %v1156 = vmul.f32 %v1154, %v1008
        %v1157 = vmul.f32 %v1155, %v1008
        %v1158 = vadd.f32 %v1150, %v1156
        %v1159 = vadd.f32 %v1151, %v1157
        %v1160 = vadd.f32 %v1158, %v1014
        %v1161 = vadd.f32 %v1159, %v1014
        %v1162 = vmax.f32 %v1160, 0.0
        %v1163 = vmax.f32 %v1161, 0.0
        %v1164 = vmin.f32 %v1162, 6.0
        %v1165 = vmin.f32 %v1163, 6.0
        %1166 = vst [vmem:[#allocation3 + $0x20] sm:$0xff] %v1164
        %1167 = vst [vmem:[#allocation3 + $0x28] sm:$0xff] %v1165
        %v1168 = vld [vmem:[#allocation2 + $0x37] sm:$0xff]
        %v1169 = vld [vmem:[#allocation2 + $0x3f] sm:$0xff]
        %v1170 = vsel %vm936, %v1168, 0.0
        %v1171 = vsel %vm937, %v1169, 0.0
        %v1172 = vmul.f32 %v1170, %v940
        %v1173 = vmul.f32 %v1171, %v940
        %v1174 = vld [vmem:[#allocation2 + $0x38] sm:$0xff]
        %v1175 = vld [vmem:[#allocation2 + $0x40] sm:$0xff]
        %v1176 = vmul.f32 %v1174, %v945
        %v1177 = vmul.f32 %v1175, %v945
        %v1178 = vadd.f32 %v1172, %v1176
        %v1179 = vadd.f32 %v1173, %v1177
        %v1180 = vld [vmem:[#allocation2 + $0x39] sm:$0xff]
        %v1181 = vld [vmem:[#allocation2 + $0x41] sm:$0xff]
        %v1182 = vsel %vm954, %v1180, 0.0
        %v1183 = vsel %vm955, %v1181, 0.0
        %v1184 = vmul.f32 %v1182, %v958
        %v1185 = vmul.f32 %v1183, %v958
        %v1186 = vadd.f32 %v1178, %v1184
        %v1187 = vadd.f32 %v1179, %v1185
        %v1188 = vld [vmem:[#allocation2 + $0x47] sm:$0xff]
        %v1189 = vld [vmem:[#allocation2 + $0x4f] sm:$0xff]
        %v1190 = vsel %vm936, %v1188, 0.0
        %v1191 = vsel %vm937, %v1189, 0.0
        %v1192 = vmul.f32 %v1190, %v967
        %v1193 = vmul.f32 %v1191, %v967
        %v1194 = vadd.f32 %v1186, %v1192
        %v1195 = vadd.f32 %v1187, %v1193
        %v1196 = vld [vmem:[#allocation2 + $0x48] sm:$0xff]
        %v1197 = vld [vmem:[#allocation2 + $0x50] sm:$0xff]
        %v1198 = vmul.f32 %v1196, %v974
        %v1199 = vmul.f32 %v1197, %v974
        %v1200 = vadd.f32 %v1194, %v1198
        %v1201 = vadd.f32 %v1195, %v1199
        %v1202 = vld [vmem:[#allocation2 + $0x49] sm:$0xff]
        %v1203 = vld [vmem:[#allocation2 + $0x51] sm:$0xff]
        %v1204 = vsel %vm954, %v1202, 0.0
        %v1205 = vsel %vm955, %v1203, 0.0
        %v1206 = vmul.f32 %v1204, %v983
        %v1207 = vmul.f32 %v1205, %v983
        %v1208 = vadd.f32 %v1200, %v1206
        %v1209 = vadd.f32 %v1201, %v1207
        %v1210 = vld [vmem:[#allocation2 + $0x57] sm:$0xff]
        %v1211 = vld [vmem:[#allocation2 + $0x5f] sm:$0xff]
        %v1212 = vsel %vm936, %v1210, 0.0
        %v1213 = vsel %vm937, %v1211, 0.0
        %v1214 = vmul.f32 %v1212, %v992
        %v1215 = vmul.f32 %v1213, %v992
        %v1216 = vadd.f32 %v1208, %v1214
        %v1217 = vadd.f32 %v1209, %v1215
        %v1218 = vld [vmem:[#allocation2 + $0x58] sm:$0xff]
        %v1219 = vld [vmem:[#allocation2 + $0x60] sm:$0xff]
        %v1220 = vmul.f32 %v1218, %v999
        %v1221 = vmul.f32 %v1219, %v999
        %v1222 = vadd.f32 %v1216, %v1220
        %v1223 = vadd.f32 %v1217, %v1221
        %v1224 = vld [vmem:[#allocation2 + $0x59] sm:$0xff]
        %v1225 = vld [vmem:[#allocation2 + $0x61] sm:$0xff]
        %v1226 = vsel %vm954, %v1224, 0.0
        %v1227 = vsel %vm955, %v1225, 0.0
        %v1228 = vmul.f32 %v1226, %v1008
        %v1229 = vmul.f32 %v1227, %v1008
        %v1230 = vadd.f32 %v1222, %v1228
        %v1231 = vadd.f32 %v1223, %v1229
        %v1232 = vadd.f32 %v1230, %v1014
        %v1233 = vadd.f32 %v1231, %v1014
        %v1234 = vmax.f32 %v1232, 0.0
        %v1235 = vmax.f32 %v1233, 0.0
        %v1236 = vmin.f32 %v1234, 6.0
        %v1237 = vmin.f32 %v1235, 6.0
        %1238 = vst [vmem:[#allocation3 + $0x30] sm:$0xff] %v1236
        %1239 = vst [vmem:[#allocation3 + $0x38] sm:$0xff] %v1237
        %v1240 = vld [vmem:[#allocation2 + $0x47] sm:$0xff]
        %v1241 = vld [vmem:[#allocation2 + $0x4f] sm:$0xff]
        %v1242 = vsel %vm936, %v1240, 0.0
        %v1243 = vsel %vm937, %v1241, 0.0
        %v1244 = vmul.f32 %v1242, %v940
        %v1245 = vmul.f32 %v1243, %v940
        %v1246 = vld [vmem:[#allocation2 + $0x48] sm:$0xff]
        %v1247 = vld [vmem:[#allocation2 + $0x50] sm:$0xff]
        %v1248 = vmul.f32 %v1246, %v945
        %v1249 = vmul.f32 %v1247, %v945
        %v1250 = vadd.f32 %v1244, %v1248
        %v1251 = vadd.f32 %v1245, %v1249
        %v1252 = vld [vmem:[#allocation2 + $0x49] sm:$0xff]
        %v1253 = vld [vmem:[#allocation2 + $0x51] sm:$0xff]
        %v1254 = vsel %vm954, %v1252, 0.0
        %v1255 = vsel %vm955, %v1253, 0.0
        %v1256 = vmul.f32 %v1254, %v958
        %v1257 = vmul.f32 %v1255, %v958
        %v1258 = vadd.f32 %v1250, %v1256
        %v1259 = vadd.f32 %v1251, %v1257
        %v1260 = vld [vmem:[#allocation2 + $0x57] sm:$0xff]
        %v1261 = vld [vmem:[#allocation2 + $0x5f] sm:$0xff]
        %v1262 = vsel %vm936, %v1260, 0.0
        %v1263 = vsel %vm937, %v1261, 0.0
        %v1264 = vmul.f32 %v1262, %v967
        %v1265 = vmul.f32 %v1263, %v967
        %v1266 = vadd.f32 %v1258, %v1264
        %v1267 = vadd.f32 %v1259, %v1265
        %v1268 = vld [vmem:[#allocation2 + $0x58] sm:$0xff]
        %v1269 = vld [vmem:[#allocation2 + $0x60] sm:$0xff]
        %v1270 = vmul.f32 %v1268, %v974
        %v1271 = vmul.f32 %v1269, %v974
        %v1272 = vadd.f32 %v1266, %v1270
        %v1273 = vadd.f32 %v1267, %v1271
        %v1274 = vld [vmem:[#allocation2 + $0x59] sm:$0xff]
        %v1275 = vld [vmem:[#allocation2 + $0x61] sm:$0xff]
        %v1276 = vsel %vm954, %v1274, 0.0
        %v1277 = vsel %vm955, %v1275, 0.0
        %v1278 = vmul.f32 %v1276, %v983
        %v1279 = vmul.f32 %v1277, %v983
        %v1280 = vadd.f32 %v1272, %v1278
        %v1281 = vadd.f32 %v1273, %v1279
        %v1282 = vld [vmem:[#allocation2 + $0x67] sm:$0xff]
        %v1283 = vld [vmem:[#allocation2 + $0x6f] sm:$0xff]
        %v1284 = vsel %vm936, %v1282, 0.0
        %v1285 = vsel %vm937, %v1283, 0.0
        %v1286 = vmul.f32 %v1284, %v992
        %v1287 = vmul.f32 %v1285, %v992
        %v1288 = vadd.f32 %v1280, %v1286
        %v1289 = vadd.f32 %v1281, %v1287
        %v1290 = vld [vmem:[#allocation2 + $0x68] sm:$0xff]
        %v1291 = vld [vmem:[#allocation2 + $0x70] sm:$0xff]
        %v1292 = vmul.f32 %v1290, %v999
        %v1293 = vmul.f32 %v1291, %v999
        %v1294 = vadd.f32 %v1288, %v1292
        %v1295 = vadd.f32 %v1289, %v1293
        %v1296 = vld [vmem:[#allocation2 + $0x69] sm:$0xff]
        %v1297 = vld [vmem:[#allocation2 + $0x71] sm:$0xff]
        %v1298 = vsel %vm954, %v1296, 0.0
        %v1299 = vsel %vm955, %v1297, 0.0
        %v1300 = vmul.f32 %v1298, %v1008
        %v1301 = vmul.f32 %v1299, %v1008
        %v1302 = vadd.f32 %v1294, %v1300
        %v1303 = vadd.f32 %v1295, %v1301
        %v1304 = vadd.f32 %v1302, %v1014
        %v1305 = vadd.f32 %v1303, %v1014
        %v1306 = vmax.f32 %v1304, 0.0
        %v1307 = vmax.f32 %v1305, 0.0
        %v1308 = vmin.f32 %v1306, 6.0
        %v1309 = vmin.f32 %v1307, 6.0
        %1310 = vst [vmem:[#allocation3 + $0x40] sm:$0xff] %v1308
        %1311 = vst [vmem:[#allocation3 + $0x48] sm:$0xff] %v1309
        %v1312 = vld [vmem:[#allocation2 + $0x57] sm:$0xff]
        %v1313 = vld [vmem:[#allocation2 + $0x5f] sm:$0xff]
        %v1314 = vsel %vm936, %v1312, 0.0
        %v1315 = vsel %vm937, %v1313, 0.0
        %v1316 = vmul.f32 %v1314, %v940
        %v1317 = vmul.f32 %v1315, %v940
        %v1318 = vld [vmem:[#allocation2 + $0x58] sm:$0xff]
        %v1319 = vld [vmem:[#allocation2 + $0x60] sm:$0xff]
        %v1320 = vmul.f32 %v1318, %v945
        %v1321 = vmul.f32 %v1319, %v945
        %v1322 = vadd.f32 %v1316, %v1320
        %v1323 = vadd.f32 %v1317, %v1321
        %v1324 = vld [vmem:[#allocation2 + $0x59] sm:$0xff]
        %v1325 = vld [vmem:[#allocation2 + $0x61] sm:$0xff]
        %v1326 = vsel %vm954, %v1324, 0.0
        %v1327 = vsel %vm955, %v1325, 0.0
        %v1328 = vmul.f32 %v1326, %v958
        %v1329 = vmul.f32 %v1327, %v958
        %v1330 = vadd.f32 %v1322, %v1328
        %v1331 = vadd.f32 %v1323, %v1329
        %v1332 = vld [vmem:[#allocation2 + $0x67] sm:$0xff]
        %v1333 = vld [vmem:[#allocation2 + $0x6f] sm:$0xff]
        %v1334 = vsel %vm936, %v1332, 0.0
        %v1335 = vsel %vm937, %v1333, 0.0
        %v1336 = vmul.f32 %v1334, %v967
        %v1337 = vmul.f32 %v1335, %v967
        %v1338 = vadd.f32 %v1330, %v1336
        %v1339 = vadd.f32 %v1331, %v1337
        %v1340 = vld [vmem:[#allocation2 + $0x68] sm:$0xff]
        %v1341 = vld [vmem:[#allocation2 + $0x70] sm:$0xff]
        %v1342 = vmul.f32 %v1340, %v974
        %v1343 = vmul.f32 %v1341, %v974
        %v1344 = vadd.f32 %v1338, %v1342
        %v1345 = vadd.f32 %v1339, %v1343
        %v1346 = vld [vmem:[#allocation2 + $0x69] sm:$0xff]
        %v1347 = vld [vmem:[#allocation2 + $0x71] sm:$0xff]
        %v1348 = vsel %vm954, %v1346, 0.0
        %v1349 = vsel %vm955, %v1347, 0.0
        %v1350 = vmul.f32 %v1348, %v983
        %v1351 = vmul.f32 %v1349, %v983
        %v1352 = vadd.f32 %v1344, %v1350
        %v1353 = vadd.f32 %v1345, %v1351
        %v1354 = vld [vmem:[#allocation2 + $0x77] sm:$0xff]
        %v1355 = vld [vmem:[#allocation2 + $0x7f] sm:$0xff]
        %v1356 = vsel %vm936, %v1354, 0.0
        %v1357 = vsel %vm937, %v1355, 0.0
        %v1358 = vmul.f32 %v1356, %v992
        %v1359 = vmul.f32 %v1357, %v992
        %v1360 = vadd.f32 %v1352, %v1358
        %v1361 = vadd.f32 %v1353, %v1359
        %v1362 = vld [vmem:[#allocation2 + $0x78] sm:$0xff]
        %v1363 = vld [vmem:[#allocation2 + $0x80] sm:$0xff]
        %v1364 = vmul.f32 %v1362, %v999
        %v1365 = vmul.f32 %v1363, %v999
        %v1366 = vadd.f32 %v1360, %v1364
        %v1367 = vadd.f32 %v1361, %v1365
        %v1368 = vld [vmem:[#allocation2 + $0x79] sm:$0xff]
        %v1369 = vld [vmem:[#allocation2 + $0x81] sm:$0xff]
        %v1370 = vsel %vm954, %v1368, 0.0
        %v1371 = vsel %vm955, %v1369, 0.0
        %v1372 = vmul.f32 %v1370, %v1008
        %v1373 = vmul.f32 %v1371, %v1008
        %v1374 = vadd.f32 %v1366, %v1372
        %v1375 = vadd.f32 %v1367, %v1373
        %v1376 = vadd.f32 %v1374, %v1014
        %v1377 = vadd.f32 %v1375, %v1014
        %v1378 = vmax.f32 %v1376, 0.0
        %v1379 = vmax.f32 %v1377, 0.0
        %v1380 = vmin.f32 %v1378, 6.0
        %v1381 = vmin.f32 %v1379, 6.0
        %1382 = vst [vmem:[#allocation3 + $0x50] sm:$0xff] %v1380
        %1383 = vst [vmem:[#allocation3 + $0x58] sm:$0xff] %v1381
        %v1384 = vld [vmem:[#allocation2 + $0x67] sm:$0xff]
        %v1385 = vld [vmem:[#allocation2 + $0x6f] sm:$0xff]
        %v1386 = vsel %vm936, %v1384, 0.0
        %v1387 = vsel %vm937, %v1385, 0.0
        %v1388 = vmul.f32 %v1386, %v940
        %v1389 = vmul.f32 %v1387, %v940
        %v1390 = vld [vmem:[#allocation2 + $0x68] sm:$0xff]
        %v1391 = vld [vmem:[#allocation2 + $0x70] sm:$0xff]
        %v1392 = vmul.f32 %v1390, %v945
        %v1393 = vmul.f32 %v1391, %v945
        %v1394 = vadd.f32 %v1388, %v1392
        %v1395 = vadd.f32 %v1389, %v1393
        %v1396 = vld [vmem:[#allocation2 + $0x69] sm:$0xff]
        %v1397 = vld [vmem:[#allocation2 + $0x71] sm:$0xff]
        %v1398 = vsel %vm954, %v1396, 0.0
        %v1399 = vsel %vm955, %v1397, 0.0
        %v1400 = vmul.f32 %v1398, %v958
        %v1401 = vmul.f32 %v1399, %v958
        %v1402 = vadd.f32 %v1394, %v1400
        %v1403 = vadd.f32 %v1395, %v1401
        %v1404 = vld [vmem:[#allocation2 + $0x77] sm:$0xff]
        %v1405 = vld [vmem:[#allocation2 + $0x7f] sm:$0xff]
        %v1406 = vsel %vm936, %v1404, 0.0
        %v1407 = vsel %vm937, %v1405, 0.0
        %v1408 = vmul.f32 %v1406, %v967
        %v1409 = vmul.f32 %v1407, %v967
        %v1410 = vadd.f32 %v1402, %v1408
        %v1411 = vadd.f32 %v1403, %v1409
        %v1412 = vld [vmem:[#allocation2 + $0x78] sm:$0xff]
        %v1413 = vld [vmem:[#allocation2 + $0x80] sm:$0xff]
        %v1414 = vmul.f32 %v1412, %v974
        %v1415 = vmul.f32 %v1413, %v974
        %v1416 = vadd.f32 %v1410, %v1414
        %v1417 = vadd.f32 %v1411, %v1415
        %v1418 = vld [vmem:[#allocation2 + $0x79] sm:$0xff]
        %v1419 = vld [vmem:[#allocation2 + $0x81] sm:$0xff]
        %v1420 = vsel %vm954, %v1418, 0.0
        %v1421 = vsel %vm955, %v1419, 0.0
        %v1422 = vmul.f32 %v1420, %v983
        %v1423 = vmul.f32 %v1421, %v983
        %v1424 = vadd.f32 %v1416, %v1422
        %v1425 = vadd.f32 %v1417, %v1423
        %v1426 = vld [vmem:[#allocation2 + $0x87] sm:$0xff]
        %v1427 = vld [vmem:[#allocation2 + $0x8f] sm:$0xff]
        %v1428 = vsel %vm936, %v1426, 0.0
        %v1429 = vsel %vm937, %v1427, 0.0
        %v1430 = vmul.f32 %v1428, %v992
        %v1431 = vmul.f32 %v1429, %v992
        %v1432 = vadd.f32 %v1424, %v1430
        %v1433 = vadd.f32 %v1425, %v1431
        %v1434 = vld [vmem:[#allocation2 + $0x88] sm:$0xff]
        %v1435 = vld [vmem:[#allocation2 + $0x90] sm:$0xff]
        %v1436 = vmul.f32 %v1434, %v999
        %v1437 = vmul.f32 %v1435, %v999
        %v1438 = vadd.f32 %v1432, %v1436
        %v1439 = vadd.f32 %v1433, %v1437
        %v1440 = vld [vmem:[#allocation2 + $0x89] sm:$0xff]
        %v1441 = vld [vmem:[#allocation2 + $0x91] sm:$0xff]
        %v1442 = vsel %vm954, %v1440, 0.0
        %v1443 = vsel %vm955, %v1441, 0.0
        %v1444 = vmul.f32 %v1442, %v1008
        %v1445 = vmul.f32 %v1443, %v1008
        %v1446 = vadd.f32 %v1438, %v1444
        %v1447 = vadd.f32 %v1439, %v1445
        %v1448 = vadd.f32 %v1446, %v1014
        %v1449 = vadd.f32 %v1447, %v1014
        %v1450 = vmax.f32 %v1448, 0.0
        %v1451 = vmax.f32 %v1449, 0.0
        %v1452 = vmin.f32 %v1450, 6.0
        %v1453 = vmin.f32 %v1451, 6.0
        %1454 = vst [vmem:[#allocation3 + $0x60] sm:$0xff] %v1452
        %1455 = vst [vmem:[#allocation3 + $0x68] sm:$0xff] %v1453
        %v1456 = vld [vmem:[#allocation2 + $0x77] sm:$0xff]
        %v1457 = vld [vmem:[#allocation2 + $0x7f] sm:$0xff]
        %v1458 = vsel %vm936, %v1456, 0.0
        %v1459 = vsel %vm937, %v1457, 0.0
        %v1460 = vmul.f32 %v1458, %v940
        %v1461 = vmul.f32 %v1459, %v940
        %v1462 = vld [vmem:[#allocation2 + $0x78] sm:$0xff]
        %v1463 = vld [vmem:[#allocation2 + $0x80] sm:$0xff]
        %v1464 = vmul.f32 %v1462, %v945
        %v1465 = vmul.f32 %v1463, %v945
        %v1466 = vadd.f32 %v1460, %v1464
        %v1467 = vadd.f32 %v1461, %v1465
        %v1468 = vld [vmem:[#allocation2 + $0x79] sm:$0xff]
        %v1469 = vld [vmem:[#allocation2 + $0x81] sm:$0xff]
        %v1470 = vsel %vm954, %v1468, 0.0
        %v1471 = vsel %vm955, %v1469, 0.0
        %v1472 = vmul.f32 %v1470, %v958
        %v1473 = vmul.f32 %v1471, %v958
        %v1474 = vadd.f32 %v1466, %v1472
        %v1475 = vadd.f32 %v1467, %v1473
        %v1476 = vld [vmem:[#allocation2 + $0x87] sm:$0xff]
        %v1477 = vld [vmem:[#allocation2 + $0x8f] sm:$0xff]
        %v1478 = vsel %vm936, %v1476, 0.0
        %v1479 = vsel %vm937, %v1477, 0.0
        %v1480 = vmul.f32 %v1478, %v967
        %v1481 = vmul.f32 %v1479, %v967
        %v1482 = vadd.f32 %v1474, %v1480
        %v1483 = vadd.f32 %v1475, %v1481
        %v1484 = vld [vmem:[#allocation2 + $0x88] sm:$0xff]
        %v1485 = vld [vmem:[#allocation2 + $0x90] sm:$0xff]
        %v1486 = vmul.f32 %v1484, %v974
        %v1487 = vmul.f32 %v1485, %v974
        %v1488 = vadd.f32 %v1482, %v1486
        %v1489 = vadd.f32 %v1483, %v1487
        %v1490 = vld [vmem:[#allocation2 + $0x89] sm:$0xff]
        %v1491 = vld [vmem:[#allocation2 + $0x91] sm:$0xff]
        %v1492 = vsel %vm954, %v1490, 0.0
        %v1493 = vsel %vm955, %v1491, 0.0
        %v1494 = vmul.f32 %v1492, %v983
        %v1495 = vmul.f32 %v1493, %v983
        %v1496 = vadd.f32 %v1488, %v1494
        %v1497 = vadd.f32 %v1489, %v1495
        %v1498 = vld [vmem:[#allocation2 + $0x97] sm:$0xff]
        %v1499 = vld [vmem:[#allocation2 + $0x9f] sm:$0xff]
        %v1500 = vsel %vm936, %v1498, 0.0
        %v1501 = vsel %vm937, %v1499, 0.0
        %v1502 = vmul.f32 %v1500, %v992
        %v1503 = vmul.f32 %v1501, %v992
        %v1504 = vadd.f32 %v1496, %v1502
        %v1505 = vadd.f32 %v1497, %v1503
        %v1506 = vld [vmem:[#allocation2 + $0x98] sm:$0xff]
        %v1507 = vld [vmem:[#allocation2 + $0xa0] sm:$0xff]
        %v1508 = vmul.f32 %v1506, %v999
        %v1509 = vmul.f32 %v1507, %v999
        %v1510 = vadd.f32 %v1504, %v1508
        %v1511 = vadd.f32 %v1505, %v1509
        %v1512 = vld [vmem:[#allocation2 + $0x99] sm:$0xff]
        %v1513 = vld [vmem:[#allocation2 + $0xa1] sm:$0xff]
        %v1514 = vsel %vm954, %v1512, 0.0
        %v1515 = vsel %vm955, %v1513, 0.0
        %v1516 = vmul.f32 %v1514, %v1008
        %v1517 = vmul.f32 %v1515, %v1008
        %v1518 = vadd.f32 %v1510, %v1516
        %v1519 = vadd.f32 %v1511, %v1517
        %v1520 = vadd.f32 %v1518, %v1014
        %v1521 = vadd.f32 %v1519, %v1014
        %v1522 = vmax.f32 %v1520, 0.0
        %v1523 = vmax.f32 %v1521, 0.0
        %v1524 = vmin.f32 %v1522, 6.0
        %v1525 = vmin.f32 %v1523, 6.0
        %1526 = vst [vmem:[#allocation3 + $0x70] sm:$0xff] %v1524
        %1527 = vst [vmem:[#allocation3 + $0x78] sm:$0xff] %v1525
        %v1528 = vld [vmem:[#allocation2 + $0x87] sm:$0xff]
        %v1529 = vld [vmem:[#allocation2 + $0x8f] sm:$0xff]
        %v1530 = vsel %vm936, %v1528, 0.0
        %v1531 = vsel %vm937, %v1529, 0.0
        %v1532 = vmul.f32 %v1530, %v940
        %v1533 = vmul.f32 %v1531, %v940
        %v1534 = vld [vmem:[#allocation2 + $0x88] sm:$0xff]
        %v1535 = vld [vmem:[#allocation2 + $0x90] sm:$0xff]
        %v1536 = vmul.f32 %v1534, %v945
        %v1537 = vmul.f32 %v1535, %v945
        %v1538 = vadd.f32 %v1532, %v1536
        %v1539 = vadd.f32 %v1533, %v1537
        %v1540 = vld [vmem:[#allocation2 + $0x89] sm:$0xff]
        %v1541 = vld [vmem:[#allocation2 + $0x91] sm:$0xff]
        %v1542 = vsel %vm954, %v1540, 0.0
        %v1543 = vsel %vm955, %v1541, 0.0
        %v1544 = vmul.f32 %v1542, %v958
        %v1545 = vmul.f32 %v1543, %v958
        %v1546 = vadd.f32 %v1538, %v1544
        %v1547 = vadd.f32 %v1539, %v1545
        %v1548 = vld [vmem:[#allocation2 + $0x97] sm:$0xff]
        %v1549 = vld [vmem:[#allocation2 + $0x9f] sm:$0xff]
        %v1550 = vsel %vm936, %v1548, 0.0
        %v1551 = vsel %vm937, %v1549, 0.0
        %v1552 = vmul.f32 %v1550, %v967
        %v1553 = vmul.f32 %v1551, %v967
        %v1554 = vadd.f32 %v1546, %v1552
        %v1555 = vadd.f32 %v1547, %v1553
        %v1556 = vld [vmem:[#allocation2 + $0x98] sm:$0xff]
        %v1557 = vld [vmem:[#allocation2 + $0xa0] sm:$0xff]
        %v1558 = vmul.f32 %v1556, %v974
        %v1559 = vmul.f32 %v1557, %v974
        %v1560 = vadd.f32 %v1554, %v1558
        %v1561 = vadd.f32 %v1555, %v1559
        %v1562 = vld [vmem:[#allocation2 + $0x99] sm:$0xff]
        %v1563 = vld [vmem:[#allocation2 + $0xa1] sm:$0xff]
        %v1564 = vsel %vm954, %v1562, 0.0
        %v1565 = vsel %vm955, %v1563, 0.0
        %v1566 = vmul.f32 %v1564, %v983
        %v1567 = vmul.f32 %v1565, %v983
        %v1568 = vadd.f32 %v1560, %v1566
        %v1569 = vadd.f32 %v1561, %v1567
        %v1570 = vld [vmem:[#allocation2 + $0xa7] sm:$0xff]
        %v1571 = vld [vmem:[#allocation2 + $0xaf] sm:$0xff]
        %v1572 = vsel %vm936, %v1570, 0.0
        %v1573 = vsel %vm937, %v1571, 0.0
        %v1574 = vmul.f32 %v1572, %v992
        %v1575 = vmul.f32 %v1573, %v992
        %v1576 = vadd.f32 %v1568, %v1574
        %v1577 = vadd.f32 %v1569, %v1575
        %v1578 = vld [vmem:[#allocation2 + $0xa8] sm:$0xff]
        %v1579 = vld [vmem:[#allocation2 + $0xb0] sm:$0xff]
        %v1580 = vmul.f32 %v1578, %v999
        %v1581 = vmul.f32 %v1579, %v999
        %v1582 = vadd.f32 %v1576, %v1580
        %v1583 = vadd.f32 %v1577, %v1581
        %v1584 = vld [vmem:[#allocation2 + $0xa9] sm:$0xff]
        %v1585 = vld [vmem:[#allocation2 + $0xb1] sm:$0xff]
        %v1586 = vsel %vm954, %v1584, 0.0
        %v1587 = vsel %vm955, %v1585, 0.0
        %v1588 = vmul.f32 %v1586, %v1008
        %v1589 = vmul.f32 %v1587, %v1008
        %v1590 = vadd.f32 %v1582, %v1588
        %v1591 = vadd.f32 %v1583, %v1589
        %v1592 = vadd.f32 %v1590, %v1014
        %v1593 = vadd.f32 %v1591, %v1014
        %v1594 = vmax.f32 %v1592, 0.0
        %v1595 = vmax.f32 %v1593, 0.0
        %v1596 = vmin.f32 %v1594, 6.0
        %v1597 = vmin.f32 %v1595, 6.0
        %1598 = vst [vmem:[#allocation3 + $0x80] sm:$0xff] %v1596
        %1599 = vst [vmem:[#allocation3 + $0x88] sm:$0xff] %v1597
        %v1600 = vld [vmem:[#allocation2 + $0x97] sm:$0xff]
        %v1601 = vld [vmem:[#allocation2 + $0x9f] sm:$0xff]
        %v1602 = vsel %vm936, %v1600, 0.0
        %v1603 = vsel %vm937, %v1601, 0.0
        %v1604 = vmul.f32 %v1602, %v940
        %v1605 = vmul.f32 %v1603, %v940
        %v1606 = vld [vmem:[#allocation2 + $0x98] sm:$0xff]
        %v1607 = vld [vmem:[#allocation2 + $0xa0] sm:$0xff]
        %v1608 = vmul.f32 %v1606, %v945
        %v1609 = vmul.f32 %v1607, %v945
        %v1610 = vadd.f32 %v1604, %v1608
        %v1611 = vadd.f32 %v1605, %v1609
        %v1612 = vld [vmem:[#allocation2 + $0x99] sm:$0xff]
        %v1613 = vld [vmem:[#allocation2 + $0xa1] sm:$0xff]
        %v1614 = vsel %vm954, %v1612, 0.0
        %v1615 = vsel %vm955, %v1613, 0.0
        %v1616 = vmul.f32 %v1614, %v958
        %v1617 = vmul.f32 %v1615, %v958
        %v1618 = vadd.f32 %v1610, %v1616
        %v1619 = vadd.f32 %v1611, %v1617
        %v1620 = vld [vmem:[#allocation2 + $0xa7] sm:$0xff]
        %v1621 = vld [vmem:[#allocation2 + $0xaf] sm:$0xff]
        %v1622 = vsel %vm936, %v1620, 0.0
        %v1623 = vsel %vm937, %v1621, 0.0
        %v1624 = vmul.f32 %v1622, %v967
        %v1625 = vmul.f32 %v1623, %v967
        %v1626 = vadd.f32 %v1618, %v1624
        %v1627 = vadd.f32 %v1619, %v1625
        %v1628 = vld [vmem:[#allocation2 + $0xa8] sm:$0xff]
        %v1629 = vld [vmem:[#allocation2 + $0xb0] sm:$0xff]
        %v1630 = vmul.f32 %v1628, %v974
        %v1631 = vmul.f32 %v1629, %v974
        %v1632 = vadd.f32 %v1626, %v1630
        %v1633 = vadd.f32 %v1627, %v1631
        %v1634 = vld [vmem:[#allocation2 + $0xa9] sm:$0xff]
        %v1635 = vld [vmem:[#allocation2 + $0xb1] sm:$0xff]
        %v1636 = vsel %vm954, %v1634, 0.0
        %v1637 = vsel %vm955, %v1635, 0.0
        %v1638 = vmul.f32 %v1636, %v983
        %v1639 = vmul.f32 %v1637, %v983
        %v1640 = vadd.f32 %v1632, %v1638
        %v1641 = vadd.f32 %v1633, %v1639
        %v1642 = vld [vmem:[#allocation2 + $0xb7] sm:$0xff]
        %v1643 = vld [vmem:[#allocation2 + $0xbf] sm:$0xff]
        %v1644 = vsel %vm936, %v1642, 0.0
        %v1645 = vsel %vm937, %v1643, 0.0
        %v1646 = vmul.f32 %v1644, %v992
        %v1647 = vmul.f32 %v1645, %v992
        %v1648 = vadd.f32 %v1640, %v1646
        %v1649 = vadd.f32 %v1641, %v1647
        %v1650 = vld [vmem:[#allocation2 + $0xb8] sm:$0xff]
        %v1651 = vld [vmem:[#allocation2 + $0xc0] sm:$0xff]
        %v1652 = vmul.f32 %v1650, %v999
        %v1653 = vmul.f32 %v1651, %v999
        %v1654 = vadd.f32 %v1648, %v1652
        %v1655 = vadd.f32 %v1649, %v1653
        %v1656 = vld [vmem:[#allocation2 + $0xb9] sm:$0xff]
        %v1657 = vld [vmem:[#allocation2 + $0xc1] sm:$0xff]
        %v1658 = vsel %vm954, %v1656, 0.0
        %v1659 = vsel %vm955, %v1657, 0.0
        %v1660 = vmul.f32 %v1658, %v1008
        %v1661 = vmul.f32 %v1659, %v1008
        %v1662 = vadd.f32 %v1654, %v1660
        %v1663 = vadd.f32 %v1655, %v1661
        %v1664 = vadd.f32 %v1662, %v1014
        %v1665 = vadd.f32 %v1663, %v1014
        %v1666 = vmax.f32 %v1664, 0.0
        %v1667 = vmax.f32 %v1665, 0.0
        %v1668 = vmin.f32 %v1666, 6.0
        %v1669 = vmin.f32 %v1667, 6.0
        %1670 = vst [vmem:[#allocation3 + $0x90] sm:$0xff] %v1668
        %1671 = vst [vmem:[#allocation3 + $0x98] sm:$0xff] %v1669
        %v1672 = vld [vmem:[#allocation2 + $0xa7] sm:$0xff]
        %v1673 = vld [vmem:[#allocation2 + $0xaf] sm:$0xff]
        %v1674 = vsel %vm936, %v1672, 0.0
        %v1675 = vsel %vm937, %v1673, 0.0
        %v1676 = vmul.f32 %v1674, %v940
        %v1677 = vmul.f32 %v1675, %v940
        %v1678 = vld [vmem:[#allocation2 + $0xa8] sm:$0xff]
        %v1679 = vld [vmem:[#allocation2 + $0xb0] sm:$0xff]
        %v1680 = vmul.f32 %v1678, %v945
        %v1681 = vmul.f32 %v1679, %v945
        %v1682 = vadd.f32 %v1676, %v1680
        %v1683 = vadd.f32 %v1677, %v1681
        %v1684 = vld [vmem:[#allocation2 + $0xa9] sm:$0xff]
        %v1685 = vld [vmem:[#allocation2 + $0xb1] sm:$0xff]
        %v1686 = vsel %vm954, %v1684, 0.0
        %v1687 = vsel %vm955, %v1685, 0.0
        %v1688 = vmul.f32 %v1686, %v958
        %v1689 = vmul.f32 %v1687, %v958
        %v1690 = vadd.f32 %v1682, %v1688
        %v1691 = vadd.f32 %v1683, %v1689
        %v1692 = vld [vmem:[#allocation2 + $0xb7] sm:$0xff]
        %v1693 = vld [vmem:[#allocation2 + $0xbf] sm:$0xff]
        %v1694 = vsel %vm936, %v1692, 0.0
        %v1695 = vsel %vm937, %v1693, 0.0
        %v1696 = vmul.f32 %v1694, %v967
        %v1697 = vmul.f32 %v1695, %v967
        %v1698 = vadd.f32 %v1690, %v1696
        %v1699 = vadd.f32 %v1691, %v1697
        %v1700 = vld [vmem:[#allocation2 + $0xb8] sm:$0xff]
        %v1701 = vld [vmem:[#allocation2 + $0xc0] sm:$0xff]
        %v1702 = vmul.f32 %v1700, %v974
        %v1703 = vmul.f32 %v1701, %v974
        %v1704 = vadd.f32 %v1698, %v1702
        %v1705 = vadd.f32 %v1699, %v1703
        %v1706 = vld [vmem:[#allocation2 + $0xb9] sm:$0xff]
        %v1707 = vld [vmem:[#allocation2 + $0xc1] sm:$0xff]
        %v1708 = vsel %vm954, %v1706, 0.0
        %v1709 = vsel %vm955, %v1707, 0.0
        %v1710 = vmul.f32 %v1708, %v983
        %v1711 = vmul.f32 %v1709, %v983
        %v1712 = vadd.f32 %v1704, %v1710
        %v1713 = vadd.f32 %v1705, %v1711
        %v1714 = vld [vmem:[#allocation2 + $0xc7] sm:$0xff]
        %v1715 = vld [vmem:[#allocation2 + $0xcf] sm:$0xff]
        %v1716 = vsel %vm936, %v1714, 0.0
        %v1717 = vsel %vm937, %v1715, 0.0
        %v1718 = vmul.f32 %v1716, %v992
        %v1719 = vmul.f32 %v1717, %v992
        %v1720 = vadd.f32 %v1712, %v1718
        %v1721 = vadd.f32 %v1713, %v1719
        %v1722 = vld [vmem:[#allocation2 + $0xc8] sm:$0xff]
        %v1723 = vld [vmem:[#allocation2 + $0xd0] sm:$0xff]
        %v1724 = vmul.f32 %v1722, %v999
        %v1725 = vmul.f32 %v1723, %v999
        %v1726 = vadd.f32 %v1720, %v1724
        %v1727 = vadd.f32 %v1721, %v1725
        %v1728 = vld [vmem:[#allocation2 + $0xc9] sm:$0xff]
        %v1729 = vld [vmem:[#allocation2 + $0xd1] sm:$0xff]
        %v1730 = vsel %vm954, %v1728, 0.0
        %v1731 = vsel %vm955, %v1729, 0.0
        %v1732 = vmul.f32 %v1730, %v1008
        %v1733 = vmul.f32 %v1731, %v1008
        %v1734 = vadd.f32 %v1726, %v1732
        %v1735 = vadd.f32 %v1727, %v1733
        %v1736 = vadd.f32 %v1734, %v1014
        %v1737 = vadd.f32 %v1735, %v1014
        %v1738 = vmax.f32 %v1736, 0.0
        %v1739 = vmax.f32 %v1737, 0.0
        %v1740 = vmin.f32 %v1738, 6.0
        %v1741 = vmin.f32 %v1739, 6.0
        %1742 = vst [vmem:[#allocation3 + $0xa0] sm:$0xff] %v1740
        %1743 = vst [vmem:[#allocation3 + $0xa8] sm:$0xff] %v1741
        %v1744 = vld [vmem:[#allocation2 + $0xb7] sm:$0xff]
        %v1745 = vld [vmem:[#allocation2 + $0xbf] sm:$0xff]
        %v1746 = vsel %vm936, %v1744, 0.0
        %v1747 = vsel %vm937, %v1745, 0.0
        %v1748 = vmul.f32 %v1746, %v940
        %v1749 = vmul.f32 %v1747, %v940
        %v1750 = vld [vmem:[#allocation2 + $0xb8] sm:$0xff]
        %v1751 = vld [vmem:[#allocation2 + $0xc0] sm:$0xff]
        %v1752 = vmul.f32 %v1750, %v945
        %v1753 = vmul.f32 %v1751, %v945
        %v1754 = vadd.f32 %v1748, %v1752
        %v1755 = vadd.f32 %v1749, %v1753
        %v1756 = vld [vmem:[#allocation2 + $0xb9] sm:$0xff]
        %v1757 = vld [vmem:[#allocation2 + $0xc1] sm:$0xff]
        %v1758 = vsel %vm954, %v1756, 0.0
        %v1759 = vsel %vm955, %v1757, 0.0
        %v1760 = vmul.f32 %v1758, %v958
        %v1761 = vmul.f32 %v1759, %v958
        %v1762 = vadd.f32 %v1754, %v1760
        %v1763 = vadd.f32 %v1755, %v1761
        %v1764 = vld [vmem:[#allocation2 + $0xc7] sm:$0xff]
        %v1765 = vld [vmem:[#allocation2 + $0xcf] sm:$0xff]
        %v1766 = vsel %vm936, %v1764, 0.0
        %v1767 = vsel %vm937, %v1765, 0.0
        %v1768 = vmul.f32 %v1766, %v967
        %v1769 = vmul.f32 %v1767, %v967
        %v1770 = vadd.f32 %v1762, %v1768
        %v1771 = vadd.f32 %v1763, %v1769
        %v1772 = vld [vmem:[#allocation2 + $0xc8] sm:$0xff]
        %v1773 = vld [vmem:[#allocation2 + $0xd0] sm:$0xff]
        %v1774 = vmul.f32 %v1772, %v974
        %v1775 = vmul.f32 %v1773, %v974
        %v1776 = vadd.f32 %v1770, %v1774
        %v1777 = vadd.f32 %v1771, %v1775
        %v1778 = vld [vmem:[#allocation2 + $0xc9] sm:$0xff]
        %v1779 = vld [vmem:[#allocation2 + $0xd1] sm:$0xff]
        %v1780 = vsel %vm954, %v1778, 0.0
        %v1781 = vsel %vm955, %v1779, 0.0
        %v1782 = vmul.f32 %v1780, %v983
        %v1783 = vmul.f32 %v1781, %v983
        %v1784 = vadd.f32 %v1776, %v1782
        %v1785 = vadd.f32 %v1777, %v1783
        %v1786 = vld [vmem:[#allocation2 + $0xd7] sm:$0xff]
        %v1787 = vld [vmem:[#allocation2 + $0xdf] sm:$0xff]
        %v1788 = vsel %vm936, %v1786, 0.0
        %v1789 = vsel %vm937, %v1787, 0.0
        %v1790 = vmul.f32 %v1788, %v992
        %v1791 = vmul.f32 %v1789, %v992
        %v1792 = vadd.f32 %v1784, %v1790
        %v1793 = vadd.f32 %v1785, %v1791
        %v1794 = vld [vmem:[#allocation2 + $0xd8] sm:$0xff]
        %v1795 = vld [vmem:[#allocation2 + $0xe0] sm:$0xff]
        %v1796 = vmul.f32 %v1794, %v999
        %v1797 = vmul.f32 %v1795, %v999
        %v1798 = vadd.f32 %v1792, %v1796
        %v1799 = vadd.f32 %v1793, %v1797
        %v1800 = vld [vmem:[#allocation2 + $0xd9] sm:$0xff]
        %v1801 = vld [vmem:[#allocation2 + $0xe1] sm:$0xff]
        %v1802 = vsel %vm954, %v1800, 0.0
        %v1803 = vsel %vm955, %v1801, 0.0
        %v1804 = vmul.f32 %v1802, %v1008
        %v1805 = vmul.f32 %v1803, %v1008
        %v1806 = vadd.f32 %v1798, %v1804
        %v1807 = vadd.f32 %v1799, %v1805
        %v1808 = vadd.f32 %v1806, %v1014
        %v1809 = vadd.f32 %v1807, %v1014
        %v1810 = vmax.f32 %v1808, 0.0
        %v1811 = vmax.f32 %v1809, 0.0
        %v1812 = vmin.f32 %v1810, 6.0
        %v1813 = vmin.f32 %v1811, 6.0
        %1814 = vst [vmem:[#allocation3 + $0xb0] sm:$0xff] %v1812
        %1815 = vst [vmem:[#allocation3 + $0xb8] sm:$0xff] %v1813
        %v1816 = vld [vmem:[#allocation2 + $0xc7] sm:$0xff]
        %v1817 = vld [vmem:[#allocation2 + $0xcf] sm:$0xff]
        %v1818 = vsel %vm936, %v1816, 0.0
        %v1819 = vsel %vm937, %v1817, 0.0
        %v1820 = vmul.f32 %v1818, %v940
        %v1821 = vmul.f32 %v1819, %v940
        %v1822 = vld [vmem:[#allocation2 + $0xc8] sm:$0xff]
        %v1823 = vld [vmem:[#allocation2 + $0xd0] sm:$0xff]
        %v1824 = vmul.f32 %v1822, %v945
        %v1825 = vmul.f32 %v1823, %v945
        %v1826 = vadd.f32 %v1820, %v1824
        %v1827 = vadd.f32 %v1821, %v1825
        %v1828 = vld [vmem:[#allocation2 + $0xc9] sm:$0xff]
        %v1829 = vld [vmem:[#allocation2 + $0xd1] sm:$0xff]
        %v1830 = vsel %vm954, %v1828, 0.0
        %v1831 = vsel %vm955, %v1829, 0.0
        %v1832 = vmul.f32 %v1830, %v958
        %v1833 = vmul.f32 %v1831, %v958
        %v1834 = vadd.f32 %v1826, %v1832
        %v1835 = vadd.f32 %v1827, %v1833
        %v1836 = vld [vmem:[#allocation2 + $0xd7] sm:$0xff]
        %v1837 = vld [vmem:[#allocation2 + $0xdf] sm:$0xff]
        %v1838 = vsel %vm936, %v1836, 0.0
        %v1839 = vsel %vm937, %v1837, 0.0
        %v1840 = vmul.f32 %v1838, %v967
        %v1841 = vmul.f32 %v1839, %v967
        %v1842 = vadd.f32 %v1834, %v1840
        %v1843 = vadd.f32 %v1835, %v1841
        %v1844 = vld [vmem:[#allocation2 + $0xd8] sm:$0xff]
        %v1845 = vld [vmem:[#allocation2 + $0xe0] sm:$0xff]
        %v1846 = vmul.f32 %v1844, %v974
        %v1847 = vmul.f32 %v1845, %v974
        %v1848 = vadd.f32 %v1842, %v1846
        %v1849 = vadd.f32 %v1843, %v1847
        %v1850 = vld [vmem:[#allocation2 + $0xd9] sm:$0xff]
        %v1851 = vld [vmem:[#allocation2 + $0xe1] sm:$0xff]
        %v1852 = vsel %vm954, %v1850, 0.0
        %v1853 = vsel %vm955, %v1851, 0.0
        %v1854 = vmul.f32 %v1852, %v983
        %v1855 = vmul.f32 %v1853, %v983
        %v1856 = vadd.f32 %v1848, %v1854
        %v1857 = vadd.f32 %v1849, %v1855
        %v1858 = vld [vmem:[#allocation2 + $0xe7] sm:$0xff]
        %v1859 = vld [vmem:[#allocation2 + $0xef] sm:$0xff]
        %v1860 = vsel %vm936, %v1858, 0.0
        %v1861 = vsel %vm937, %v1859, 0.0
        %v1862 = vmul.f32 %v1860, %v992
        %v1863 = vmul.f32 %v1861, %v992
        %v1864 = vadd.f32 %v1856, %v1862
        %v1865 = vadd.f32 %v1857, %v1863
        %v1866 = vld [vmem:[#allocation2 + $0xe8] sm:$0xff]
        %v1867 = vld [vmem:[#allocation2 + $0xf0] sm:$0xff]
        %v1868 = vmul.f32 %v1866, %v999
        %v1869 = vmul.f32 %v1867, %v999
        %v1870 = vadd.f32 %v1864, %v1868
        %v1871 = vadd.f32 %v1865, %v1869
        %v1872 = vld [vmem:[#allocation2 + $0xe9] sm:$0xff]
        %v1873 = vld [vmem:[#allocation2 + $0xf1] sm:$0xff]
        %v1874 = vsel %vm954, %v1872, 0.0
        %v1875 = vsel %vm955, %v1873, 0.0
        %v1876 = vmul.f32 %v1874, %v1008
        %v1877 = vmul.f32 %v1875, %v1008
        %v1878 = vadd.f32 %v1870, %v1876
        %v1879 = vadd.f32 %v1871, %v1877
        %v1880 = vadd.f32 %v1878, %v1014
        %v1881 = vadd.f32 %v1879, %v1014
        %v1882 = vmax.f32 %v1880, 0.0
        %v1883 = vmax.f32 %v1881, 0.0
        %v1884 = vmin.f32 %v1882, 6.0
        %v1885 = vmin.f32 %v1883, 6.0
        %1886 = vst [vmem:[#allocation3 + $0xc0] sm:$0xff] %v1884
        %1887 = vst [vmem:[#allocation3 + $0xc8] sm:$0xff] %v1885
        %v1888 = vld [vmem:[#allocation2 + $0xd7] sm:$0xff]
        %v1889 = vld [vmem:[#allocation2 + $0xdf] sm:$0xff]
        %v1890 = vsel %vm936, %v1888, 0.0
        %v1891 = vsel %vm937, %v1889, 0.0
        %v1892 = vmul.f32 %v1890, %v940
        %v1893 = vmul.f32 %v1891, %v940
        %v1894 = vld [vmem:[#allocation2 + $0xd8] sm:$0xff]
        %v1895 = vld [vmem:[#allocation2 + $0xe0] sm:$0xff]
        %v1896 = vmul.f32 %v1894, %v945
        %v1897 = vmul.f32 %v1895, %v945
        %v1898 = vadd.f32 %v1892, %v1896
        %v1899 = vadd.f32 %v1893, %v1897
        %v1900 = vld [vmem:[#allocation2 + $0xd9] sm:$0xff]
        %v1901 = vld [vmem:[#allocation2 + $0xe1] sm:$0xff]
        %v1902 = vsel %vm954, %v1900, 0.0
        %v1903 = vsel %vm955, %v1901, 0.0
        %v1904 = vmul.f32 %v1902, %v958
        %v1905 = vmul.f32 %v1903, %v958
        %v1906 = vadd.f32 %v1898, %v1904
        %v1907 = vadd.f32 %v1899, %v1905
        %v1908 = vld [vmem:[#allocation2 + $0xe7] sm:$0xff]
        %v1909 = vld [vmem:[#allocation2 + $0xef] sm:$0xff]
        %v1910 = vsel %vm936, %v1908, 0.0
        %v1911 = vsel %vm937, %v1909, 0.0
        %v1912 = vmul.f32 %v1910, %v967
        %v1913 = vmul.f32 %v1911, %v967
        %v1914 = vadd.f32 %v1906, %v1912
        %v1915 = vadd.f32 %v1907, %v1913
        %v1916 = vld [vmem:[#allocation2 + $0xe8] sm:$0xff]
        %v1917 = vld [vmem:[#allocation2 + $0xf0] sm:$0xff]
        %v1918 = vmul.f32 %v1916, %v974
        %v1919 = vmul.f32 %v1917, %v974
        %v1920 = vadd.f32 %v1914, %v1918
        %v1921 = vadd.f32 %v1915, %v1919
        %v1922 = vld [vmem:[#allocation2 + $0xe9] sm:$0xff]
        %v1923 = vld [vmem:[#allocation2 + $0xf1] sm:$0xff]
        %v1924 = vsel %vm954, %v1922, 0.0
        %v1925 = vsel %vm955, %v1923, 0.0
        %v1926 = vmul.f32 %v1924, %v983
        %v1927 = vmul.f32 %v1925, %v983
        %v1928 = vadd.f32 %v1920, %v1926
        %v1929 = vadd.f32 %v1921, %v1927
        %v1930 = vld [vmem:[#allocation2 + $0xf7] sm:$0xff]
        %v1931 = vld [vmem:[#allocation2 + $0xff] sm:$0xff]
        %v1932 = vsel %vm936, %v1930, 0.0
        %v1933 = vsel %vm937, %v1931, 0.0
        %v1934 = vmul.f32 %v1932, %v992
        %v1935 = vmul.f32 %v1933, %v992
        %v1936 = vadd.f32 %v1928, %v1934
        %v1937 = vadd.f32 %v1929, %v1935
        %v1938 = vld [vmem:[#allocation2 + $0xf8] sm:$0xff]
        %v1939 = vld [vmem:[#allocation2 + $0x100] sm:$0xff]
        %v1940 = vmul.f32 %v1938, %v999
        %v1941 = vmul.f32 %v1939, %v999
        %v1942 = vadd.f32 %v1936, %v1940
        %v1943 = vadd.f32 %v1937, %v1941
        %v1944 = vld [vmem:[#allocation2 + $0xf9] sm:$0xff]
        %v1945 = vld [vmem:[#allocation2 + $0x101] sm:$0xff]
        %v1946 = vsel %vm954, %v1944, 0.0
        %v1947 = vsel %vm955, %v1945, 0.0
        %v1948 = vmul.f32 %v1946, %v1008
        %v1949 = vmul.f32 %v1947, %v1008
        %v1950 = vadd.f32 %v1942, %v1948
        %v1951 = vadd.f32 %v1943, %v1949
        %v1952 = vadd.f32 %v1950, %v1014
        %v1953 = vadd.f32 %v1951, %v1014
        %v1954 = vmax.f32 %v1952, 0.0
        %v1955 = vmax.f32 %v1953, 0.0
        %v1956 = vmin.f32 %v1954, 6.0
        %v1957 = vmin.f32 %v1955, 6.0
        %1958 = vst [vmem:[#allocation3 + $0xd0] sm:$0xff] %v1956
        %1959 = vst [vmem:[#allocation3 + $0xd8] sm:$0xff] %v1957
        %v1960 = vld [vmem:[#allocation2 + $0xe7] sm:$0xff]
        %v1961 = vld [vmem:[#allocation2 + $0xef] sm:$0xff]
        %v1962 = vsel %vm936, %v1960, 0.0
        %v1963 = vsel %vm937, %v1961, 0.0
        %v1964 = vmul.f32 %v1962, %v940
        %v1965 = vmul.f32 %v1963, %v940
        %v1966 = vld [vmem:[#allocation2 + $0xe8] sm:$0xff]
        %v1967 = vld [vmem:[#allocation2 + $0xf0] sm:$0xff]
        %v1968 = vmul.f32 %v1966, %v945
        %v1969 = vmul.f32 %v1967, %v945
        %v1970 = vadd.f32 %v1964, %v1968
        %v1971 = vadd.f32 %v1965, %v1969
        %v1972 = vld [vmem:[#allocation2 + $0xe9] sm:$0xff]
        %v1973 = vld [vmem:[#allocation2 + $0xf1] sm:$0xff]
        %v1974 = vsel %vm954, %v1972, 0.0
        %v1975 = vsel %vm955, %v1973, 0.0
        %v1976 = vmul.f32 %v1974, %v958
        %v1977 = vmul.f32 %v1975, %v958
        %v1978 = vadd.f32 %v1970, %v1976
        %v1979 = vadd.f32 %v1971, %v1977
        %v1980 = vld [vmem:[#allocation2 + $0xf7] sm:$0xff]
        %v1981 = vld [vmem:[#allocation2 + $0xff] sm:$0xff]
        %v1982 = vsel %vm936, %v1980, 0.0
        %v1983 = vsel %vm937, %v1981, 0.0
        %v1984 = vmul.f32 %v1982, %v967
        %v1985 = vmul.f32 %v1983, %v967
        %v1986 = vadd.f32 %v1978, %v1984
        %v1987 = vadd.f32 %v1979, %v1985
        %v1988 = vld [vmem:[#allocation2 + $0xf8] sm:$0xff]
        %v1989 = vld [vmem:[#allocation2 + $0x100] sm:$0xff]
        %v1990 = vmul.f32 %v1988, %v974
        %v1991 = vmul.f32 %v1989, %v974
        %v1992 = vadd.f32 %v1986, %v1990
        %v1993 = vadd.f32 %v1987, %v1991
        %v1994 = vld [vmem:[#allocation2 + $0xf9] sm:$0xff]
        %v1995 = vld [vmem:[#allocation2 + $0x101] sm:$0xff]
        %v1996 = vsel %vm954, %v1994, 0.0
        %v1997 = vsel %vm955, %v1995, 0.0
        %v1998 = vmul.f32 %v1996, %v983
        %v1999 = vmul.f32 %v1997, %v983
        %v2000 = vadd.f32 %v1992, %v1998
        %v2001 = vadd.f32 %v1993, %v1999
        %v2002 = vld [vmem:[#allocation2 + $0x107] sm:$0xff]
        %v2003 = vld [vmem:[#allocation2 + $0x10f] sm:$0xff]
        %v2004 = vsel %vm936, %v2002, 0.0
        %v2005 = vsel %vm937, %v2003, 0.0
        %v2006 = vmul.f32 %v2004, %v992
        %v2007 = vmul.f32 %v2005, %v992
        %v2008 = vadd.f32 %v2000, %v2006
        %v2009 = vadd.f32 %v2001, %v2007
        %v2010 = vld [vmem:[#allocation2 + $0x108] sm:$0xff]
        %v2011 = vld [vmem:[#allocation2 + $0x110] sm:$0xff]
        %v2012 = vmul.f32 %v2010, %v999
        %v2013 = vmul.f32 %v2011, %v999
        %v2014 = vadd.f32 %v2008, %v2012
        %v2015 = vadd.f32 %v2009, %v2013
        %v2016 = vld [vmem:[#allocation2 + $0x109] sm:$0xff]
        %v2017 = vld [vmem:[#allocation2 + $0x111] sm:$0xff]
        %v2018 = vsel %vm954, %v2016, 0.0
        %v2019 = vsel %vm955, %v2017, 0.0
        %v2020 = vmul.f32 %v2018, %v1008
        %v2021 = vmul.f32 %v2019, %v1008
        %v2022 = vadd.f32 %v2014, %v2020
        %v2023 = vadd.f32 %v2015, %v2021
        %v2024 = vadd.f32 %v2022, %v1014
        %v2025 = vadd.f32 %v2023, %v1014
        %v2026 = vmax.f32 %v2024, 0.0
        %v2027 = vmax.f32 %v2025, 0.0
        %v2028 = vmin.f32 %v2026, 6.0
        %v2029 = vmin.f32 %v2027, 6.0
        %2030 = vst [vmem:[#allocation3 + $0xe0] sm:$0xff] %v2028
        %2031 = vst [vmem:[#allocation3 + $0xe8] sm:$0xff] %v2029
        %v2032 = vld [vmem:[#allocation2 + $0xf7] sm:$0xff]
        %v2033 = vld [vmem:[#allocation2 + $0xff] sm:$0xff]
        %v2034 = vsel %vm936, %v2032, 0.0
        %v2035 = vsel %vm937, %v2033, 0.0
        %v2036 = vmul.f32 %v2034, %v940
        %v2037 = vmul.f32 %v2035, %v940
        %v2038 = vld [vmem:[#allocation2 + $0xf8] sm:$0xff]
        %v2039 = vld [vmem:[#allocation2 + $0x100] sm:$0xff]
        %v2040 = vmul.f32 %v2038, %v945
        %v2041 = vmul.f32 %v2039, %v945
        %v2042 = vadd.f32 %v2036, %v2040
        %v2043 = vadd.f32 %v2037, %v2041
        %v2044 = vld [vmem:[#allocation2 + $0xf9] sm:$0xff]
        %v2045 = vld [vmem:[#allocation2 + $0x101] sm:$0xff]
        %v2046 = vsel %vm954, %v2044, 0.0
        %v2047 = vsel %vm955, %v2045, 0.0
        %v2048 = vmul.f32 %v2046, %v958
        %v2049 = vmul.f32 %v2047, %v958
        %v2050 = vadd.f32 %v2042, %v2048
        %v2051 = vadd.f32 %v2043, %v2049
        %v2052 = vld [vmem:[#allocation2 + $0x107] sm:$0xff]
        %v2053 = vld [vmem:[#allocation2 + $0x10f] sm:$0xff]
        %v2054 = vsel %vm936, %v2052, 0.0
        %v2055 = vsel %vm937, %v2053, 0.0
        %v2056 = vmul.f32 %v2054, %v967
        %v2057 = vmul.f32 %v2055, %v967
        %v2058 = vadd.f32 %v2050, %v2056
        %v2059 = vadd.f32 %v2051, %v2057
        %v2060 = vld [vmem:[#allocation2 + $0x108] sm:$0xff]
        %v2061 = vld [vmem:[#allocation2 + $0x110] sm:$0xff]
        %v2062 = vmul.f32 %v2060, %v974
        %v2063 = vmul.f32 %v2061, %v974
        %v2064 = vadd.f32 %v2058, %v2062
        %v2065 = vadd.f32 %v2059, %v2063
        %v2066 = vld [vmem:[#allocation2 + $0x109] sm:$0xff]
        %v2067 = vld [vmem:[#allocation2 + $0x111] sm:$0xff]
        %v2068 = vsel %vm954, %v2066, 0.0
        %v2069 = vsel %vm955, %v2067, 0.0
        %v2070 = vmul.f32 %v2068, %v983
        %v2071 = vmul.f32 %v2069, %v983
        %v2072 = vadd.f32 %v2064, %v2070
        %v2073 = vadd.f32 %v2065, %v2071
        %v2074 = vld [vmem:[#allocation2 + $0x117] sm:$0xff]
        %v2075 = vld [vmem:[#allocation2 + $0x11f] sm:$0xff]
        %v2076 = vsel %vm936, %v2074, 0.0
        %v2077 = vsel %vm937, %v2075, 0.0
        %v2078 = vmul.f32 %v2076, %v992
        %v2079 = vmul.f32 %v2077, %v992
        %v2080 = vadd.f32 %v2072, %v2078
        %v2081 = vadd.f32 %v2073, %v2079
        %v2082 = vld [vmem:[#allocation2 + $0x118] sm:$0xff]
        %v2083 = vld [vmem:[#allocation2 + $0x120] sm:$0xff]
        %v2084 = vmul.f32 %v2082, %v999
        %v2085 = vmul.f32 %v2083, %v999
        %v2086 = vadd.f32 %v2080, %v2084
        %v2087 = vadd.f32 %v2081, %v2085
        %v2088 = vld [vmem:[#allocation2 + $0x119] sm:$0xff]
        %v2089 = vld [vmem:[#allocation2 + $0x121] sm:$0xff]
        %v2090 = vsel %vm954, %v2088, 0.0
        %v2091 = vsel %vm955, %v2089, 0.0
        %v2092 = vmul.f32 %v2090, %v1008
        %v2093 = vmul.f32 %v2091, %v1008
        %v2094 = vadd.f32 %v2086, %v2092
        %v2095 = vadd.f32 %v2087, %v2093
        %v2096 = vadd.f32 %v2094, %v1014
        %v2097 = vadd.f32 %v2095, %v1014
        %v2098 = vmax.f32 %v2096, 0.0
        %v2099 = vmax.f32 %v2097, 0.0
        %v2100 = vmin.f32 %v2098, 6.0
        %v2101 = vmin.f32 %v2099, 6.0
        %2102 = vst [vmem:[#allocation3 + $0xf0] sm:$0xff] %v2100
        %2103 = vst [vmem:[#allocation3 + $0xf8] sm:$0xff] %v2101
        %v2104 = vld [vmem:[#allocation3] sm:$0xff]
        %v2105 = vld [vmem:[#allocation3 + $0x8] sm:$0xff]
        %v2106 = vld [vmem:[#allocation3 + $0x10] sm:$0xff]
        %v2107 = vld [vmem:[#allocation3 + $0x18] sm:$0xff]
        %v2108 = vld [vmem:[#allocation3 + $0x20] sm:$0xff]
        %v2109 = vld [vmem:[#allocation3 + $0x28] sm:$0xff]
        %v2110 = vld [vmem:[#allocation3 + $0x30] sm:$0xff]
        %v2111 = vld [vmem:[#allocation3 + $0x38] sm:$0xff]
        %v2112 = vld [vmem:[#allocation3 + $0x40] sm:$0xff]
        %v2113 = vld [vmem:[#allocation3 + $0x48] sm:$0xff]
        %v2114 = vld [vmem:[#allocation3 + $0x50] sm:$0xff]
        %v2115 = vld [vmem:[#allocation3 + $0x58] sm:$0xff]
        %v2116 = vld [vmem:[#allocation3 + $0x60] sm:$0xff]
        %v2117 = vld [vmem:[#allocation3 + $0x68] sm:$0xff]
        %v2118 = vld [vmem:[#allocation3 + $0x70] sm:$0xff]
        %v2119 = vld [vmem:[#allocation3 + $0x78] sm:$0xff]
        %v2120 = vld [vmem:[#allocation3 + $0x80] sm:$0xff]
        %v2121 = vld [vmem:[#allocation3 + $0x88] sm:$0xff]
        %v2122 = vld [vmem:[#allocation3 + $0x90] sm:$0xff]
        %v2123 = vld [vmem:[#allocation3 + $0x98] sm:$0xff]
        %v2124 = vld [vmem:[#allocation3 + $0xa0] sm:$0xff]
        %v2125 = vld [vmem:[#allocation3 + $0xa8] sm:$0xff]
        %v2126 = vld [vmem:[#allocation3 + $0xb0] sm:$0xff]
        %v2127 = vld [vmem:[#allocation3 + $0xb8] sm:$0xff]
        %v2128 = vld [vmem:[#allocation3 + $0xc0] sm:$0xff]
        %v2129 = vld [vmem:[#allocation3 + $0xc8] sm:$0xff]
        %v2130 = vld [vmem:[#allocation3 + $0xd0] sm:$0xff]
        %v2131 = vld [vmem:[#allocation3 + $0xd8] sm:$0xff]
        %v2132 = vld [vmem:[#allocation3 + $0xe0] sm:$0xff]
        %v2133 = vld [vmem:[#allocation3 + $0xe8] sm:$0xff]
        %v2134 = vld [vmem:[#allocation3 + $0xf0] sm:$0xff]
        %v2135 = vld [vmem:[#allocation3 + $0xf8] sm:$0xff]
        %v2136 = vld [vmem:[#allocation10] sm:$0xff]
        %v2137 = vld [vmem:[#allocation10 + $0x8] sm:$0xff]
        %v2138 = vld [vmem:[#allocation10 + $0x10] sm:$0xff]
        %v2139 = vld [vmem:[#allocation10 + $0x18] sm:$0xff]
        %v2140 = vld [vmem:[#allocation10 + $0x20] sm:$0xff]
        %v2141 = vld [vmem:[#allocation10 + $0x28] sm:$0xff]
        %v2142 = vld [vmem:[#allocation10 + $0x30] sm:$0xff]
        %v2143 = vld [vmem:[#allocation10 + $0x38] sm:$0xff]
        %v2144 = vld [vmem:[#allocation10 + $0x40] sm:$0xff]
        %v2145 = vld [vmem:[#allocation10 + $0x48] sm:$0xff]
        %v2146 = vld [vmem:[#allocation10 + $0x50] sm:$0xff]
        %v2147 = vld [vmem:[#allocation10 + $0x58] sm:$0xff]
        %v2148 = vld [vmem:[#allocation10 + $0x60] sm:$0xff]
        %v2149 = vld [vmem:[#allocation10 + $0x68] sm:$0xff]
        %v2150 = vld [vmem:[#allocation10 + $0x70] sm:$0xff]
        %v2151 = vld [vmem:[#allocation10 + $0x78] sm:$0xff]
        %v2152 = vld [vmem:[%s6] sm:$0x1]
        %v2154 = vperm.slane %v2152, 0
        %2156 = vmatpush.msra.mxu0 %v2151
        %2157 = vmatpush.msra.mxu0 %v2150
        %2158 = vmatpush.msra.mxu0 %v2149
        %2159 = vmatpush.msra.mxu0 %v2148
        %2160 = vmatpush.msra.mxu0 %v2147
        %2161 = vmatpush.msra.mxu0 %v2146
        %2162 = vmatpush.msra.mxu0 %v2145
        %2163 = vmatpush.msra.mxu0 %v2144
        %2164 = vmatpush.msra.mxu0 %v2143
        %2165 = vmatpush.msra.mxu0 %v2142
        %2166 = vmatpush.msra.mxu0 %v2141
        %2167 = vmatpush.msra.mxu0 %v2140
        %2168 = vmatpush.msra.mxu0 %v2139
        %2169 = vmatpush.msra.mxu0 %v2138
        %2170 = vmatpush.msra.mxu0 %v2137
        %2171 = vmatpush.msra.mxu0 %v2136
        %2172 = vmatmul.f32.gmra.mxu0 %v2104
        %v2173 = vpop.f32.mrf.mxu0
        %v2174 = vadd.f32 %v2154, %v2173
        %2175 = vmatmul.f32.gmra.mxu0 %v2105
        %v2176 = vpop.f32.mrf.mxu0
        %v2177 = vadd.f32 %v2154, %v2176
        %2178 = vmatmul.f32.gmra.mxu0 %v2106
        %v2179 = vpop.f32.mrf.mxu0
        %v2180 = vadd.f32 %v2154, %v2179
        %2181 = vmatmul.f32.gmra.mxu0 %v2107
        %v2182 = vpop.f32.mrf.mxu0
        %v2183 = vadd.f32 %v2154, %v2182
        %2184 = vmatmul.f32.gmra.mxu0 %v2108
        %v2185 = vpop.f32.mrf.mxu0
        %v2186 = vadd.f32 %v2154, %v2185
        %2187 = vmatmul.f32.gmra.mxu0 %v2109
        %v2188 = vpop.f32.mrf.mxu0
        %v2189 = vadd.f32 %v2154, %v2188
        %2190 = vmatmul.f32.gmra.mxu0 %v2110
        %v2191 = vpop.f32.mrf.mxu0
        %v2192 = vadd.f32 %v2154, %v2191
        %2193 = vmatmul.f32.gmra.mxu0 %v2111
        %v2194 = vpop.f32.mrf.mxu0
        %v2195 = vadd.f32 %v2154, %v2194
        %2196 = vmatmul.f32.gmra.mxu0 %v2112
        %v2197 = vpop.f32.mrf.mxu0
        %v2198 = vadd.f32 %v2154, %v2197
        %2199 = vmatmul.f32.gmra.mxu0 %v2113
        %v2200 = vpop.f32.mrf.mxu0
        %v2201 = vadd.f32 %v2154, %v2200
        %2202 = vmatmul.f32.gmra.mxu0 %v2114
        %v2203 = vpop.f32.mrf.mxu0
        %v2204 = vadd.f32 %v2154, %v2203
        %2205 = vmatmul.f32.gmra.mxu0 %v2115
        %v2206 = vpop.f32.mrf.mxu0
        %v2207 = vadd.f32 %v2154, %v2206
        %2208 = vmatmul.f32.gmra.mxu0 %v2116
        %v2209 = vpop.f32.mrf.mxu0
        %v2210 = vadd.f32 %v2154, %v2209
        %2211 = vmatmul.f32.gmra.mxu0 %v2117
        %v2212 = vpop.f32.mrf.mxu0
        %v2213 = vadd.f32 %v2154, %v2212
        %2214 = vmatmul.f32.gmra.mxu0 %v2118
        %v2215 = vpop.f32.mrf.mxu0
        %v2216 = vadd.f32 %v2154, %v2215
        %2217 = vmatmul.f32.gmra.mxu0 %v2119
        %v2218 = vpop.f32.mrf.mxu0
        %v2219 = vadd.f32 %v2154, %v2218
        %2220 = vmatmul.f32.gmra.mxu0 %v2120
        %v2221 = vpop.f32.mrf.mxu0
        %v2222 = vadd.f32 %v2154, %v2221
        %2223 = vmatmul.f32.gmra.mxu0 %v2121
        %v2224 = vpop.f32.mrf.mxu0
        %v2225 = vadd.f32 %v2154, %v2224
        %2226 = vmatmul.f32.gmra.mxu0 %v2122
        %v2227 = vpop.f32.mrf.mxu0
        %v2228 = vadd.f32 %v2154, %v2227
        %2229 = vmatmul.f32.gmra.mxu0 %v2123
        %v2230 = vpop.f32.mrf.mxu0
        %v2231 = vadd.f32 %v2154, %v2230
        %2232 = vmatmul.f32.gmra.mxu0 %v2124
        %v2233 = vpop.f32.mrf.mxu0
        %v2234 = vadd.f32 %v2154, %v2233
        %2235 = vmatmul.f32.gmra.mxu0 %v2125
        %v2236 = vpop.f32.mrf.mxu0
        %v2237 = vadd.f32 %v2154, %v2236
        %2238 = vmatmul.f32.gmra.mxu0 %v2126
        %v2239 = vpop.f32.mrf.mxu0
        %v2240 = vadd.f32 %v2154, %v2239
        %2241 = vmatmul.f32.gmra.mxu0 %v2127
        %v2242 = vpop.f32.mrf.mxu0
        %v2243 = vadd.f32 %v2154, %v2242
        %2244 = vmatmul.f32.gmra.mxu0 %v2128
        %v2245 = vpop.f32.mrf.mxu0
        %v2246 = vadd.f32 %v2154, %v2245
        %2247 = vmatmul.f32.gmra.mxu0 %v2129
        %v2248 = vpop.f32.mrf.mxu0
        %v2249 = vadd.f32 %v2154, %v2248
        %2250 = vmatmul.f32.gmra.mxu0 %v2130
        %v2251 = vpop.f32.mrf.mxu0
        %v2252 = vadd.f32 %v2154, %v2251
        %2253 = vmatmul.f32.gmra.mxu0 %v2131
        %v2254 = vpop.f32.mrf.mxu0
        %v2255 = vadd.f32 %v2154, %v2254
        %2256 = vmatmul.f32.gmra.mxu0 %v2132
        %v2257 = vpop.f32.mrf.mxu0
        %v2258 = vadd.f32 %v2154, %v2257
        %2259 = vmatmul.f32.gmra.mxu0 %v2133
        %v2260 = vpop.f32.mrf.mxu0
        %v2261 = vadd.f32 %v2154, %v2260
        %2262 = vmatmul.f32.gmra.mxu0 %v2134
        %v2263 = vpop.f32.mrf.mxu0
        %v2264 = vadd.f32 %v2154, %v2263
        %2265 = vmatmul.f32.gmra.mxu0 %v2135
        %v2266 = vpop.f32.mrf.mxu0
        %v2267 = vadd.f32 %v2154, %v2266
        %2268 = vdwg.mxu0
        %s2269 = sadd.s32 %s363, 1
        %s2270 = smul.u32 %s2269, 16
        %s2271 = scalar_lea.vmem %s316, %s2270 [#allocation4]
        %v2272 = vld [vmem:[%s2271] sm:$0xff]
        %v2273 = vld [vmem:[%s2271 + $0x8] sm:$0xff]
        %v2274 = vld [vmem:[%s2271 + $0x10] sm:$0xff]
        %v2275 = vld [vmem:[%s2271 + $0x18] sm:$0xff]
        %v2276 = vld [vmem:[%s2271 + $0x20] sm:$0xff]
        %v2277 = vld [vmem:[%s2271 + $0x28] sm:$0xff]
        %v2278 = vld [vmem:[%s2271 + $0x30] sm:$0xff]
        %v2279 = vld [vmem:[%s2271 + $0x38] sm:$0xff]
        %v2280 = vld [vmem:[%s2271 + $0x40] sm:$0xff]
        %v2281 = vld [vmem:[%s2271 + $0x48] sm:$0xff]
        %v2282 = vld [vmem:[%s2271 + $0x50] sm:$0xff]
        %v2283 = vld [vmem:[%s2271 + $0x58] sm:$0xff]
        %v2284 = vld [vmem:[%s2271 + $0x60] sm:$0xff]
        %v2285 = vld [vmem:[%s2271 + $0x68] sm:$0xff]
        %v2286 = vld [vmem:[%s2271 + $0x70] sm:$0xff]
        %v2287 = vld [vmem:[%s2271 + $0x78] sm:$0xff]
        %v2288 = vld [vmem:[%s2271 + $0x80] sm:$0xff]
        %v2289 = vld [vmem:[%s2271 + $0x88] sm:$0xff]
        %v2290 = vld [vmem:[%s2271 + $0x90] sm:$0xff]
        %v2291 = vld [vmem:[%s2271 + $0x98] sm:$0xff]
        %v2292 = vld [vmem:[%s2271 + $0xa0] sm:$0xff]
        %v2293 = vld [vmem:[%s2271 + $0xa8] sm:$0xff]
        %v2294 = vld [vmem:[%s2271 + $0xb0] sm:$0xff]
        %v2295 = vld [vmem:[%s2271 + $0xb8] sm:$0xff]
        %v2296 = vld [vmem:[%s2271 + $0xc0] sm:$0xff]
        %v2297 = vld [vmem:[%s2271 + $0xc8] sm:$0xff]
        %v2298 = vld [vmem:[%s2271 + $0xd0] sm:$0xff]
        %v2299 = vld [vmem:[%s2271 + $0xd8] sm:$0xff]
        %v2300 = vld [vmem:[%s2271 + $0xe0] sm:$0xff]
        %v2301 = vld [vmem:[%s2271 + $0xe8] sm:$0xff]
        %v2302 = vld [vmem:[%s2271 + $0xf0] sm:$0xff]
        %v2303 = vld [vmem:[%s2271 + $0xf8] sm:$0xff]
        %v2304 = vadd.f32 %v2174, %v2272
        %v2305 = vadd.f32 %v2177, %v2273
        %v2306 = vadd.f32 %v2180, %v2274
        %v2307 = vadd.f32 %v2183, %v2275
        %v2308 = vadd.f32 %v2186, %v2276
        %v2309 = vadd.f32 %v2189, %v2277
        %v2310 = vadd.f32 %v2192, %v2278
        %v2311 = vadd.f32 %v2195, %v2279
        %v2312 = vadd.f32 %v2198, %v2280
        %v2313 = vadd.f32 %v2201, %v2281
        %v2314 = vadd.f32 %v2204, %v2282
        %v2315 = vadd.f32 %v2207, %v2283
        %v2316 = vadd.f32 %v2210, %v2284
        %v2317 = vadd.f32 %v2213, %v2285
        %v2318 = vadd.f32 %v2216, %v2286
        %v2319 = vadd.f32 %v2219, %v2287
        %v2320 = vadd.f32 %v2222, %v2288
        %v2321 = vadd.f32 %v2225, %v2289
        %v2322 = vadd.f32 %v2228, %v2290
        %v2323 = vadd.f32 %v2231, %v2291
        %v2324 = vadd.f32 %v2234, %v2292
        %v2325 = vadd.f32 %v2237, %v2293
        %v2326 = vadd.f32 %v2240, %v2294
        %v2327 = vadd.f32 %v2243, %v2295
        %v2328 = vadd.f32 %v2246, %v2296
        %v2329 = vadd.f32 %v2249, %v2297
        %v2330 = vadd.f32 %v2252, %v2298
        %v2331 = vadd.f32 %v2255, %v2299
        %v2332 = vadd.f32 %v2258, %v2300
        %v2333 = vadd.f32 %v2261, %v2301
        %v2334 = vadd.f32 %v2264, %v2302
        %v2335 = vadd.f32 %v2267, %v2303
        %2336 = vst [vmem:[%s362] sm:$0xff] %v2304
        %2337 = vst [vmem:[%s362 + $0x8] sm:$0xff] %v2305
        %2338 = vst [vmem:[%s362 + $0x10] sm:$0xff] %v2306
        %2339 = vst [vmem:[%s362 + $0x18] sm:$0xff] %v2307
        %2340 = vst [vmem:[%s362 + $0x20] sm:$0xff] %v2308
        %2341 = vst [vmem:[%s362 + $0x28] sm:$0xff] %v2309
        %2342 = vst [vmem:[%s362 + $0x30] sm:$0xff] %v2310
        %2343 = vst [vmem:[%s362 + $0x38] sm:$0xff] %v2311
        %2344 = vst [vmem:[%s362 + $0x40] sm:$0xff] %v2312
        %2345 = vst [vmem:[%s362 + $0x48] sm:$0xff] %v2313
        %2346 = vst [vmem:[%s362 + $0x50] sm:$0xff] %v2314
        %2347 = vst [vmem:[%s362 + $0x58] sm:$0xff] %v2315
        %2348 = vst [vmem:[%s362 + $0x60] sm:$0xff] %v2316
        %2349 = vst [vmem:[%s362 + $0x68] sm:$0xff] %v2317
        %2350 = vst [vmem:[%s362 + $0x70] sm:$0xff] %v2318
        %2351 = vst [vmem:[%s362 + $0x78] sm:$0xff] %v2319
        %2352 = vst [vmem:[%s362 + $0x80] sm:$0xff] %v2320
        %2353 = vst [vmem:[%s362 + $0x88] sm:$0xff] %v2321
        %2354 = vst [vmem:[%s362 + $0x90] sm:$0xff] %v2322
        %2355 = vst [vmem:[%s362 + $0x98] sm:$0xff] %v2323
        %2356 = vst [vmem:[%s362 + $0xa0] sm:$0xff] %v2324
        %2357 = vst [vmem:[%s362 + $0xa8] sm:$0xff] %v2325
        %2358 = vst [vmem:[%s362 + $0xb0] sm:$0xff] %v2326
        %2359 = vst [vmem:[%s362 + $0xb8] sm:$0xff] %v2327
        %2360 = vst [vmem:[%s362 + $0xc0] sm:$0xff] %v2328
        %2361 = vst [vmem:[%s362 + $0xc8] sm:$0xff] %v2329
        %2362 = vst [vmem:[%s362 + $0xd0] sm:$0xff] %v2330
        %2363 = vst [vmem:[%s362 + $0xd8] sm:$0xff] %v2331
        %2364 = vst [vmem:[%s362 + $0xe0] sm:$0xff] %v2332
        %2365 = vst [vmem:[%s362 + $0xe8] sm:$0xff] %v2333
        %2366 = vst [vmem:[%s362 + $0xf0] sm:$0xff] %v2334
        %2367 = vst [vmem:[%s362 + $0xf8] sm:$0xff] %v2335
        %s2368 = sand.u32 %s200, 1
        %s2369 = scalar_lea.sflag [#allocation6], %s2368
        %s2370 = sand.u32 %s200, 1
        %s2371 = smul.addr %s2370, 256
        %s2372 = scalar_lea.vmem [#allocation12], %s2371
        // Predicated region
        $region65: #{tpu_custom_call.1} parent=47 // pred_check
          %p2373 = pneg %p210
        $region66: #{tpu_custom_call.1} parent=47 // pred_check_branch
          %2375 = sbr.rel (%p2373) target = $region68
        $region67: #{tpu_custom_call.1} parent=47 // pred_region
          %2377 = vsyncadd %s2369, 0
          %s2378 = smul.addr %s31, 32
          %s2379 = smul.addr %s30, 32
          %s2380 = sadd.s32 %s2378, %s2379
          %s2381 = smul.addr %s2380, 8
          %s2382 = scalar_lea.hbm %s7, %s2381
          %s2383 = sshll.u32 %s2372, 4
          %s2384 = int_to_ptr.vmem [resolvable:$true] %s2383
          %s2385 = sshll.u32 %s2382, 4
          %s2386 = int_to_ptr.hbm [resolvable:$true] %s2385
          %2391 = dma.vmem_to_hbm [thread:$0]  %s2384, 4096, %s2386, %s2369, 128, 128, 8
        $region68: #{tpu_custom_call.1} parent=47 // pred_fallthru
          _
      $region48: #{tpu_custom_call.1} parent=5 // pred_fallthru
        _
      %p2392 = scmp.le.s32.totalorder 2, %s21
      // Predicated region
      $region69: #{tpu_custom_call.1} parent=5 // pred_check
        %p2393 = pneg %p2392
      $region70: #{tpu_custom_call.1} parent=5 // pred_check_branch
        %2395 = sbr.rel (%p2393) target = $region72
      $region71: #{tpu_custom_call.1} parent=5 // pred_region
        %s2396 = ssub.s32 %s21, 2
        // Predicated region
        $region73: #{tpu_custom_call.1} parent=71 // pred_check
          %p2397 = pneg %p216
        $region74: #{tpu_custom_call.1} parent=71 // pred_check_branch
          %2399 = sbr.rel (%p2397) target = $region76
        $region75: #{tpu_custom_call.1} parent=71 // pred_region
          %s2400 = sand.u32 %s201, 1
          %s2401 = scalar_lea.sflag [#allocation6], %s2400
          %s2402 = sand.u32 %s201, 1
          %s2403 = smul.addr %s2402, 256
          %s2404 = scalar_lea.vmem [#allocation12], %s2403
          %2406 = dma.done %s2401, 4096
        $region76: #{tpu_custom_call.1} parent=71 // pred_fallthru
          _
      $region72: #{tpu_custom_call.1} parent=5 // pred_fallthru
        _
    $region6: #{tpu_custom_call.1} parent=1 // loop_footer
      %s25 = sadd.s32 1, %s21
    $region7: #{tpu_custom_call.1} parent=1 // loop_footer_branch
      %20 = sbr.rel target = $region3
    $region8: #{tpu_custom_call.1} parent=1 // loop_exit
      _
    %2407 = vsyncpa [#allocation5], 1
    %s2408 = scalar_lea.sflag [#allocation5], 1
    %2409 = vsyncpa %s2408, 1
    %2410 = vsyncpa [#allocation8], 1
    %2411 = vsyncpa [#allocation11], 1
    %2412 = vsyncpa [#allocation6], 1
    %s2413 = scalar_lea.sflag [#allocation6], 1
    %2414 = vsyncpa %s2413, 1

</llo_original>
